<compile_context>
chip_gen: v7x
topology: tpu7x:2x2x1
jax: 0.10.0
libtpu: 0.0.40
codegen_flags: <defaults>
</compile_context>

<pallas_src>
import functools

import jax
import jax.numpy as jnp
from jax.experimental import pallas as pl
from jax.experimental.pallas import tpu as pltpu


def fra2utt_kernel(x_ref, wt_ref, b_ref, ctx_ref, out_ref,
                   m_sc, l_sc, acc_sc, *,
                   scale, seq_len, block_b, block_t, masked):
    # x_ref   : (block_b, block_t, D)  streamed input slab (bf16 or f32)
    # wt_ref  : (D, A)                 projection weight (pre-transposed,
    #                                  matmul dtype), resident
    # b_ref   : (1, A) f32             projection bias, resident
    # ctx_ref : (block_b, 1, A) f32    attention context rows for this group
    # out_ref : (block_b, 1, D)        pooled output for this batch group
    # m_sc/l_sc : (block_b, 1, 1) f32  running max / softmax denominator
    # acc_sc    : (block_b, 1, D) f32  running attention-weighted sum of x
    t = pl.program_id(1)

    @pl.when(t == 0)
    def _init():
        m_sc[...] = jnp.full_like(m_sc, -jnp.inf)
        l_sc[...] = jnp.zeros_like(l_sc)
        acc_sc[...] = jnp.zeros_like(acc_sc)

    dim = x_ref.shape[-1]
    asize = wt_ref.shape[-1]

    x = x_ref[...]                                            # (bb, tt, D)

    # Projection matmul on the MXU (bf16 inputs, f32 accumulation); W^T is the
    # only MXU weight used anywhere in the kernel, so it stays stationary.
    x_mm = x.reshape(block_b * block_t, dim).astype(wt_ref.dtype)
    proj = jnp.tanh(
        jnp.dot(x_mm, wt_ref[...], preferred_element_type=jnp.float32)
        + b_ref[...])                                         # (bb*tt, A) f32
    proj = proj.reshape(block_b, block_t, asize)              # (bb, tt, A)

    # Attention logits: VPU multiply + lane reduce against the resident
    # per-batch context rows (keeps the MXU free of tiny matvec weight swaps).
    ctx = ctx_ref[...]                                        # (bb, 1, A) f32
    s = jnp.sum(proj * ctx, axis=-1, keepdims=True) * scale   # (bb, tt, 1)

    if masked:
        # Static flag: only when T was padded to a tile multiple. The padded
        # x rows are zeros, so only the score column needs masking.
        row = (jax.lax.broadcasted_iota(jnp.int32, (block_b, block_t, 1), 1)
               + t * block_t)
        s = jnp.where(row < seq_len, s, -jnp.inf)

    # Online softmax over the T axis (per batch row of this group).
    m_prev = m_sc[...]                                        # (bb, 1, 1)
    m_new = jnp.maximum(m_prev, jnp.max(s, axis=1, keepdims=True))
    alpha = jnp.exp(m_prev - m_new)                           # (bb, 1, 1)
    p = jnp.exp(s - m_new)                                    # (bb, tt, 1)

    l_sc[...] = alpha * l_sc[...] + jnp.sum(p, axis=1, keepdims=True)
    # Weighted accumulation on the VPU (sublane reduce) — no x-as-MXU-weight.
    x_f32 = x.astype(jnp.float32)
    acc_sc[...] = alpha * acc_sc[...] + jnp.sum(p * x_f32, axis=1,
                                                keepdims=True)  # (bb, 1, D)
    m_sc[...] = m_new

    @pl.when(t == pl.num_programs(1) - 1)
    def _finalize():
        out_ref[...] = (acc_sc[...] / l_sc[...]).astype(out_ref.dtype)


def fra2utt_forward(x, weight, bias, ctx, *, softmax_scale=0.3,
                    block_t=1024, block_b=4, use_bf16=True,
                    x_stream_budget_bytes=16 << 20):
    """x: (B, T, D); weight: (A, D); bias: (A,); ctx: (B, A). Returns (B, D)."""
    B, T, D = x.shape
    A, D_w = weight.shape
    assert D_w == D and ctx.shape == (B, A) and bias.shape == (A,)

    # Batch-group size (must divide B; B=8 for this module).
    bb = max(1, min(block_b, B))
    while B % bb != 0:
        bb -= 1

    # T tile: as large as possible while the double-buffered x stream stays
    # within the budget (keeps v7x's 64 MiB / v5e's 16 MiB scoped VMEM happy).
    itemsize_x = x.dtype.itemsize
    sub = 16 if itemsize_x < 4 else 8   # packed-sublane multiple for bf16
    max_tt = x_stream_budget_bytes // (2 * bb * D * itemsize_x)
    max_tt = max(sub, (max_tt // sub) * sub)
    tt = min(block_t, T)
    if tt > max_tt:
        tt = max_tt
    if tt < T:
        tt = max(sub, (tt // sub) * sub)
    grid_t = pl.cdiv(T, tt)
    t_pad = grid_t * tt
    masked = (t_pad != T)
    if masked:
        # Zero-pad T to a tile multiple: only the score column needs masking
        # in-kernel; padded rows contribute exactly zero to the accumulator.
        x = jnp.pad(x, ((0, 0), (0, t_pad - T), (0, 0)))

    mm_dtype = jnp.bfloat16 if use_bf16 else jnp.float32
    wt = weight.T.astype(mm_dtype)                    # (D, A), one-time cast
    bias2 = bias.astype(jnp.float32).reshape(1, A)
    ctx3 = ctx.astype(jnp.float32).reshape(B, 1, A)

    kernel = functools.partial(
        fra2utt_kernel, scale=float(softmax_scale), seq_len=T,
        block_b=bb, block_t=tt, masked=masked)

    flops = 2 * B * T * D * A + 2 * B * T * A + 2 * B * T * D
    transcendentals = B * T * A + 2 * B * T
    bytes_accessed = (B * t_pad * D * itemsize_x
                      + D * A * jnp.dtype(mm_dtype).itemsize
                      + (A + B * A) * 4
                      + B * D * itemsize_x)

    vmem_needed = (2 * bb * tt * D * itemsize_x               # x (double buf)
                   + 2 * D * A * jnp.dtype(mm_dtype).itemsize  # W^T
                   + 2 * A * 4 + 2 * bb * A * 4                # bias + ctx
                   + 2 * bb * D * itemsize_x                   # out
                   + 4 * bb * (D + 2))                         # f32 scratch
    vmem_limit = int(min(max(32 << 20, 2 * vmem_needed), 100 << 20))

    out = pl.pallas_call(
        kernel,
        out_shape=jax.ShapeDtypeStruct((B, 1, D), x.dtype),
        grid_spec=pltpu.PrefetchScalarGridSpec(
            num_scalar_prefetch=0,
            grid=(B // bb, grid_t),
            in_specs=[
                pl.BlockSpec((bb, tt, D), lambda b, t: (b, t, 0)),  # x slab
                pl.BlockSpec((D, A), lambda b, t: (0, 0)),          # W^T
                pl.BlockSpec((1, A), lambda b, t: (0, 0)),          # bias
                pl.BlockSpec((bb, 1, A), lambda b, t: (b, 0, 0)),   # ctx rows
            ],
            out_specs=pl.BlockSpec((bb, 1, D), lambda b, t: (b, 0, 0)),
            scratch_shapes=[
                pltpu.VMEM((bb, 1, 1), jnp.float32),   # running max
                pltpu.VMEM((bb, 1, 1), jnp.float32),   # running denom
                pltpu.VMEM((bb, 1, D), jnp.float32),   # running weighted sum
            ],
        ),
        compiler_params=pltpu.CompilerParams(
            dimension_semantics=("parallel", "arbitrary"),
            vmem_limit_bytes=vmem_limit),
        cost_estimate=pl.CostEstimate(
            flops=flops, transcendentals=transcendentals,
            bytes_accessed=bytes_accessed),
    )(x, wt, bias2, ctx3)
    return out.reshape(B, D)


def fra2utt_ref(x, weight, bias, ctx, softmax_scale=0.3):
    # Pure-JAX reference mirroring the PyTorch module.
    proj = jnp.tanh(jnp.einsum('btd,ad->bta', x, weight) + bias)      # (B,T,A)
    logits = jnp.einsum('bta,ba->bt', proj, ctx)[..., None]           # (B,T,1)
    attn = jax.nn.softmax(softmax_scale * logits, axis=1)             # (B,T,1)
    return jnp.sum(x * attn, axis=1)                                  # (B,D)


if __name__ == "__main__":
    key = jax.random.PRNGKey(0)
    k1, k2, k3, k4 = jax.random.split(key, 4)

    # Batch is fixed at 8 by the module's (8, atsize) context parameter.
    # T=600 with block_t=256 / block_b=4 exercises batch fusion, a multi-tile
    # online softmax, and the padded / masked last tile.
    B, T, D, A = 8, 600, 128, 128
    x = jax.random.normal(k1, (B, T, D), dtype=jnp.float32)
    weight = jax.random.normal(k2, (A, D), dtype=jnp.float32) / jnp.sqrt(D)
    bias = jax.random.normal(k3, (A,), dtype=jnp.float32) * 0.1
    # xavier_normal_-style scale for the (8, A) attention context parameter.
    ctx = jax.random.normal(k4, (B, A), dtype=jnp.float32) * (2.0 / (B + A)) ** 0.5

    out = fra2utt_forward(x, weight, bias, ctx, softmax_scale=0.3,
                          block_t=256, block_b=4)
    out = jax.block_until_ready(out)

    ref = fra2utt_ref(x, weight, bias, ctx, softmax_scale=0.3)
    assert out.shape == (B, D)
    # bf16 MXU inputs (f32 accumulation) -> loosened tolerance vs f32 ref.
    assert jnp.allclose(out, ref, rtol=1e-2, atol=1e-2), \
        float(jnp.max(jnp.abs(out - ref)))

    print("KERNEL_OK")
</pallas_src>

<mosaic_0001>
module attributes {stable_mosaic.version = 11 : i64} {
  func.func @fra2utt_kernel(%arg0: i32, %arg1: i32, %arg2: memref<4x256x128xf32, #tpu.memory_space<vmem>>, %arg3: memref<128x128xbf16, #tpu.memory_space<vmem>>, %arg4: memref<1x128xf32, #tpu.memory_space<vmem>>, %arg5: memref<4x1x128xf32, #tpu.memory_space<vmem>>, %arg6: memref<4x1x128xf32, #tpu.memory_space<vmem>>, %arg7: memref<4x1x1xf32, #tpu.memory_space<vmem>>, %arg8: memref<4x1x1xf32, #tpu.memory_space<vmem>>, %arg9: memref<4x1x128xf32, #tpu.memory_space<vmem>>) attributes {dimension_semantics = [#tpu.dimension_semantics<parallel>, #tpu.dimension_semantics<arbitrary>], iteration_bounds = array<i64: 2, 3>, scalar_prefetch = 0 : i64, scratch_operands = 3 : i64, tpu.core_type = #tpu.core_type<tc>, window_params = [{transform_indices = @transform_0, window_bounds = array<i64: 4, 256, 128>}, {pipeline_mode = #tpu.pipeline_mode<synchronous>, transform_indices = @transform_1, window_bounds = array<i64: 128, 128>}, {pipeline_mode = #tpu.pipeline_mode<synchronous>, transform_indices = @transform_2, window_bounds = array<i64: 1, 128>}, {transform_indices = @transform_3, window_bounds = array<i64: 4, 1, 128>}, {transform_indices = @transform_4, window_bounds = array<i64: 4, 1, 128>}]} {
    %c0_i32 = arith.constant 0 : i32
    %0 = arith.cmpi eq, %arg1, %c0_i32 : i32
    %1 = arith.extui %0 : i1 to i32
    %c0_i32_0 = arith.constant 0 : i32
    %2 = arith.cmpi ne, %1, %c0_i32_0 : i32
    scf.if %2 {
      %cst_35 = arith.constant 0xFF800000 : f32
      %56 = vector.broadcast %cst_35 : f32 to vector<4x1x1xf32>
      %c0_36 = arith.constant 0 : index
      %c0_37 = arith.constant 0 : index
      %c0_38 = arith.constant 0 : index
      %57 = vector.load %arg7[%c0_36, %c0_37, %c0_38] : memref<4x1x1xf32, #tpu.memory_space<vmem>>, vector<4x1x1xf32>
      tpu.vector_store %arg7[%c0_36, %c0_37, %c0_38], %56 {strides = array<i32>} : memref<4x1x1xf32, #tpu.memory_space<vmem>>, vector<4x1x1xf32>,
      %cst_39 = arith.constant 0.000000e+00 : f32
      %58 = vector.broadcast %cst_39 : f32 to vector<4x1x1xf32>
      %c0_40 = arith.constant 0 : index
      %c0_41 = arith.constant 0 : index
      %c0_42 = arith.constant 0 : index
      %59 = vector.load %arg8[%c0_40, %c0_41, %c0_42] : memref<4x1x1xf32, #tpu.memory_space<vmem>>, vector<4x1x1xf32>
      tpu.vector_store %arg8[%c0_40, %c0_41, %c0_42], %58 {strides = array<i32>} : memref<4x1x1xf32, #tpu.memory_space<vmem>>, vector<4x1x1xf32>,
      %cst_43 = arith.constant 0.000000e+00 : f32
      %60 = vector.broadcast %cst_43 : f32 to vector<4x1x128xf32>
      %c0_44 = arith.constant 0 : index
      %c0_45 = arith.constant 0 : index
      %c0_46 = arith.constant 0 : index
      %61 = vector.load %arg9[%c0_44, %c0_45, %c0_46] : memref<4x1x128xf32, #tpu.memory_space<vmem>>, vector<4x1x128xf32>
      tpu.vector_store %arg9[%c0_44, %c0_45, %c0_46], %60 {strides = array<i32>} : memref<4x1x128xf32, #tpu.memory_space<vmem>>, vector<4x1x128xf32>,
    } else {
    }
    %c0 = arith.constant 0 : index
    %c0_1 = arith.constant 0 : index
    %c0_2 = arith.constant 0 : index
    %3 = vector.load %arg2[%c0, %c0_1, %c0_2] : memref<4x256x128xf32, #tpu.memory_space<vmem>>, vector<4x256x128xf32>
    %4 = vector.shape_cast %3 : vector<4x256x128xf32> to vector<1024x128xf32>
    %5 = arith.truncf %4 : vector<1024x128xf32> to vector<1024x128xbf16>
    %c0_3 = arith.constant 0 : index
    %c0_4 = arith.constant 0 : index
    %6 = vector.load %arg3[%c0_3, %c0_4] : memref<128x128xbf16, #tpu.memory_space<vmem>>, vector<128x128xbf16>
    %cst = arith.constant dense<0.000000e+00> : vector<1024x128xf32>
    %7 = tpu.matmul %5, %6, %cst {dimension_numbers = #tpu.dot_dimension_numbers<[1], [0], [0], [1], [0, 0, 1, 1], [], []>} : vector<1024x128xbf16>, vector<128x128xbf16>, vector<1024x128xf32> -> vector<1024x128xf32>
    %c0_5 = arith.constant 0 : index
    %c0_6 = arith.constant 0 : index
    %8 = vector.load %arg4[%c0_5, %c0_6] : memref<1x128xf32, #tpu.memory_space<vmem>>, vector<1x128xf32>
    %9 = vector.broadcast %8 : vector<1x128xf32> to vector<1024x128xf32>
    %10 = arith.addf %7, %9 : vector<1024x128xf32>
    %11 = math.tanh %10 : vector<1024x128xf32>
    %12 = vector.shape_cast %11 : vector<1024x128xf32> to vector<4x256x128xf32>
    %c0_7 = arith.constant 0 : index
    %c0_8 = arith.constant 0 : index
    %c0_9 = arith.constant 0 : index
    %13 = vector.load %arg5[%c0_7, %c0_8, %c0_9] : memref<4x1x128xf32, #tpu.memory_space<vmem>>, vector<4x1x128xf32>
    %14 = vector.broadcast %13 : vector<4x1x128xf32> to vector<4x256x128xf32>
    %15 = arith.mulf %12, %14 : vector<4x256x128xf32>
    %cst_10 = arith.constant dense<0.000000e+00> : vector<4x256xf32>
    %16 = vector.multi_reduction <add>, %15, %cst_10 [2] : vector<4x256x128xf32> to vector<4x256xf32>
    %17 = vector.shape_cast %16 : vector<4x256xf32> to vector<4x256x1xf32>
    %cst_11 = arith.constant 3.000000e-01 : f32
    %18 = vector.broadcast %cst_11 : f32 to vector<4x256x1xf32>
    %19 = arith.mulf %17, %18 : vector<4x256x1xf32>
    %20 = tpu.iota {dimensions = array<i32: 1>} : vector<4x256x1xi32>
    %c256_i32 = arith.constant 256 : i32
    %21 = arith.muli %arg1, %c256_i32 : i32
    %22 = vector.broadcast %21 : i32 to vector<4x256x1xi32>
    %23 = arith.addi %20, %22 : vector<4x256x1xi32>
    %c600_i32 = arith.constant 600 : i32
    %24 = vector.broadcast %c600_i32 : i32 to vector<4x256x1xi32>
    %25 = arith.cmpi slt, %23, %24 : vector<4x256x1xi32>
    %cst_12 = arith.constant 0xFF800000 : f32
    %26 = vector.broadcast %cst_12 : f32 to vector<4x256x1xf32>
    %27 = arith.select %25, %19, %26 : vector<4x256x1xi1>, vector<4x256x1xf32>
    %c0_13 = arith.constant 0 : index
    %c0_14 = arith.constant 0 : index
    %c0_15 = arith.constant 0 : index
    %28 = vector.load %arg7[%c0_13, %c0_14, %c0_15] : memref<4x1x1xf32, #tpu.memory_space<vmem>>, vector<4x1x1xf32>
    %cst_16 = arith.constant dense<0xFF800000> : vector<4x1xf32>
    %29 = vector.multi_reduction <maximumf>, %27, %cst_16 [1] : vector<4x256x1xf32> to vector<4x1xf32>
    %30 = vector.shape_cast %29 : vector<4x1xf32> to vector<4x1x1xf32>
    %31 = arith.maximumf %28, %30 : vector<4x1x1xf32>
    %32 = arith.subf %28, %31 : vector<4x1x1xf32>
    %33 = math.exp %32 : vector<4x1x1xf32>
    %34 = vector.broadcast %31 : vector<4x1x1xf32> to vector<4x256x1xf32>
    %35 = arith.subf %27, %34 : vector<4x256x1xf32>
    %36 = math.exp %35 : vector<4x256x1xf32>
    %c0_17 = arith.constant 0 : index
    %c0_18 = arith.constant 0 : index
    %c0_19 = arith.constant 0 : index
    %37 = vector.load %arg8[%c0_17, %c0_18, %c0_19] : memref<4x1x1xf32, #tpu.memory_space<vmem>>, vector<4x1x1xf32>
    %38 = arith.mulf %33, %37 : vector<4x1x1xf32>
    %cst_20 = arith.constant dense<0.000000e+00> : vector<4x1xf32>
    %39 = vector.multi_reduction <add>, %36, %cst_20 [1] : vector<4x256x1xf32> to vector<4x1xf32>
    %40 = vector.shape_cast %39 : vector<4x1xf32> to vector<4x1x1xf32>
    %41 = arith.addf %38, %40 : vector<4x1x1xf32>
    %c0_21 = arith.constant 0 : index
    %c0_22 = arith.constant 0 : index
    %c0_23 = arith.constant 0 : index
    %42 = vector.load %arg8[%c0_21, %c0_22, %c0_23] : memref<4x1x1xf32, #tpu.memory_space<vmem>>, vector<4x1x1xf32>
    tpu.vector_store %arg8[%c0_21, %c0_22, %c0_23], %41 {strides = array<i32>} : memref<4x1x1xf32, #tpu.memory_space<vmem>>, vector<4x1x1xf32>,
    %c0_24 = arith.constant 0 : index
    %c0_25 = arith.constant 0 : index
    %c0_26 = arith.constant 0 : index
    %43 = vector.load %arg9[%c0_24, %c0_25, %c0_26] : memref<4x1x128xf32, #tpu.memory_space<vmem>>, vector<4x1x128xf32>
    %44 = vector.broadcast %33 : vector<4x1x1xf32> to vector<4x1x128xf32>
    %45 = arith.mulf %44, %43 : vector<4x1x128xf32>
    %46 = vector.broadcast %36 : vector<4x256x1xf32> to vector<4x256x128xf32>
    %47 = arith.mulf %46, %3 : vector<4x256x128xf32>
    %cst_27 = arith.constant dense<0.000000e+00> : vector<4x128xf32>
    %48 = vector.multi_reduction <add>, %47, %cst_27 [1] : vector<4x256x128xf32> to vector<4x128xf32>
    %49 = vector.shape_cast %48 : vector<4x128xf32> to vector<4x1x128xf32>
    %50 = arith.addf %45, %49 : vector<4x1x128xf32>
    %c0_28 = arith.constant 0 : index
    %c0_29 = arith.constant 0 : index
    %c0_30 = arith.constant 0 : index
    %51 = vector.load %arg9[%c0_28, %c0_29, %c0_30] : memref<4x1x128xf32, #tpu.memory_space<vmem>>, vector<4x1x128xf32>
    tpu.vector_store %arg9[%c0_28, %c0_29, %c0_30], %50 {strides = array<i32>} : memref<4x1x128xf32, #tpu.memory_space<vmem>>, vector<4x1x128xf32>,
    %c0_31 = arith.constant 0 : index
    %c0_32 = arith.constant 0 : index
    %c0_33 = arith.constant 0 : index
    %52 = vector.load %arg7[%c0_31, %c0_32, %c0_33] : memref<4x1x1xf32, #tpu.memory_space<vmem>>, vector<4x1x1xf32>
    tpu.vector_store %arg7[%c0_31, %c0_32, %c0_33], %31 {strides = array<i32>} : memref<4x1x1xf32, #tpu.memory_space<vmem>>, vector<4x1x1xf32>,
    %c2_i32 = arith.constant 2 : i32
    %53 = arith.cmpi eq, %arg1, %c2_i32 : i32
    %54 = arith.extui %53 : i1 to i32
    %c0_i32_34 = arith.constant 0 : i32
    %55 = arith.cmpi ne, %54, %c0_i32_34 : i32
    scf.if %55 {
      %c0_35 = arith.constant 0 : index
      %c0_36 = arith.constant 0 : index
      %c0_37 = arith.constant 0 : index
      %56 = vector.load %arg9[%c0_35, %c0_36, %c0_37] : memref<4x1x128xf32, #tpu.memory_space<vmem>>, vector<4x1x128xf32>
      %c0_38 = arith.constant 0 : index
      %c0_39 = arith.constant 0 : index
      %c0_40 = arith.constant 0 : index
      %57 = vector.load %arg8[%c0_38, %c0_39, %c0_40] : memref<4x1x1xf32, #tpu.memory_space<vmem>>, vector<4x1x1xf32>
      %58 = vector.broadcast %57 : vector<4x1x1xf32> to vector<4x1x128xf32>
      %59 = arith.divf %56, %58 : vector<4x1x128xf32>
      %c0_41 = arith.constant 0 : index
      %c0_42 = arith.constant 0 : index
      %c0_43 = arith.constant 0 : index
      %60 = vector.load %arg6[%c0_41, %c0_42, %c0_43] : memref<4x1x128xf32, #tpu.memory_space<vmem>>, vector<4x1x128xf32>
      tpu.vector_store %arg6[%c0_41, %c0_42, %c0_43], %59 {strides = array<i32>} : memref<4x1x128xf32, #tpu.memory_space<vmem>>, vector<4x1x128xf32>,
    } else {
    }
    return
  }
  func.func @transform_0(%arg0: i32, %arg1: i32) -> (i32, i32, i32) {
    %c0_i32 = arith.constant 0 : i32
    %c0_i32_0 = arith.constant 0 : i32
    return %arg0, %arg1, %c0_i32 : i32, i32, i32
  }
  func.func @transform_1(%arg0: i32, %arg1: i32) -> (i32, i32) {
    %c0_i32 = arith.constant 0 : i32
    %c0_i32_0 = arith.constant 0 : i32
    %c0_i32_1 = arith.constant 0 : i32
    return %c0_i32, %c0_i32_0 : i32, i32
  }
  func.func @transform_2(%arg0: i32, %arg1: i32) -> (i32, i32) {
    %c0_i32 = arith.constant 0 : i32
    %c0_i32_0 = arith.constant 0 : i32
    %c0_i32_1 = arith.constant 0 : i32
    return %c0_i32, %c0_i32_0 : i32, i32
  }
  func.func @transform_3(%arg0: i32, %arg1: i32) -> (i32, i32, i32) {
    %c0_i32 = arith.constant 0 : i32
    %c0_i32_0 = arith.constant 0 : i32
    %c0_i32_1 = arith.constant 0 : i32
    return %arg0, %c0_i32, %c0_i32_0 : i32, i32, i32
  }
  func.func @transform_4(%arg0: i32, %arg1: i32) -> (i32, i32, i32) {
    %c0_i32 = arith.constant 0 : i32
    %c0_i32_0 = arith.constant 0 : i32
    %c0_i32_1 = arith.constant 0 : i32
    return %arg0, %c0_i32, %c0_i32_0 : i32, i32, i32
  }
}

</mosaic_0001>

<llo_original>
// kernel: tpu_custom_call.1
$region0: #{tpu_custom_call.1}
  #allocation0 [shape = 'u32[]', space=smem, size = 0x4, offset = 0x4, fixed_abs, tag = 'smem constant byte address 0x4 - core index']
  #allocation1 [shape = 'u32[144,128]{1,0:T(1,128)}', space=vmem, size = 0x12000, scoped, tag = 'internal scratch']
  #allocation2 [shape = 'f32[4,1,1]{2,1,0:T(1,128)}', space=vmem, size = 0x800, scoped, tag = 'scratch operand']
  #allocation3 [shape = 'f32[4,1,1]{2,1,0:T(1,128)}', space=vmem, size = 0x800, scoped, tag = 'scratch operand']
  #allocation4 [shape = 'f32[4,1,128]{2,1,0:T(1,128)}', space=vmem, size = 0x800, scoped, tag = 'scratch operand']
  #allocation14 [shape = 's32[]', space=sflag, size = 0x4, offset = 0, fixed_abs, tag = 'sflag constant byte address 0x0 - dummy sync flag']
  %s0 = inlined_call_operand.hbm [shape: f32[8,768,128], index: 0, kind: input, shape index: {}]
  %s1 = inlined_call_operand.hbm [shape: bf16[128,128], index: 1, kind: input, shape index: {}]
  %s2 = inlined_call_operand.hbm [shape: f32[1,128], index: 2, kind: input, shape index: {}]
  %s3 = inlined_call_operand.hbm [shape: f32[8,1,128], index: 3, kind: input, shape index: {}]
  %s4 = inlined_call_operand.hbm [shape: f32[8,1,128], index: 4, kind: output, shape index: {}]
  %s5 = sld [smem:[#allocation0]]
  $region73: #{tpu_custom_call.1} parent=0
    _
  %s7 = ssub.s32 1, %s5
  %s8 = scalar_select 0, %s7, %s5
  $region1: #{tpu_custom_call.1} parent=0
    #allocation5 [shape = 'u8[1048576]{0}', space=vmem, size = 0x100000, scoped, tag = 'input window, operand 0']
    #allocation6 [shape = 's32[2]{0}', space=sflag, size = 0x8, scoped, tag = 'scoped memory for tpu_custom_call.1']
    #allocation7 [shape = 's32[2]{0}', space=sflag, size = 0x8, scoped, tag = 'scoped memory for tpu_custom_call.1']
    #allocation8 [shape = 'u8[32768]{0}', space=vmem, size = 0x8000, scoped, tag = 'input window, operand 1, single buffered']
    #allocation9 [shape = 's32[1]{0}', space=sflag, size = 0x4, scoped, tag = 'scoped memory for tpu_custom_call.1']
    #allocation10 [shape = 'u8[512]{0}', space=vmem, size = 0x400, scoped, tag = 'input window, operand 2, single buffered']
    #allocation11 [shape = 'u8[4096]{0}', space=vmem, size = 0x1000, scoped, tag = 'input window, operand 3']
    #allocation12 [shape = 's32[2]{0}', space=sflag, size = 0x8, scoped, tag = 'scoped memory for tpu_custom_call.1']
    #allocation13 [shape = 'u8[4096]{0}', space=vmem, size = 0x1000, scoped, tag = 'output window, operand 0']
    %9 = vsyncpa [#allocation6], 0
    %s10 = scalar_lea.sflag [#allocation6], 1
    %11 = vsyncpa %s10, 0
    %12 = vsyncpa [#allocation9], 0
    %13 = vsyncpa [#allocation12], 0
    %s14 = scalar_lea.sflag [#allocation12], 1
    %15 = vsyncpa %s14, 0
    %16 = vsyncpa [#allocation7], 0
    %s17 = scalar_lea.sflag [#allocation7], 1
    %18 = vsyncpa %s17, 0
    loop: start=0, step=1, limit=8
    $region2: #{tpu_custom_call.1} parent=1 // loop_pre_header
      _
    $region3: #{tpu_custom_call.1} parent=1 // loop_header
      %s20 = sphi 0, %s24
      %p21 = scmp.ge.s32.totalorder %s20, 8
      %s27 = sphi 0, %s39
      %s28 = sphi 0, %s35
      %s29 = sphi 0, %s27
      %s30 = sphi 0, %s28
      %s31 = sphi 0, %s29
      %s32 = sphi 0, %s30
      %s44 = sphi 0, %s46
      %s47 = sphi 0, %s44
      %s48 = sphi 0, %s47
      %s64 = sphi 0, %s48
      %s68 = sphi 0, %s68
      %s70 = sphi 0, %s68
      %s71 = sphi 0, %s70
      %s85 = sphi 0, %s71
      %s89 = sphi 0, %s89
      %s91 = sphi 0, %s89
      %s92 = sphi 0, %s91
      %s106 = sphi 0, %s92
      %s112 = sphi 0, %s114
      %s115 = sphi 0, %s112
      %s116 = sphi 0, %s115
      %s132 = sphi 0, %s116
      %s138 = sphi 0, %s140
      %s141 = sphi 0, %s138
      %s142 = sphi 0, %s141
      %s158 = sphi 0, %s142
    $region4: #{tpu_custom_call.1} parent=1 // loop_header_branch
      %23 = sbr.rel (%p21) target = $region8
    $region5: #{tpu_custom_call.1} parent=1 // loop_body
      %s25 = ssub.s32 %s20, 1
      %s26 = ssub.s32 %s20, 2
      %s33 = sadd.s32 1, %s28
      %p34 = scmp.ge.s32.totalorder %s33, 3
      %s35 = scalar_select %p34, 0, %s33
      %s36 = sadd.s32 1, %s27
      %s37 = scalar_select %p34, %s36, %s27
      %p38 = scmp.ge.s32.totalorder %s37, 2
      %s39 = scalar_select %p38, 0, %s37
      %s40 = ssub.s32 %s27, %s39
      %s41 = ssub.s32 %s28, %s35
      %s42 = sor.u32 %s40, %s41
      %p43 = scmp.eq.s32.totalorder %s42, 0
      %s45 = sadd.s32 %s44, 1
      %s46 = scalar_select %p43, %s44, %s45
      %p49 = pneg %p43
      %p50 = scmp.eq.s32.totalorder %s20, 5
      %p51 = por %p49, %p50
      %p52 = scmp.ne.s32.totalorder %s44, %s47
      %p53 = scmp.eq.s32.totalorder %s20, 0
      %p54 = por %p52, %p53
      %p55 = scmp.ne.s32.totalorder %s44, %s47
      %p56 = scmp.eq.s32.totalorder %s25, 5
      %p57 = por %p55, %p56
      %p58 = scmp.ne.s32.totalorder %s47, %s48
      %p59 = scmp.eq.s32.totalorder %s25, 0
      %p60 = por %p58, %p59
      %p61 = scmp.ne.s32.totalorder %s47, %s48
      %p62 = scmp.eq.s32.totalorder %s26, 5
      %p63 = por %p61, %p62
      %p65 = scmp.ne.s32.totalorder %s48, %s64
      %p66 = scmp.eq.s32.totalorder %s26, 0
      %p67 = por %p65, %p66
      %s69 = sadd.s32 %s68, 1
      %p72 = scmp.eq.s32.totalorder %s20, 5
      %p73 = scmp.ne.s32.totalorder %s68, %s70
      %p74 = scmp.eq.s32.totalorder %s20, 0
      %p75 = por %p73, %p74
      %p76 = scmp.ne.s32.totalorder %s68, %s70
      %p77 = scmp.eq.s32.totalorder %s25, 5
      %p78 = por %p76, %p77
      %p79 = scmp.ne.s32.totalorder %s70, %s71
      %p80 = scmp.eq.s32.totalorder %s25, 0
      %p81 = por %p79, %p80
      %p82 = scmp.ne.s32.totalorder %s70, %s71
      %p83 = scmp.eq.s32.totalorder %s26, 5
      %p84 = por %p82, %p83
      %p86 = scmp.ne.s32.totalorder %s71, %s85
      %p87 = scmp.eq.s32.totalorder %s26, 0
      %p88 = por %p86, %p87
      %s90 = sadd.s32 %s89, 1
      %p93 = scmp.eq.s32.totalorder %s20, 5
      %p94 = scmp.ne.s32.totalorder %s89, %s91
      %p95 = scmp.eq.s32.totalorder %s20, 0
      %p96 = por %p94, %p95
      %p97 = scmp.ne.s32.totalorder %s89, %s91
      %p98 = scmp.eq.s32.totalorder %s25, 5
      %p99 = por %p97, %p98
      %p100 = scmp.ne.s32.totalorder %s91, %s92
      %p101 = scmp.eq.s32.totalorder %s25, 0
      %p102 = por %p100, %p101
      %p103 = scmp.ne.s32.totalorder %s91, %s92
      %p104 = scmp.eq.s32.totalorder %s26, 5
      %p105 = por %p103, %p104
      %p107 = scmp.ne.s32.totalorder %s92, %s106
      %p108 = scmp.eq.s32.totalorder %s26, 0
      %p109 = por %p107, %p108
      %s110 = ssub.s32 %s27, %s39
      %p111 = scmp.eq.s32.totalorder %s110, 0
      %s113 = sadd.s32 %s112, 1
      %s114 = scalar_select %p111, %s112, %s113
      %p117 = pneg %p111
      %p118 = scmp.eq.s32.totalorder %s20, 5
      %p119 = por %p117, %p118
      %p120 = scmp.ne.s32.totalorder %s112, %s115
      %p121 = scmp.eq.s32.totalorder %s20, 0
      %p122 = por %p120, %p121
      %p123 = scmp.ne.s32.totalorder %s112, %s115
      %p124 = scmp.eq.s32.totalorder %s25, 5
      %p125 = por %p123, %p124
      %p126 = scmp.ne.s32.totalorder %s115, %s116
      %p127 = scmp.eq.s32.totalorder %s25, 0
      %p128 = por %p126, %p127
      %p129 = scmp.ne.s32.totalorder %s115, %s116
      %p130 = scmp.eq.s32.totalorder %s26, 5
      %p131 = por %p129, %p130
      %p133 = scmp.ne.s32.totalorder %s116, %s132
      %p134 = scmp.eq.s32.totalorder %s26, 0
      %p135 = por %p133, %p134
      %s136 = ssub.s32 %s27, %s39
      %p137 = scmp.eq.s32.totalorder %s136, 0
      %s139 = sadd.s32 %s138, 1
      %s140 = scalar_select %p137, %s138, %s139
      %p143 = pneg %p137
      %p144 = scmp.eq.s32.totalorder %s20, 5
      %p145 = por %p143, %p144
      %p146 = scmp.ne.s32.totalorder %s138, %s141
      %p147 = scmp.eq.s32.totalorder %s20, 0
      %p148 = por %p146, %p147
      %p149 = scmp.ne.s32.totalorder %s138, %s141
      %p150 = scmp.eq.s32.totalorder %s25, 5
      %p151 = por %p149, %p150
      %p152 = scmp.ne.s32.totalorder %s141, %s142
      %p153 = scmp.eq.s32.totalorder %s25, 0
      %p154 = por %p152, %p153
      %p155 = scmp.ne.s32.totalorder %s141, %s142
      %p156 = scmp.eq.s32.totalorder %s26, 5
      %p157 = por %p155, %p156
      %p159 = scmp.ne.s32.totalorder %s142, %s158
      %p160 = scmp.eq.s32.totalorder %s26, 0
      %p161 = por %p159, %p160
      %p162 = scmp.le.s32.totalorder 1, %s20
      %p163 = scmp.lt.s32.totalorder %s20, 7
      %p164 = pnand %p162, %p163
      %p165 = pneg %p164
      // Predicated region
      $region9: #{tpu_custom_call.1} parent=5 // pred_check
        _
      $region10: #{tpu_custom_call.1} parent=5 // pred_check_branch
        %167 = sbr.rel (%p164) target = $region12
      $region11: #{tpu_custom_call.1} parent=5 // pred_region
        %s168 = ssub.s32 %s20, 1
        // Predicated region
        $region13: #{tpu_custom_call.1} parent=11 // pred_check
          %p169 = pneg %p81
        $region14: #{tpu_custom_call.1} parent=11 // pred_check_branch
          %171 = sbr.rel (%p169) target = $region16
        $region15: #{tpu_custom_call.1} parent=11 // pred_region
          %s173 = ssub.s32 1024, 1024
          %174 = vsyncadd [#allocation9], %s173
          %s175 = sshll.u32 [#allocation8], 4
          %s176 = int_to_ptr.vmem [resolvable:$true] %s175
          %181 = dma.hbm_to_vmem [thread:$0]  %s1, 1024, %s176, [#allocation9], 64, 64, 4
        $region16: #{tpu_custom_call.1} parent=11 // pred_fallthru
          _
        // Predicated region
        $region17: #{tpu_custom_call.1} parent=11 // pred_check
          %p182 = pneg %p102
        $region18: #{tpu_custom_call.1} parent=11 // pred_check_branch
          %184 = sbr.rel (%p182) target = $region20
        $region19: #{tpu_custom_call.1} parent=11 // pred_region
          %s186 = ssub.s32 16, 16
          %187 = vsyncadd [#allocation9], %s186
          %s189 = sshll.u32 [#allocation10], 4
          %s190 = int_to_ptr.vmem [resolvable:$true] %s189
          %192 = dma.hbm_to_vmem [thread:$0]  %s2, 16, %s190, [#allocation9]
        $region20: #{tpu_custom_call.1} parent=11 // pred_fallthru
          _
      $region12: #{tpu_custom_call.1} parent=5 // pred_fallthru
        _
      %p193 = scmp.lt.s32.totalorder %s20, 6
      // Predicated region
      $region21: #{tpu_custom_call.1} parent=5 // pred_check
        %p194 = pneg %p193
      $region22: #{tpu_custom_call.1} parent=5 // pred_check_branch
        %196 = sbr.rel (%p194) target = $region24
      $region23: #{tpu_custom_call.1} parent=5 // pred_region
        // Predicated region
        $region25: #{tpu_custom_call.1} parent=23 // pred_check
          %p197 = pneg %p54
        $region26: #{tpu_custom_call.1} parent=23 // pred_check_branch
          %199 = sbr.rel (%p197) target = $region28
        $region27: #{tpu_custom_call.1} parent=23 // pred_region
          #allocation15 [shape = 'u32[6]{0}', space=smem, size = 0x18, scoped, tag = 'DMA stride descriptor']
          %s200 = sand.u32 %s44, 1
          %s201 = scalar_lea.sflag [#allocation6], %s200
          %s202 = sand.u32 %s44, 1
          %s203 = smul.addr %s202, 1024
          %s204 = scalar_lea.vmem [#allocation5], %s203
          %s205 = smul.u32 4, %s27
          %s206 = smul.u32 32, %s28
          %s208 = ssub.s32 16384, 16384
          %209 = vsyncadd %s201, %s208
          %s210 = smul.addr %s205, 96
          %s211 = sadd.s32 %s206, %s210
          %s212 = smul.addr %s211, 128
          %s213 = scalar_lea.hbm %s0, %s212
          %s215 = sshll.u32 1, 14
          %s216 = sxor.u32 4294967295, %s215
          %s218 = sld [smem:[#allocation0]]
          %s219 = sadd.s32 2, %s218
          %s221 = sshll.u32 7, 26
          %s222 = sxor.u32 4294967295, %s221
          %s223 = sand.u32 0, %s222
          %s224 = sshll.u32 %s219, 26
          %s225 = sor.u32 %s223, %s224
          %s226 = sshll.u32 %s204, 4
          %s227 = int_to_ptr.vmem [resolvable:$true] %s226
          %233 = sst [smem:[#allocation15]] 12288
          %s234 = scalar_lea.smem [#allocation15], 1
          %235 = sst [smem:[%s234]] 4096
          %s236 = scalar_lea.smem [#allocation15], 2
          %237 = sst [smem:[%s236]] 32
          %s238 = scalar_lea.smem [#allocation15], 3
          %239 = sst [smem:[%s238]] 128
          %s240 = scalar_lea.smem [#allocation15], 4
          %241 = sst [smem:[%s240]] 128
          %s242 = scalar_lea.smem [#allocation15], 5
          %243 = sst [smem:[%s242]] 8
          %245 = dma.general %s213, 16384, %s227, %s201, [#allocation14], [#allocation15], %s225, 0
        $region28: #{tpu_custom_call.1} parent=23 // pred_fallthru
          _
        // Predicated region
        $region29: #{tpu_custom_call.1} parent=23 // pred_check
          %p246 = pneg %p122
        $region30: #{tpu_custom_call.1} parent=23 // pred_check_branch
          %248 = sbr.rel (%p246) target = $region32
        $region31: #{tpu_custom_call.1} parent=23 // pred_region
          %s249 = sand.u32 %s112, 1
          %s250 = scalar_lea.sflag [#allocation12], %s249
          %s251 = sand.u32 %s112, 1
          %s252 = smul.addr %s251, 4
          %s253 = scalar_lea.vmem [#allocation11], %s252
          %s254 = smul.u32 4, %s27
          %s256 = ssub.s32 64, 64
          %257 = vsyncadd %s250, %s256
          %s258 = smul.addr %s254, 16
          %s259 = scalar_lea.hbm %s3, %s258
          %s260 = sshll.u32 %s253, 4
          %s261 = int_to_ptr.vmem [resolvable:$true] %s260
          %266 = dma.hbm_to_vmem [thread:$0]  %s259, 64, %s261, %s250, 16, 16, 1
        $region32: #{tpu_custom_call.1} parent=23 // pred_fallthru
          _
      $region24: #{tpu_custom_call.1} parent=5 // pred_fallthru
        _
      %p267 = scmp.le.s32.totalorder 1, %s20
      %p268 = scmp.lt.s32.totalorder %s20, 7
      %p269 = pnand %p267, %p268
      %p270 = pneg %p269
      // Predicated region
      $region33: #{tpu_custom_call.1} parent=5 // pred_check
        _
      $region34: #{tpu_custom_call.1} parent=5 // pred_check_branch
        %272 = sbr.rel (%p269) target = $region36
      $region35: #{tpu_custom_call.1} parent=5 // pred_region
        %s273 = ssub.s32 %s20, 1
        %s274 = sand.u32 %s47, 1
        %s275 = scalar_lea.sflag [#allocation6], %s274
        %s276 = sand.u32 %s47, 1
        %s277 = smul.addr %s276, 1024
        %s278 = scalar_lea.vmem [#allocation5], %s277
        // Predicated region
        $region37: #{tpu_custom_call.1} parent=35 // pred_check
          %p279 = pneg %p60
        $region38: #{tpu_custom_call.1} parent=35 // pred_check_branch
          %281 = sbr.rel (%p279) target = $region40
        $region39: #{tpu_custom_call.1} parent=35 // pred_region
          %282 = dma.done %s275, 16384
        $region40: #{tpu_custom_call.1} parent=35 // pred_fallthru
          _
        // Predicated region
        $region41: #{tpu_custom_call.1} parent=35 // pred_check
          %p283 = pneg %p81
        $region42: #{tpu_custom_call.1} parent=35 // pred_check_branch
          %285 = sbr.rel (%p283) target = $region44
        $region43: #{tpu_custom_call.1} parent=35 // pred_region
          %286 = dma.done [#allocation9], 1024
        $region44: #{tpu_custom_call.1} parent=35 // pred_fallthru
          _
        // Predicated region
        $region45: #{tpu_custom_call.1} parent=35 // pred_check
          %p287 = pneg %p102
        $region46: #{tpu_custom_call.1} parent=35 // pred_check_branch
          %289 = sbr.rel (%p287) target = $region48
        $region47: #{tpu_custom_call.1} parent=35 // pred_region
          %290 = dma.done [#allocation9], 16
        $region48: #{tpu_custom_call.1} parent=35 // pred_fallthru
          _
        %s291 = sand.u32 %s115, 1
        %s292 = scalar_lea.sflag [#allocation12], %s291
        %s293 = sand.u32 %s115, 1
        %s294 = smul.addr %s293, 4
        %s295 = scalar_lea.vmem [#allocation11], %s294
        // Predicated region
        $region49: #{tpu_custom_call.1} parent=35 // pred_check
          %p296 = pneg %p128
        $region50: #{tpu_custom_call.1} parent=35 // pred_check_branch
          %298 = sbr.rel (%p296) target = $region52
        $region51: #{tpu_custom_call.1} parent=35 // pred_region
          %299 = dma.done %s292, 64
        $region52: #{tpu_custom_call.1} parent=35 // pred_fallthru
          _
        %s300 = sand.u32 %s47, 1
        %s301 = scalar_lea.sflag [#allocation6], %s300
        %s302 = sand.u32 %s47, 1
        %s303 = smul.addr %s302, 1024
        %s304 = scalar_lea.vmem [#allocation5], %s303
        %p305 = pneg %p60
        %p306 = pneg %p57
        %p307 = pneg %p81
        %p308 = pneg %p78
        %p309 = pneg %p102
        %p310 = pneg %p99
        %s311 = sand.u32 %s115, 1
        %s312 = scalar_lea.sflag [#allocation12], %s311
        %s313 = sand.u32 %s115, 1
        %s314 = smul.addr %s313, 4
        %s315 = scalar_lea.vmem [#allocation11], %s314
        %p316 = pneg %p128
        %p317 = pneg %p125
        %p318 = pneg %p154
        %p319 = pneg %p151
        %s320 = sand.u32 %s141, 1
        %s321 = scalar_lea.sflag [#allocation7], %s320
        %s322 = sand.u32 %s141, 1
        %s323 = smul.addr %s322, 4
        %s324 = scalar_lea.vmem [#allocation13], %s323
        %s325 = smul.u32 4, %s29
        %s326 = smul.u32 32, %s30
        %s327 = smul.u32 4, %s29
        %s328 = smul.u32 4, %s29
        %p330 = scmp.eq.s32.totalorder %s30, 0
        // Predicated region
        $region53: #{tpu_custom_call.1} parent=35 // pred_check
          %p331 = pneg %p330
        $region54: #{tpu_custom_call.1} parent=35 // pred_check_branch
          %333 = sbr.rel (%p331) target = $region56
        $region55: #{tpu_custom_call.1} parent=35 // pred_region
          %vm334 = vcmask 0
          %335 = vst.msk [vmem:[#allocation2] sm:$0x1] %vm334, -inf
          %336 = vst.msk [vmem:[#allocation2 + $0x1] sm:$0x1] %vm334, -inf
          %337 = vst.msk [vmem:[#allocation2 + $0x2] sm:$0x1] %vm334, -inf
          %338 = vst.msk [vmem:[#allocation2 + $0x3] sm:$0x1] %vm334, -inf
          %339 = vst.msk [vmem:[#allocation3] sm:$0x1] %vm334, 0.0
          %340 = vst.msk [vmem:[#allocation3 + $0x1] sm:$0x1] %vm334, 0.0
          %341 = vst.msk [vmem:[#allocation3 + $0x2] sm:$0x1] %vm334, 0.0
          %342 = vst.msk [vmem:[#allocation3 + $0x3] sm:$0x1] %vm334, 0.0
          %343 = vst [vmem:[#allocation4] sm:$0x1] 0.0
          %344 = vst [vmem:[#allocation4 + $0x1] sm:$0x1] 0.0
          %345 = vst [vmem:[#allocation4 + $0x2] sm:$0x1] 0.0
          %346 = vst [vmem:[#allocation4 + $0x3] sm:$0x1] 0.0
        $region56: #{tpu_custom_call.1} parent=35 // pred_fallthru
          _
        %v347 = vld [vmem:[%s278] sm:$0xff]
        %v348 = vld [vmem:[%s278 + $0x8] sm:$0xff]
        %v349 = vld [vmem:[%s278 + $0x10] sm:$0xff]
        %v350 = vld [vmem:[%s278 + $0x18] sm:$0xff]
        %v351 = vld [vmem:[%s278 + $0x20] sm:$0xff]
        %v352 = vld [vmem:[%s278 + $0x28] sm:$0xff]
        %v353 = vld [vmem:[%s278 + $0x30] sm:$0xff]
        %v354 = vld [vmem:[%s278 + $0x38] sm:$0xff]
        %v355 = vld [vmem:[%s278 + $0x40] sm:$0xff]
        %v356 = vld [vmem:[%s278 + $0x48] sm:$0xff]
        %v357 = vld [vmem:[%s278 + $0x50] sm:$0xff]
        %v358 = vld [vmem:[%s278 + $0x58] sm:$0xff]
        %v359 = vld [vmem:[%s278 + $0x60] sm:$0xff]
        %v360 = vld [vmem:[%s278 + $0x68] sm:$0xff]
        %v361 = vld [vmem:[%s278 + $0x70] sm:$0xff]
        %v362 = vld [vmem:[%s278 + $0x78] sm:$0xff]
        %v363 = vld [vmem:[%s278 + $0x80] sm:$0xff]
        %v364 = vld [vmem:[%s278 + $0x88] sm:$0xff]
        %v365 = vld [vmem:[%s278 + $0x90] sm:$0xff]
        %v366 = vld [vmem:[%s278 + $0x98] sm:$0xff]
        %v367 = vld [vmem:[%s278 + $0xa0] sm:$0xff]
        %v368 = vld [vmem:[%s278 + $0xa8] sm:$0xff]
        %v369 = vld [vmem:[%s278 + $0xb0] sm:$0xff]
        %v370 = vld [vmem:[%s278 + $0xb8] sm:$0xff]
        %v371 = vld [vmem:[%s278 + $0xc0] sm:$0xff]
        %v372 = vld [vmem:[%s278 + $0xc8] sm:$0xff]
        %v373 = vld [vmem:[%s278 + $0xd0] sm:$0xff]
        %v374 = vld [vmem:[%s278 + $0xd8] sm:$0xff]
        %v375 = vld [vmem:[%s278 + $0xe0] sm:$0xff]
        %v376 = vld [vmem:[%s278 + $0xe8] sm:$0xff]
        %v377 = vld [vmem:[%s278 + $0xf0] sm:$0xff]
        %v378 = vld [vmem:[%s278 + $0xf8] sm:$0xff]
        %v379 = vld [vmem:[%s278 + $0x100] sm:$0xff]
        %v380 = vld [vmem:[%s278 + $0x108] sm:$0xff]
        %v381 = vld [vmem:[%s278 + $0x110] sm:$0xff]
        %v382 = vld [vmem:[%s278 + $0x118] sm:$0xff]
        %v383 = vld [vmem:[%s278 + $0x120] sm:$0xff]
        %v384 = vld [vmem:[%s278 + $0x128] sm:$0xff]
        %v385 = vld [vmem:[%s278 + $0x130] sm:$0xff]
        %v386 = vld [vmem:[%s278 + $0x138] sm:$0xff]
        %v387 = vld [vmem:[%s278 + $0x140] sm:$0xff]
        %v388 = vld [vmem:[%s278 + $0x148] sm:$0xff]
        %v389 = vld [vmem:[%s278 + $0x150] sm:$0xff]
        %v390 = vld [vmem:[%s278 + $0x158] sm:$0xff]
        %v391 = vld [vmem:[%s278 + $0x160] sm:$0xff]
        %v392 = vld [vmem:[%s278 + $0x168] sm:$0xff]
        %v393 = vld [vmem:[%s278 + $0x170] sm:$0xff]
        %v394 = vld [vmem:[%s278 + $0x178] sm:$0xff]
        %v395 = vld [vmem:[%s278 + $0x180] sm:$0xff]
        %v396 = vld [vmem:[%s278 + $0x188] sm:$0xff]
        %v397 = vld [vmem:[%s278 + $0x190] sm:$0xff]
        %v398 = vld [vmem:[%s278 + $0x198] sm:$0xff]
        %v399 = vld [vmem:[%s278 + $0x1a0] sm:$0xff]
        %v400 = vld [vmem:[%s278 + $0x1a8] sm:$0xff]
        %v401 = vld [vmem:[%s278 + $0x1b0] sm:$0xff]
        %v402 = vld [vmem:[%s278 + $0x1b8] sm:$0xff]
        %v403 = vld [vmem:[%s278 + $0x1c0] sm:$0xff]
        %v404 = vld [vmem:[%s278 + $0x1c8] sm:$0xff]
        %v405 = vld [vmem:[%s278 + $0x1d0] sm:$0xff]
        %v406 = vld [vmem:[%s278 + $0x1d8] sm:$0xff]
        %v407 = vld [vmem:[%s278 + $0x1e0] sm:$0xff]
        %v408 = vld [vmem:[%s278 + $0x1e8] sm:$0xff]
        %v409 = vld [vmem:[%s278 + $0x1f0] sm:$0xff]
        %v410 = vld [vmem:[%s278 + $0x1f8] sm:$0xff]
        %v411 = vld [vmem:[%s278 + $0x200] sm:$0xff]
        %v412 = vld [vmem:[%s278 + $0x208] sm:$0xff]
        %v413 = vld [vmem:[%s278 + $0x210] sm:$0xff]
        %v414 = vld [vmem:[%s278 + $0x218] sm:$0xff]
        %v415 = vld [vmem:[%s278 + $0x220] sm:$0xff]
        %v416 = vld [vmem:[%s278 + $0x228] sm:$0xff]
        %v417 = vld [vmem:[%s278 + $0x230] sm:$0xff]
        %v418 = vld [vmem:[%s278 + $0x238] sm:$0xff]
        %v419 = vld [vmem:[%s278 + $0x240] sm:$0xff]
        %v420 = vld [vmem:[%s278 + $0x248] sm:$0xff]
        %v421 = vld [vmem:[%s278 + $0x250] sm:$0xff]
        %v422 = vld [vmem:[%s278 + $0x258] sm:$0xff]
        %v423 = vld [vmem:[%s278 + $0x260] sm:$0xff]
        %v424 = vld [vmem:[%s278 + $0x268] sm:$0xff]
        %v425 = vld [vmem:[%s278 + $0x270] sm:$0xff]
        %v426 = vld [vmem:[%s278 + $0x278] sm:$0xff]
        %v427 = vld [vmem:[%s278 + $0x280] sm:$0xff]
        %v428 = vld [vmem:[%s278 + $0x288] sm:$0xff]
        %v429 = vld [vmem:[%s278 + $0x290] sm:$0xff]
        %v430 = vld [vmem:[%s278 + $0x298] sm:$0xff]
        %v431 = vld [vmem:[%s278 + $0x2a0] sm:$0xff]
        %v432 = vld [vmem:[%s278 + $0x2a8] sm:$0xff]
        %v433 = vld [vmem:[%s278 + $0x2b0] sm:$0xff]
        %v434 = vld [vmem:[%s278 + $0x2b8] sm:$0xff]
        %v435 = vld [vmem:[%s278 + $0x2c0] sm:$0xff]
        %v436 = vld [vmem:[%s278 + $0x2c8] sm:$0xff]
        %v437 = vld [vmem:[%s278 + $0x2d0] sm:$0xff]
        %v438 = vld [vmem:[%s278 + $0x2d8] sm:$0xff]
        %v439 = vld [vmem:[%s278 + $0x2e0] sm:$0xff]
        %v440 = vld [vmem:[%s278 + $0x2e8] sm:$0xff]
        %v441 = vld [vmem:[%s278 + $0x2f0] sm:$0xff]
        %v442 = vld [vmem:[%s278 + $0x2f8] sm:$0xff]
        %v443 = vld [vmem:[%s278 + $0x300] sm:$0xff]
        %v444 = vld [vmem:[%s278 + $0x308] sm:$0xff]
        %v445 = vld [vmem:[%s278 + $0x310] sm:$0xff]
        %v446 = vld [vmem:[%s278 + $0x318] sm:$0xff]
        %v447 = vld [vmem:[%s278 + $0x320] sm:$0xff]
        %v448 = vld [vmem:[%s278 + $0x328] sm:$0xff]
        %v449 = vld [vmem:[%s278 + $0x330] sm:$0xff]
        %v450 = vld [vmem:[%s278 + $0x338] sm:$0xff]
        %v451 = vld [vmem:[%s278 + $0x340] sm:$0xff]
        %v452 = vld [vmem:[%s278 + $0x348] sm:$0xff]
        %v453 = vld [vmem:[%s278 + $0x350] sm:$0xff]
        %v454 = vld [vmem:[%s278 + $0x358] sm:$0xff]
        %v455 = vld [vmem:[%s278 + $0x360] sm:$0xff]
        %v456 = vld [vmem:[%s278 + $0x368] sm:$0xff]
        %v457 = vld [vmem:[%s278 + $0x370] sm:$0xff]
        %v458 = vld [vmem:[%s278 + $0x378] sm:$0xff]
        %v459 = vld [vmem:[%s278 + $0x380] sm:$0xff]
        %v460 = vld [vmem:[%s278 + $0x388] sm:$0xff]
        %v461 = vld [vmem:[%s278 + $0x390] sm:$0xff]
        %v462 = vld [vmem:[%s278 + $0x398] sm:$0xff]
        %v463 = vld [vmem:[%s278 + $0x3a0] sm:$0xff]
        %v464 = vld [vmem:[%s278 + $0x3a8] sm:$0xff]
        %v465 = vld [vmem:[%s278 + $0x3b0] sm:$0xff]
        %v466 = vld [vmem:[%s278 + $0x3b8] sm:$0xff]
        %v467 = vld [vmem:[%s278 + $0x3c0] sm:$0xff]
        %v468 = vld [vmem:[%s278 + $0x3c8] sm:$0xff]
        %v469 = vld [vmem:[%s278 + $0x3d0] sm:$0xff]
        %v470 = vld [vmem:[%s278 + $0x3d8] sm:$0xff]
        %v471 = vld [vmem:[%s278 + $0x3e0] sm:$0xff]
        %v472 = vld [vmem:[%s278 + $0x3e8] sm:$0xff]
        %v473 = vld [vmem:[%s278 + $0x3f0] sm:$0xff]
        %v474 = vld [vmem:[%s278 + $0x3f8] sm:$0xff]
        %v475 = vpack.c.bf16 %v348, %v347
        %v476 = vpack.c.bf16 %v350, %v349
        %v477 = vpack.c.bf16 %v352, %v351
        %v478 = vpack.c.bf16 %v354, %v353
        %v479 = vpack.c.bf16 %v356, %v355
        %v480 = vpack.c.bf16 %v358, %v357
        %v481 = vpack.c.bf16 %v360, %v359
        %v482 = vpack.c.bf16 %v362, %v361
        %v483 = vpack.c.bf16 %v364, %v363
        %v484 = vpack.c.bf16 %v366, %v365
        %v485 = vpack.c.bf16 %v368, %v367
        %v486 = vpack.c.bf16 %v370, %v369
        %v487 = vpack.c.bf16 %v372, %v371
        %v488 = vpack.c.bf16 %v374, %v373
        %v489 = vpack.c.bf16 %v376, %v375
        %v490 = vpack.c.bf16 %v378, %v377
        %v491 = vpack.c.bf16 %v380, %v379
        %v492 = vpack.c.bf16 %v382, %v381
        %v493 = vpack.c.bf16 %v384, %v383
        %v494 = vpack.c.bf16 %v386, %v385
        %v495 = vpack.c.bf16 %v388, %v387
        %v496 = vpack.c.bf16 %v390, %v389
        %v497 = vpack.c.bf16 %v392, %v391
        %v498 = vpack.c.bf16 %v394, %v393
        %v499 = vpack.c.bf16 %v396, %v395
        %v500 = vpack.c.bf16 %v398, %v397
        %v501 = vpack.c.bf16 %v400, %v399
        %v502 = vpack.c.bf16 %v402, %v401
        %v503 = vpack.c.bf16 %v404, %v403
        %v504 = vpack.c.bf16 %v406, %v405
        %v505 = vpack.c.bf16 %v408, %v407
        %v506 = vpack.c.bf16 %v410, %v409
        %v507 = vpack.c.bf16 %v412, %v411
        %v508 = vpack.c.bf16 %v414, %v413
        %v509 = vpack.c.bf16 %v416, %v415
        %v510 = vpack.c.bf16 %v418, %v417
        %v511 = vpack.c.bf16 %v420, %v419
        %v512 = vpack.c.bf16 %v422, %v421
        %v513 = vpack.c.bf16 %v424, %v423
        %v514 = vpack.c.bf16 %v426, %v425
        %v515 = vpack.c.bf16 %v428, %v427
        %v516 = vpack.c.bf16 %v430, %v429
        %v517 = vpack.c.bf16 %v432, %v431
        %v518 = vpack.c.bf16 %v434, %v433
        %v519 = vpack.c.bf16 %v436, %v435
        %v520 = vpack.c.bf16 %v438, %v437
        %v521 = vpack.c.bf16 %v440, %v439
        %v522 = vpack.c.bf16 %v442, %v441
        %v523 = vpack.c.bf16 %v444, %v443
        %v524 = vpack.c.bf16 %v446, %v445
        %v525 = vpack.c.bf16 %v448, %v447
        %v526 = vpack.c.bf16 %v450, %v449
        %v527 = vpack.c.bf16 %v452, %v451
        %v528 = vpack.c.bf16 %v454, %v453
        %v529 = vpack.c.bf16 %v456, %v455
        %v530 = vpack.c.bf16 %v458, %v457
        %v531 = vpack.c.bf16 %v460, %v459
        %v532 = vpack.c.bf16 %v462, %v461
        %v533 = vpack.c.bf16 %v464, %v463
        %v534 = vpack.c.bf16 %v466, %v465
        %v535 = vpack.c.bf16 %v468, %v467
        %v536 = vpack.c.bf16 %v470, %v469
        %v537 = vpack.c.bf16 %v472, %v471
        %v538 = vpack.c.bf16 %v474, %v473
        %v539 = vld [vmem:[#allocation8] sm:$0xf]
        %v540 = vld [vmem:[#allocation8 + $0x4] sm:$0xf]
        %v541 = vld [vmem:[#allocation8 + $0x8] sm:$0xf]
        %v542 = vld [vmem:[#allocation8 + $0xc] sm:$0xf]
        %v543 = vld [vmem:[#allocation8 + $0x10] sm:$0xf]
        %v544 = vld [vmem:[#allocation8 + $0x14] sm:$0xf]
        %v545 = vld [vmem:[#allocation8 + $0x18] sm:$0xf]
        %v546 = vld [vmem:[#allocation8 + $0x1c] sm:$0xf]
        %v547 = vld [vmem:[#allocation8 + $0x20] sm:$0xf]
        %v548 = vld [vmem:[#allocation8 + $0x24] sm:$0xf]
        %v549 = vld [vmem:[#allocation8 + $0x28] sm:$0xf]
        %v550 = vld [vmem:[#allocation8 + $0x2c] sm:$0xf]
        %v551 = vld [vmem:[#allocation8 + $0x30] sm:$0xf]
        %v552 = vld [vmem:[#allocation8 + $0x34] sm:$0xf]
        %v553 = vld [vmem:[#allocation8 + $0x38] sm:$0xf]
        %v554 = vld [vmem:[#allocation8 + $0x3c] sm:$0xf]
        %v555 = vld [vmem:[#allocation10] sm:$0x1]
        %v557 = vlaneseq
        %v558 = vshrl.u32 %v557, 7
        %v559 = vsub.s32 0, %v558
        %v560 = vrot.slane %v555, %v559
        %v578 = vunpack.c.l.b16 %v539
        %v579 = vunpack.c.l.b16 %v540
        %v580 = vunpack.c.l.b16 %v541
        %v581 = vunpack.c.l.b16 %v542
        %v582 = vunpack.c.l.b16 %v543
        %v583 = vunpack.c.l.b16 %v544
        %v584 = vunpack.c.l.b16 %v545
        %v585 = vunpack.c.l.b16 %v546
        %v586 = vunpack.c.l.b16 %v547
        %v587 = vunpack.c.l.b16 %v548
        %v588 = vunpack.c.l.b16 %v549
        %v589 = vunpack.c.l.b16 %v550
        %v590 = vunpack.c.l.b16 %v551
        %v591 = vunpack.c.l.b16 %v552
        %v592 = vunpack.c.l.b16 %v553
        %v593 = vunpack.c.l.b16 %v554
        %v594 = vpack.c.b16 %v579, %v578
        %v595 = vpack.c.b16 %v581, %v580
        %v596 = vpack.c.b16 %v583, %v582
        %v597 = vpack.c.b16 %v585, %v584
        %v598 = vpack.c.b16 %v587, %v586
        %v599 = vpack.c.b16 %v589, %v588
        %v600 = vpack.c.b16 %v591, %v590
        %v601 = vpack.c.b16 %v593, %v592
        %610 = vmatprep.subr.bf16.mxu0 0
        %611 = vmatpush1.bf16.msra.mxu0 %v594
        %612 = vmatprep.subr.bf16.mxu0 0
        %613 = vmatpush1.bf16.msra.mxu0 %v595
        %614 = vmatprep.subr.bf16.mxu0 0
        %615 = vmatpush1.bf16.msra.mxu0 %v596
        %616 = vmatprep.subr.bf16.mxu0 0
        %617 = vmatpush1.bf16.msra.mxu0 %v597
        %618 = vmatprep.subr.bf16.mxu0 0
        %619 = vmatpush1.bf16.msra.mxu0 %v598
        %620 = vmatprep.subr.bf16.mxu0 0
        %621 = vmatpush1.bf16.msra.mxu0 %v599
        %622 = vmatprep.subr.bf16.mxu0 0
        %623 = vmatpush1.bf16.msra.mxu0 %v600
        %624 = vmatprep.subr.bf16.mxu0 0
        %625 = vmatpush1.bf16.msra.mxu0 %v601
        %626 = vmatprep.subr.bf16.mxu0 0
        %627 = vmatpush1.bf16.msra.mxu0 0
        %628 = vmatprep.subr.bf16.mxu0 0
        %629 = vmatpush1.bf16.msra.mxu0 0
        %630 = vmatprep.subr.bf16.mxu0 0
        %631 = vmatpush1.bf16.msra.mxu0 0
        %632 = vmatprep.subr.bf16.mxu0 0
        %633 = vmatpush1.bf16.msra.mxu0 0
        %634 = vmatprep.subr.bf16.mxu0 0
        %635 = vmatpush1.bf16.msra.mxu0 0
        %636 = vmatprep.subr.bf16.mxu0 0
        %637 = vmatpush1.bf16.msra.mxu0 0
        %638 = vmatprep.subr.bf16.mxu0 0
        %639 = vmatpush1.bf16.msra.mxu0 0
        %640 = vmatprep.subr.bf16.mxu0 0
        %641 = vmatpush1.bf16.msra.mxu0 0
        %642 = vmatprep.mubr.bf16.mxu0 0
        %643 = vmatmul.mubr.bf16.gmra.mrb[0].mxu0 %v475
        %v644 = vpop.f32.mrb[0].mxu0
        %v645 = vadd.f32 %v560, %v644
        %v646 = vpop.f32.mrb[0].mxu0
        %v647 = vpop.f32.mrb[0].mxu0
        %v648 = vadd.f32 %v560, %v647
        %v649 = vpop.f32.mrb[0].mxu0
        %650 = vmatprep.mubr.bf16.mxu0 0
        %651 = vmatmul.mubr.bf16.gmra.mrb[0].mxu0 %v476
        %v652 = vpop.f32.mrb[0].mxu0
        %v653 = vadd.f32 %v560, %v652
        %v654 = vpop.f32.mrb[0].mxu0
        %v655 = vpop.f32.mrb[0].mxu0
        %v656 = vadd.f32 %v560, %v655
        %v657 = vpop.f32.mrb[0].mxu0
        %658 = vmatprep.mubr.bf16.mxu0 0
        %659 = vmatmul.mubr.bf16.gmra.mrb[0].mxu0 %v477
        %v660 = vpop.f32.mrb[0].mxu0
        %v661 = vadd.f32 %v560, %v660
        %v662 = vpop.f32.mrb[0].mxu0
        %v663 = vpop.f32.mrb[0].mxu0
        %v664 = vadd.f32 %v560, %v663
        %v665 = vpop.f32.mrb[0].mxu0
        %666 = vmatprep.mubr.bf16.mxu0 0
        %667 = vmatmul.mubr.bf16.gmra.mrb[0].mxu0 %v478
        %v668 = vpop.f32.mrb[0].mxu0
        %v669 = vadd.f32 %v560, %v668
        %v670 = vpop.f32.mrb[0].mxu0
        %v671 = vpop.f32.mrb[0].mxu0
        %v672 = vadd.f32 %v560, %v671
        %v673 = vpop.f32.mrb[0].mxu0
        %674 = vmatprep.mubr.bf16.mxu0 0
        %675 = vmatmul.mubr.bf16.gmra.mrb[0].mxu0 %v479
        %v676 = vpop.f32.mrb[0].mxu0
        %v677 = vadd.f32 %v560, %v676
        %v678 = vpop.f32.mrb[0].mxu0
        %v679 = vpop.f32.mrb[0].mxu0
        %v680 = vadd.f32 %v560, %v679
        %v681 = vpop.f32.mrb[0].mxu0
        %682 = vmatprep.mubr.bf16.mxu0 0
        %683 = vmatmul.mubr.bf16.gmra.mrb[0].mxu0 %v480
        %v684 = vpop.f32.mrb[0].mxu0
        %v685 = vadd.f32 %v560, %v684
        %v686 = vpop.f32.mrb[0].mxu0
        %v687 = vpop.f32.mrb[0].mxu0
        %v688 = vadd.f32 %v560, %v687
        %v689 = vpop.f32.mrb[0].mxu0
        %690 = vmatprep.mubr.bf16.mxu0 0
        %691 = vmatmul.mubr.bf16.gmra.mrb[0].mxu0 %v481
        %v692 = vpop.f32.mrb[0].mxu0
        %v693 = vadd.f32 %v560, %v692
        %v694 = vpop.f32.mrb[0].mxu0
        %v695 = vpop.f32.mrb[0].mxu0
        %v696 = vadd.f32 %v560, %v695
        %v697 = vpop.f32.mrb[0].mxu0
        %698 = vmatprep.mubr.bf16.mxu0 0
        %699 = vmatmul.mubr.bf16.gmra.mrb[0].mxu0 %v482
        %v700 = vpop.f32.mrb[0].mxu0
        %v701 = vadd.f32 %v560, %v700
        %v702 = vpop.f32.mrb[0].mxu0
        %v703 = vpop.f32.mrb[0].mxu0
        %v704 = vadd.f32 %v560, %v703
        %v705 = vpop.f32.mrb[0].mxu0
        %706 = vmatprep.mubr.bf16.mxu0 0
        %707 = vmatmul.mubr.bf16.gmra.mrb[0].mxu0 %v483
        %v708 = vpop.f32.mrb[0].mxu0
        %v709 = vadd.f32 %v560, %v708
        %v710 = vpop.f32.mrb[0].mxu0
        %v711 = vpop.f32.mrb[0].mxu0
        %v712 = vadd.f32 %v560, %v711
        %v713 = vpop.f32.mrb[0].mxu0
        %714 = vmatprep.mubr.bf16.mxu0 0
        %715 = vmatmul.mubr.bf16.gmra.mrb[0].mxu0 %v484
        %v716 = vpop.f32.mrb[0].mxu0
        %v717 = vadd.f32 %v560, %v716
        %v718 = vpop.f32.mrb[0].mxu0
        %v719 = vpop.f32.mrb[0].mxu0
        %v720 = vadd.f32 %v560, %v719
        %v721 = vpop.f32.mrb[0].mxu0
        %722 = vmatprep.mubr.bf16.mxu0 0
        %723 = vmatmul.mubr.bf16.gmra.mrb[0].mxu0 %v485
        %v724 = vpop.f32.mrb[0].mxu0
        %v725 = vadd.f32 %v560, %v724
        %v726 = vpop.f32.mrb[0].mxu0
        %v727 = vpop.f32.mrb[0].mxu0
        %v728 = vadd.f32 %v560, %v727
        %v729 = vpop.f32.mrb[0].mxu0
        %730 = vmatprep.mubr.bf16.mxu0 0
        %731 = vmatmul.mubr.bf16.gmra.mrb[0].mxu0 %v486
        %v732 = vpop.f32.mrb[0].mxu0
        %v733 = vadd.f32 %v560, %v732
        %v734 = vpop.f32.mrb[0].mxu0
        %v735 = vpop.f32.mrb[0].mxu0
        %v736 = vadd.f32 %v560, %v735
        %v737 = vpop.f32.mrb[0].mxu0
        %738 = vmatprep.mubr.bf16.mxu0 0
        %739 = vmatmul.mubr.bf16.gmra.mrb[0].mxu0 %v487
        %v740 = vpop.f32.mrb[0].mxu0
        %v741 = vadd.f32 %v560, %v740
        %v742 = vpop.f32.mrb[0].mxu0
        %v743 = vpop.f32.mrb[0].mxu0
        %v744 = vadd.f32 %v560, %v743
        %v745 = vpop.f32.mrb[0].mxu0
        %746 = vmatprep.mubr.bf16.mxu0 0
        %747 = vmatmul.mubr.bf16.gmra.mrb[0].mxu0 %v488
        %v748 = vpop.f32.mrb[0].mxu0
        %v749 = vadd.f32 %v560, %v748
        %v750 = vpop.f32.mrb[0].mxu0
        %v751 = vpop.f32.mrb[0].mxu0
        %v752 = vadd.f32 %v560, %v751
        %v753 = vpop.f32.mrb[0].mxu0
        %754 = vmatprep.mubr.bf16.mxu0 0
        %755 = vmatmul.mubr.bf16.gmra.mrb[0].mxu0 %v489
        %v756 = vpop.f32.mrb[0].mxu0
        %v757 = vadd.f32 %v560, %v756
        %v758 = vpop.f32.mrb[0].mxu0
        %v759 = vpop.f32.mrb[0].mxu0
        %v760 = vadd.f32 %v560, %v759
        %v761 = vpop.f32.mrb[0].mxu0
        %762 = vmatprep.mubr.bf16.mxu0 0
        %763 = vmatmul.mubr.bf16.gmra.mrb[0].mxu0 %v490
        %v764 = vpop.f32.mrb[0].mxu0
        %v765 = vadd.f32 %v560, %v764
        %v766 = vpop.f32.mrb[0].mxu0
        %v767 = vpop.f32.mrb[0].mxu0
        %v768 = vadd.f32 %v560, %v767
        %v769 = vpop.f32.mrb[0].mxu0
        %770 = vmatprep.mubr.bf16.mxu0 0
        %771 = vmatmul.mubr.bf16.gmra.mrb[0].mxu0 %v491
        %v772 = vpop.f32.mrb[0].mxu0
        %v773 = vadd.f32 %v560, %v772
        %v774 = vpop.f32.mrb[0].mxu0
        %v775 = vpop.f32.mrb[0].mxu0
        %v776 = vadd.f32 %v560, %v775
        %v777 = vpop.f32.mrb[0].mxu0
        %778 = vmatprep.mubr.bf16.mxu0 0
        %779 = vmatmul.mubr.bf16.gmra.mrb[0].mxu0 %v492
        %v780 = vpop.f32.mrb[0].mxu0
        %v781 = vadd.f32 %v560, %v780
        %v782 = vpop.f32.mrb[0].mxu0
        %v783 = vpop.f32.mrb[0].mxu0
        %v784 = vadd.f32 %v560, %v783
        %v785 = vpop.f32.mrb[0].mxu0
        %786 = vmatprep.mubr.bf16.mxu0 0
        %787 = vmatmul.mubr.bf16.gmra.mrb[0].mxu0 %v493
        %v788 = vpop.f32.mrb[0].mxu0
        %v789 = vadd.f32 %v560, %v788
        %v790 = vpop.f32.mrb[0].mxu0
        %v791 = vpop.f32.mrb[0].mxu0
        %v792 = vadd.f32 %v560, %v791
        %v793 = vpop.f32.mrb[0].mxu0
        %794 = vmatprep.mubr.bf16.mxu0 0
        %795 = vmatmul.mubr.bf16.gmra.mrb[0].mxu0 %v494
        %v796 = vpop.f32.mrb[0].mxu0
        %v797 = vadd.f32 %v560, %v796
        %v798 = vpop.f32.mrb[0].mxu0
        %v799 = vpop.f32.mrb[0].mxu0
        %v800 = vadd.f32 %v560, %v799
        %v801 = vpop.f32.mrb[0].mxu0
        %802 = vmatprep.mubr.bf16.mxu0 0
        %803 = vmatmul.mubr.bf16.gmra.mrb[0].mxu0 %v495
        %v804 = vpop.f32.mrb[0].mxu0
        %v805 = vadd.f32 %v560, %v804
        %v806 = vpop.f32.mrb[0].mxu0
        %v807 = vpop.f32.mrb[0].mxu0
        %v808 = vadd.f32 %v560, %v807
        %v809 = vpop.f32.mrb[0].mxu0
        %810 = vmatprep.mubr.bf16.mxu0 0
        %811 = vmatmul.mubr.bf16.gmra.mrb[0].mxu0 %v496
        %v812 = vpop.f32.mrb[0].mxu0
        %v813 = vadd.f32 %v560, %v812
        %v814 = vpop.f32.mrb[0].mxu0
        %v815 = vpop.f32.mrb[0].mxu0
        %v816 = vadd.f32 %v560, %v815
        %v817 = vpop.f32.mrb[0].mxu0
        %818 = vmatprep.mubr.bf16.mxu0 0
        %819 = vmatmul.mubr.bf16.gmra.mrb[0].mxu0 %v497
        %v820 = vpop.f32.mrb[0].mxu0
        %v821 = vadd.f32 %v560, %v820
        %v822 = vpop.f32.mrb[0].mxu0
        %v823 = vpop.f32.mrb[0].mxu0
        %v824 = vadd.f32 %v560, %v823
        %v825 = vpop.f32.mrb[0].mxu0
        %826 = vmatprep.mubr.bf16.mxu0 0
        %827 = vmatmul.mubr.bf16.gmra.mrb[0].mxu0 %v498
        %v828 = vpop.f32.mrb[0].mxu0
        %v829 = vadd.f32 %v560, %v828
        %v830 = vpop.f32.mrb[0].mxu0
        %v831 = vpop.f32.mrb[0].mxu0
        %v832 = vadd.f32 %v560, %v831
        %v833 = vpop.f32.mrb[0].mxu0
        %834 = vmatprep.mubr.bf16.mxu0 0
        %835 = vmatmul.mubr.bf16.gmra.mrb[0].mxu0 %v499
        %v836 = vpop.f32.mrb[0].mxu0
        %v837 = vadd.f32 %v560, %v836
        %v838 = vpop.f32.mrb[0].mxu0
        %v839 = vpop.f32.mrb[0].mxu0
        %v840 = vadd.f32 %v560, %v839
        %v841 = vpop.f32.mrb[0].mxu0
        %842 = vmatprep.mubr.bf16.mxu0 0
        %843 = vmatmul.mubr.bf16.gmra.mrb[0].mxu0 %v500
        %v844 = vpop.f32.mrb[0].mxu0
        %v845 = vadd.f32 %v560, %v844
        %v846 = vpop.f32.mrb[0].mxu0
        %v847 = vpop.f32.mrb[0].mxu0
        %v848 = vadd.f32 %v560, %v847
        %v849 = vpop.f32.mrb[0].mxu0
        %850 = vmatprep.mubr.bf16.mxu0 0
        %851 = vmatmul.mubr.bf16.gmra.mrb[0].mxu0 %v501
        %v852 = vpop.f32.mrb[0].mxu0
        %v853 = vadd.f32 %v560, %v852
        %v854 = vpop.f32.mrb[0].mxu0
        %v855 = vpop.f32.mrb[0].mxu0
        %v856 = vadd.f32 %v560, %v855
        %v857 = vpop.f32.mrb[0].mxu0
        %858 = vmatprep.mubr.bf16.mxu0 0
        %859 = vmatmul.mubr.bf16.gmra.mrb[0].mxu0 %v502
        %v860 = vpop.f32.mrb[0].mxu0
        %v861 = vadd.f32 %v560, %v860
        %v862 = vpop.f32.mrb[0].mxu0
        %v863 = vpop.f32.mrb[0].mxu0
        %v864 = vadd.f32 %v560, %v863
        %v865 = vpop.f32.mrb[0].mxu0
        %866 = vmatprep.mubr.bf16.mxu0 0
        %867 = vmatmul.mubr.bf16.gmra.mrb[0].mxu0 %v503
        %v868 = vpop.f32.mrb[0].mxu0
        %v869 = vadd.f32 %v560, %v868
        %v870 = vpop.f32.mrb[0].mxu0
        %v871 = vpop.f32.mrb[0].mxu0
        %v872 = vadd.f32 %v560, %v871
        %v873 = vpop.f32.mrb[0].mxu0
        %874 = vmatprep.mubr.bf16.mxu0 0
        %875 = vmatmul.mubr.bf16.gmra.mrb[0].mxu0 %v504
        %v876 = vpop.f32.mrb[0].mxu0
        %v877 = vadd.f32 %v560, %v876
        %v878 = vpop.f32.mrb[0].mxu0
        %v879 = vpop.f32.mrb[0].mxu0
        %v880 = vadd.f32 %v560, %v879
        %v881 = vpop.f32.mrb[0].mxu0
        %882 = vmatprep.mubr.bf16.mxu0 0
        %883 = vmatmul.mubr.bf16.gmra.mrb[0].mxu0 %v505
        %v884 = vpop.f32.mrb[0].mxu0
        %v885 = vadd.f32 %v560, %v884
        %v886 = vpop.f32.mrb[0].mxu0
        %v887 = vpop.f32.mrb[0].mxu0
        %v888 = vadd.f32 %v560, %v887
        %v889 = vpop.f32.mrb[0].mxu0
        %890 = vmatprep.mubr.bf16.mxu0 0
        %891 = vmatmul.mubr.bf16.gmra.mrb[0].mxu0 %v506
        %v892 = vpop.f32.mrb[0].mxu0
        %v893 = vadd.f32 %v560, %v892
        %v894 = vpop.f32.mrb[0].mxu0
        %v895 = vpop.f32.mrb[0].mxu0
        %v896 = vadd.f32 %v560, %v895
        %v897 = vpop.f32.mrb[0].mxu0
        %898 = vmatprep.mubr.bf16.mxu0 0
        %899 = vmatmul.mubr.bf16.gmra.mrb[0].mxu0 %v507
        %v900 = vpop.f32.mrb[0].mxu0
        %v901 = vadd.f32 %v560, %v900
        %v902 = vpop.f32.mrb[0].mxu0
        %v903 = vpop.f32.mrb[0].mxu0
        %v904 = vadd.f32 %v560, %v903
        %v905 = vpop.f32.mrb[0].mxu0
        %906 = vmatprep.mubr.bf16.mxu0 0
        %907 = vmatmul.mubr.bf16.gmra.mrb[0].mxu0 %v508
        %v908 = vpop.f32.mrb[0].mxu0
        %v909 = vadd.f32 %v560, %v908
        %v910 = vpop.f32.mrb[0].mxu0
        %v911 = vpop.f32.mrb[0].mxu0
        %v912 = vadd.f32 %v560, %v911
        %v913 = vpop.f32.mrb[0].mxu0
        %914 = vmatprep.mubr.bf16.mxu0 0
        %915 = vmatmul.mubr.bf16.gmra.mrb[0].mxu0 %v509
        %v916 = vpop.f32.mrb[0].mxu0
        %v917 = vadd.f32 %v560, %v916
        %v918 = vpop.f32.mrb[0].mxu0
        %v919 = vpop.f32.mrb[0].mxu0
        %v920 = vadd.f32 %v560, %v919
        %v921 = vpop.f32.mrb[0].mxu0
        %922 = vmatprep.mubr.bf16.mxu0 0
        %923 = vmatmul.mubr.bf16.gmra.mrb[0].mxu0 %v510
        %v924 = vpop.f32.mrb[0].mxu0
        %v925 = vadd.f32 %v560, %v924
        %v926 = vpop.f32.mrb[0].mxu0
        %v927 = vpop.f32.mrb[0].mxu0
        %v928 = vadd.f32 %v560, %v927
        %v929 = vpop.f32.mrb[0].mxu0
        %930 = vmatprep.mubr.bf16.mxu0 0
        %931 = vmatmul.mubr.bf16.gmra.mrb[0].mxu0 %v511
        %v932 = vpop.f32.mrb[0].mxu0
        %v933 = vadd.f32 %v560, %v932
        %v934 = vpop.f32.mrb[0].mxu0
        %v935 = vpop.f32.mrb[0].mxu0
        %v936 = vadd.f32 %v560, %v935
        %v937 = vpop.f32.mrb[0].mxu0
        %938 = vmatprep.mubr.bf16.mxu0 0
        %939 = vmatmul.mubr.bf16.gmra.mrb[0].mxu0 %v512
        %v940 = vpop.f32.mrb[0].mxu0
        %v941 = vadd.f32 %v560, %v940
        %v942 = vpop.f32.mrb[0].mxu0
        %v943 = vpop.f32.mrb[0].mxu0
        %v944 = vadd.f32 %v560, %v943
        %v945 = vpop.f32.mrb[0].mxu0
        %946 = vmatprep.mubr.bf16.mxu0 0
        %947 = vmatmul.mubr.bf16.gmra.mrb[0].mxu0 %v513
        %v948 = vpop.f32.mrb[0].mxu0
        %v949 = vadd.f32 %v560, %v948
        %v950 = vpop.f32.mrb[0].mxu0
        %v951 = vpop.f32.mrb[0].mxu0
        %v952 = vadd.f32 %v560, %v951
        %v953 = vpop.f32.mrb[0].mxu0
        %954 = vmatprep.mubr.bf16.mxu0 0
        %955 = vmatmul.mubr.bf16.gmra.mrb[0].mxu0 %v514
        %v956 = vpop.f32.mrb[0].mxu0
        %v957 = vadd.f32 %v560, %v956
        %v958 = vpop.f32.mrb[0].mxu0
        %v959 = vpop.f32.mrb[0].mxu0
        %v960 = vadd.f32 %v560, %v959
        %v961 = vpop.f32.mrb[0].mxu0
        %962 = vmatprep.mubr.bf16.mxu0 0
        %963 = vmatmul.mubr.bf16.gmra.mrb[0].mxu0 %v515
        %v964 = vpop.f32.mrb[0].mxu0
        %v965 = vadd.f32 %v560, %v964
        %v966 = vpop.f32.mrb[0].mxu0
        %v967 = vpop.f32.mrb[0].mxu0
        %v968 = vadd.f32 %v560, %v967
        %v969 = vpop.f32.mrb[0].mxu0
        %970 = vmatprep.mubr.bf16.mxu0 0
        %971 = vmatmul.mubr.bf16.gmra.mrb[0].mxu0 %v516
        %v972 = vpop.f32.mrb[0].mxu0
        %v973 = vadd.f32 %v560, %v972
        %v974 = vpop.f32.mrb[0].mxu0
        %v975 = vpop.f32.mrb[0].mxu0
        %v976 = vadd.f32 %v560, %v975
        %v977 = vpop.f32.mrb[0].mxu0
        %978 = vmatprep.mubr.bf16.mxu0 0
        %979 = vmatmul.mubr.bf16.gmra.mrb[0].mxu0 %v517
        %v980 = vpop.f32.mrb[0].mxu0
        %v981 = vadd.f32 %v560, %v980
        %v982 = vpop.f32.mrb[0].mxu0
        %v983 = vpop.f32.mrb[0].mxu0
        %v984 = vadd.f32 %v560, %v983
        %v985 = vpop.f32.mrb[0].mxu0
        %986 = vmatprep.mubr.bf16.mxu0 0
        %987 = vmatmul.mubr.bf16.gmra.mrb[0].mxu0 %v518
        %v988 = vpop.f32.mrb[0].mxu0
        %v989 = vadd.f32 %v560, %v988
        %v990 = vpop.f32.mrb[0].mxu0
        %v991 = vpop.f32.mrb[0].mxu0
        %v992 = vadd.f32 %v560, %v991
        %v993 = vpop.f32.mrb[0].mxu0
        %994 = vmatprep.mubr.bf16.mxu0 0
        %995 = vmatmul.mubr.bf16.gmra.mrb[0].mxu0 %v519
        %v996 = vpop.f32.mrb[0].mxu0
        %v997 = vadd.f32 %v560, %v996
        %v998 = vpop.f32.mrb[0].mxu0
        %v999 = vpop.f32.mrb[0].mxu0
        %v1000 = vadd.f32 %v560, %v999
        %v1001 = vpop.f32.mrb[0].mxu0
        %1002 = vmatprep.mubr.bf16.mxu0 0
        %1003 = vmatmul.mubr.bf16.gmra.mrb[0].mxu0 %v520
        %v1004 = vpop.f32.mrb[0].mxu0
        %v1005 = vadd.f32 %v560, %v1004
        %v1006 = vpop.f32.mrb[0].mxu0
        %v1007 = vpop.f32.mrb[0].mxu0
        %v1008 = vadd.f32 %v560, %v1007
        %v1009 = vpop.f32.mrb[0].mxu0
        %1010 = vmatprep.mubr.bf16.mxu0 0
        %1011 = vmatmul.mubr.bf16.gmra.mrb[0].mxu0 %v521
        %v1012 = vpop.f32.mrb[0].mxu0
        %v1013 = vadd.f32 %v560, %v1012
        %v1014 = vpop.f32.mrb[0].mxu0
        %v1015 = vpop.f32.mrb[0].mxu0
        %v1016 = vadd.f32 %v560, %v1015
        %v1017 = vpop.f32.mrb[0].mxu0
        %1018 = vmatprep.mubr.bf16.mxu0 0
        %1019 = vmatmul.mubr.bf16.gmra.mrb[0].mxu0 %v522
        %v1020 = vpop.f32.mrb[0].mxu0
        %v1021 = vadd.f32 %v560, %v1020
        %v1022 = vpop.f32.mrb[0].mxu0
        %v1023 = vpop.f32.mrb[0].mxu0
        %v1024 = vadd.f32 %v560, %v1023
        %v1025 = vpop.f32.mrb[0].mxu0
        %1026 = vmatprep.mubr.bf16.mxu0 0
        %1027 = vmatmul.mubr.bf16.gmra.mrb[0].mxu0 %v523
        %v1028 = vpop.f32.mrb[0].mxu0
        %v1029 = vadd.f32 %v560, %v1028
        %v1030 = vpop.f32.mrb[0].mxu0
        %v1031 = vpop.f32.mrb[0].mxu0
        %v1032 = vadd.f32 %v560, %v1031
        %v1033 = vpop.f32.mrb[0].mxu0
        %1034 = vmatprep.mubr.bf16.mxu0 0
        %1035 = vmatmul.mubr.bf16.gmra.mrb[0].mxu0 %v524
        %v1036 = vpop.f32.mrb[0].mxu0
        %v1037 = vadd.f32 %v560, %v1036
        %v1038 = vpop.f32.mrb[0].mxu0
        %v1039 = vpop.f32.mrb[0].mxu0
        %v1040 = vadd.f32 %v560, %v1039
        %v1041 = vpop.f32.mrb[0].mxu0
        %1042 = vmatprep.mubr.bf16.mxu0 0
        %1043 = vmatmul.mubr.bf16.gmra.mrb[0].mxu0 %v525
        %v1044 = vpop.f32.mrb[0].mxu0
        %v1045 = vadd.f32 %v560, %v1044
        %v1046 = vpop.f32.mrb[0].mxu0
        %v1047 = vpop.f32.mrb[0].mxu0
        %v1048 = vadd.f32 %v560, %v1047
        %v1049 = vpop.f32.mrb[0].mxu0
        %1050 = vmatprep.mubr.bf16.mxu0 0
        %1051 = vmatmul.mubr.bf16.gmra.mrb[0].mxu0 %v526
        %v1052 = vpop.f32.mrb[0].mxu0
        %v1053 = vadd.f32 %v560, %v1052
        %v1054 = vpop.f32.mrb[0].mxu0
        %v1055 = vpop.f32.mrb[0].mxu0
        %v1056 = vadd.f32 %v560, %v1055
        %v1057 = vpop.f32.mrb[0].mxu0
        %1058 = vmatprep.mubr.bf16.mxu0 0
        %1059 = vmatmul.mubr.bf16.gmra.mrb[0].mxu0 %v527
        %v1060 = vpop.f32.mrb[0].mxu0
        %v1061 = vadd.f32 %v560, %v1060
        %v1062 = vpop.f32.mrb[0].mxu0
        %v1063 = vpop.f32.mrb[0].mxu0
        %v1064 = vadd.f32 %v560, %v1063
        %v1065 = vpop.f32.mrb[0].mxu0
        %1066 = vmatprep.mubr.bf16.mxu0 0
        %1067 = vmatmul.mubr.bf16.gmra.mrb[0].mxu0 %v528
        %v1068 = vpop.f32.mrb[0].mxu0
        %v1069 = vadd.f32 %v560, %v1068
        %v1070 = vpop.f32.mrb[0].mxu0
        %v1071 = vpop.f32.mrb[0].mxu0
        %v1072 = vadd.f32 %v560, %v1071
        %v1073 = vpop.f32.mrb[0].mxu0
        %1074 = vmatprep.mubr.bf16.mxu0 0
        %1075 = vmatmul.mubr.bf16.gmra.mrb[0].mxu0 %v529
        %v1076 = vpop.f32.mrb[0].mxu0
        %v1077 = vadd.f32 %v560, %v1076
        %v1078 = vpop.f32.mrb[0].mxu0
        %v1079 = vpop.f32.mrb[0].mxu0
        %v1080 = vadd.f32 %v560, %v1079
        %v1081 = vpop.f32.mrb[0].mxu0
        %1082 = vmatprep.mubr.bf16.mxu0 0
        %1083 = vmatmul.mubr.bf16.gmra.mrb[0].mxu0 %v530
        %v1084 = vpop.f32.mrb[0].mxu0
        %v1085 = vadd.f32 %v560, %v1084
        %v1086 = vpop.f32.mrb[0].mxu0
        %v1087 = vpop.f32.mrb[0].mxu0
        %v1088 = vadd.f32 %v560, %v1087
        %v1089 = vpop.f32.mrb[0].mxu0
        %1090 = vmatprep.mubr.bf16.mxu0 0
        %1091 = vmatmul.mubr.bf16.gmra.mrb[0].mxu0 %v531
        %v1092 = vpop.f32.mrb[0].mxu0
        %v1093 = vadd.f32 %v560, %v1092
        %v1094 = vpop.f32.mrb[0].mxu0
        %v1095 = vpop.f32.mrb[0].mxu0
        %v1096 = vadd.f32 %v560, %v1095
        %v1097 = vpop.f32.mrb[0].mxu0
        %1098 = vmatprep.mubr.bf16.mxu0 0
        %1099 = vmatmul.mubr.bf16.gmra.mrb[0].mxu0 %v532
        %v1100 = vpop.f32.mrb[0].mxu0
        %v1101 = vadd.f32 %v560, %v1100
        %v1102 = vpop.f32.mrb[0].mxu0
        %v1103 = vpop.f32.mrb[0].mxu0
        %v1104 = vadd.f32 %v560, %v1103
        %v1105 = vpop.f32.mrb[0].mxu0
        %1106 = vmatprep.mubr.bf16.mxu0 0
        %1107 = vmatmul.mubr.bf16.gmra.mrb[0].mxu0 %v533
        %v1108 = vpop.f32.mrb[0].mxu0
        %v1109 = vadd.f32 %v560, %v1108
        %v1110 = vpop.f32.mrb[0].mxu0
        %v1111 = vpop.f32.mrb[0].mxu0
        %v1112 = vadd.f32 %v560, %v1111
        %v1113 = vpop.f32.mrb[0].mxu0
        %1114 = vmatprep.mubr.bf16.mxu0 0
        %1115 = vmatmul.mubr.bf16.gmra.mrb[0].mxu0 %v534
        %v1116 = vpop.f32.mrb[0].mxu0
        %v1117 = vadd.f32 %v560, %v1116
        %v1118 = vpop.f32.mrb[0].mxu0
        %v1119 = vpop.f32.mrb[0].mxu0
        %v1120 = vadd.f32 %v560, %v1119
        %v1121 = vpop.f32.mrb[0].mxu0
        %1122 = vmatprep.mubr.bf16.mxu0 0
        %1123 = vmatmul.mubr.bf16.gmra.mrb[0].mxu0 %v535
        %v1124 = vpop.f32.mrb[0].mxu0
        %v1125 = vadd.f32 %v560, %v1124
        %v1126 = vpop.f32.mrb[0].mxu0
        %v1127 = vpop.f32.mrb[0].mxu0
        %v1128 = vadd.f32 %v560, %v1127
        %v1129 = vpop.f32.mrb[0].mxu0
        %1130 = vmatprep.mubr.bf16.mxu0 0
        %1131 = vmatmul.mubr.bf16.gmra.mrb[0].mxu0 %v536
        %v1132 = vpop.f32.mrb[0].mxu0
        %v1133 = vadd.f32 %v560, %v1132
        %v1134 = vpop.f32.mrb[0].mxu0
        %v1135 = vpop.f32.mrb[0].mxu0
        %v1136 = vadd.f32 %v560, %v1135
        %v1137 = vpop.f32.mrb[0].mxu0
        %1138 = vmatprep.mubr.bf16.mxu0 0
        %1139 = vmatmul.mubr.bf16.gmra.mrb[0].mxu0 %v537
        %v1140 = vpop.f32.mrb[0].mxu0
        %v1141 = vadd.f32 %v560, %v1140
        %v1142 = vpop.f32.mrb[0].mxu0
        %v1143 = vpop.f32.mrb[0].mxu0
        %v1144 = vadd.f32 %v560, %v1143
        %v1145 = vpop.f32.mrb[0].mxu0
        %1146 = vmatprep.mubr.bf16.mxu0 0
        %1147 = vmatmul.mubr.bf16.gmra.mrb[0].mxu0 %v538
        %v1148 = vpop.f32.mrb[0].mxu0
        %v1149 = vadd.f32 %v560, %v1148
        %v1150 = vpop.f32.mrb[0].mxu0
        %v1151 = vpop.f32.mrb[0].mxu0
        %v1152 = vadd.f32 %v560, %v1151
        %v1153 = vpop.f32.mrb[0].mxu0
        %1154 = vdwg.mxu0
        %v1155 = vtanh.pop %v645
        %v1156 = vtanh.pop %v648
        %v1157 = vtanh.pop %v653
        %v1158 = vtanh.pop %v656
        %v1159 = vtanh.pop %v661
        %v1160 = vtanh.pop %v664
        %v1161 = vtanh.pop %v669
        %v1162 = vtanh.pop %v672
        %v1163 = vtanh.pop %v677
        %v1164 = vtanh.pop %v680
        %v1165 = vtanh.pop %v685
        %v1166 = vtanh.pop %v688
        %v1167 = vtanh.pop %v693
        %v1168 = vtanh.pop %v696
        %v1169 = vtanh.pop %v701
        %v1170 = vtanh.pop %v704
        %v1171 = vtanh.pop %v709
        %v1172 = vtanh.pop %v712
        %v1173 = vtanh.pop %v717
        %v1174 = vtanh.pop %v720
        %v1175 = vtanh.pop %v725
        %v1176 = vtanh.pop %v728
        %v1177 = vtanh.pop %v733
        %v1178 = vtanh.pop %v736
        %v1179 = vtanh.pop %v741
        %v1180 = vtanh.pop %v744
        %v1181 = vtanh.pop %v749
        %v1182 = vtanh.pop %v752
        %v1183 = vtanh.pop %v757
        %v1184 = vtanh.pop %v760
        %v1185 = vtanh.pop %v765
        %v1186 = vtanh.pop %v768
        %v1187 = vtanh.pop %v773
        %v1188 = vtanh.pop %v776
        %v1189 = vtanh.pop %v781
        %v1190 = vtanh.pop %v784
        %v1191 = vtanh.pop %v789
        %v1192 = vtanh.pop %v792
        %v1193 = vtanh.pop %v797
        %v1194 = vtanh.pop %v800
        %v1195 = vtanh.pop %v805
        %v1196 = vtanh.pop %v808
        %v1197 = vtanh.pop %v813
        %v1198 = vtanh.pop %v816
        %v1199 = vtanh.pop %v821
        %v1200 = vtanh.pop %v824
        %v1201 = vtanh.pop %v829
        %v1202 = vtanh.pop %v832
        %v1203 = vtanh.pop %v837
        %v1204 = vtanh.pop %v840
        %v1205 = vtanh.pop %v845
        %v1206 = vtanh.pop %v848
        %v1207 = vtanh.pop %v853
        %v1208 = vtanh.pop %v856
        %v1209 = vtanh.pop %v861
        %v1210 = vtanh.pop %v864
        %v1211 = vtanh.pop %v869
        %v1212 = vtanh.pop %v872
        %v1213 = vtanh.pop %v877
        %v1214 = vtanh.pop %v880
        %v1215 = vtanh.pop %v885
        %v1216 = vtanh.pop %v888
        %v1217 = vtanh.pop %v893
        %v1218 = vtanh.pop %v896
        %v1219 = vtanh.pop %v901
        %v1220 = vtanh.pop %v904
        %v1221 = vtanh.pop %v909
        %v1222 = vtanh.pop %v912
        %v1223 = vtanh.pop %v917
        %v1224 = vtanh.pop %v920
        %v1225 = vtanh.pop %v925
        %v1226 = vtanh.pop %v928
        %v1227 = vtanh.pop %v933
        %v1228 = vtanh.pop %v936
        %v1229 = vtanh.pop %v941
        %v1230 = vtanh.pop %v944
        %v1231 = vtanh.pop %v949
        %v1232 = vtanh.pop %v952
        %v1233 = vtanh.pop %v957
        %v1234 = vtanh.pop %v960
        %v1235 = vtanh.pop %v965
        %v1236 = vtanh.pop %v968
        %v1237 = vtanh.pop %v973
        %v1238 = vtanh.pop %v976
        %v1239 = vtanh.pop %v981
        %v1240 = vtanh.pop %v984
        %v1241 = vtanh.pop %v989
        %v1242 = vtanh.pop %v992
        %v1243 = vtanh.pop %v997
        %v1244 = vtanh.pop %v1000
        %v1245 = vtanh.pop %v1005
        %v1246 = vtanh.pop %v1008
        %v1247 = vtanh.pop %v1013
        %v1248 = vtanh.pop %v1016
        %v1249 = vtanh.pop %v1021
        %v1250 = vtanh.pop %v1024
        %v1251 = vtanh.pop %v1029
        %v1252 = vtanh.pop %v1032
        %v1253 = vtanh.pop %v1037
        %v1254 = vtanh.pop %v1040
        %v1255 = vtanh.pop %v1045
        %v1256 = vtanh.pop %v1048
        %v1257 = vtanh.pop %v1053
        %v1258 = vtanh.pop %v1056
        %v1259 = vtanh.pop %v1061
        %v1260 = vtanh.pop %v1064
        %v1261 = vtanh.pop %v1069
        %v1262 = vtanh.pop %v1072
        %v1263 = vtanh.pop %v1077
        %v1264 = vtanh.pop %v1080
        %v1265 = vtanh.pop %v1085
        %v1266 = vtanh.pop %v1088
        %v1267 = vtanh.pop %v1093
        %v1268 = vtanh.pop %v1096
        %v1269 = vtanh.pop %v1101
        %v1270 = vtanh.pop %v1104
        %v1271 = vtanh.pop %v1109
        %v1272 = vtanh.pop %v1112
        %v1273 = vtanh.pop %v1117
        %v1274 = vtanh.pop %v1120
        %v1275 = vtanh.pop %v1125
        %v1276 = vtanh.pop %v1128
        %v1277 = vtanh.pop %v1133
        %v1278 = vtanh.pop %v1136
        %v1279 = vtanh.pop %v1141
        %v1280 = vtanh.pop %v1144
        %v1281 = vtanh.pop %v1149
        %v1282 = vtanh.pop %v1152
        %v1283 = vld [vmem:[%s295] sm:$0x1]
        %v1284 = vld [vmem:[%s295 + $0x1] sm:$0x1]
        %v1285 = vld [vmem:[%s295 + $0x2] sm:$0x1]
        %v1286 = vld [vmem:[%s295 + $0x3] sm:$0x1]
        %v1291 = vlaneseq
        %v1292 = vshrl.u32 %v1291, 7
        %v1293 = vsub.s32 0, %v1292
        %v1294 = vrot.slane %v1283, %v1293
        %v1295 = vlaneseq
        %v1296 = vshrl.u32 %v1295, 7
        %v1297 = vsub.s32 0, %v1296
        %v1298 = vrot.slane %v1284, %v1297
        %v1299 = vlaneseq
        %v1300 = vshrl.u32 %v1299, 7
        %v1301 = vsub.s32 0, %v1300
        %v1302 = vrot.slane %v1285, %v1301
        %v1303 = vlaneseq
        %v1304 = vshrl.u32 %v1303, 7
        %v1305 = vsub.s32 0, %v1304
        %v1306 = vrot.slane %v1286, %v1305
        %v1311 = vmul.f32 %v1155, %v1294
        %v1312 = vmul.f32 %v1156, %v1294
        %v1313 = vmul.f32 %v1157, %v1294
        %v1314 = vmul.f32 %v1158, %v1294
        %v1315 = vmul.f32 %v1159, %v1294
        %v1316 = vmul.f32 %v1160, %v1294
        %v1317 = vmul.f32 %v1161, %v1294
        %v1318 = vmul.f32 %v1162, %v1294
        %v1319 = vmul.f32 %v1163, %v1294
        %v1320 = vmul.f32 %v1164, %v1294
        %v1321 = vmul.f32 %v1165, %v1294
        %v1322 = vmul.f32 %v1166, %v1294
        %v1323 = vmul.f32 %v1167, %v1294
        %v1324 = vmul.f32 %v1168, %v1294
        %v1325 = vmul.f32 %v1169, %v1294
        %v1326 = vmul.f32 %v1170, %v1294
        %v1327 = vmul.f32 %v1171, %v1294
        %v1328 = vmul.f32 %v1172, %v1294
        %v1329 = vmul.f32 %v1173, %v1294
        %v1330 = vmul.f32 %v1174, %v1294
        %v1331 = vmul.f32 %v1175, %v1294
        %v1332 = vmul.f32 %v1176, %v1294
        %v1333 = vmul.f32 %v1177, %v1294
        %v1334 = vmul.f32 %v1178, %v1294
        %v1335 = vmul.f32 %v1179, %v1294
        %v1336 = vmul.f32 %v1180, %v1294
        %v1337 = vmul.f32 %v1181, %v1294
        %v1338 = vmul.f32 %v1182, %v1294
        %v1339 = vmul.f32 %v1183, %v1294
        %v1340 = vmul.f32 %v1184, %v1294
        %v1341 = vmul.f32 %v1185, %v1294
        %v1342 = vmul.f32 %v1186, %v1294
        %v1343 = vmul.f32 %v1187, %v1298
        %v1344 = vmul.f32 %v1188, %v1298
        %v1345 = vmul.f32 %v1189, %v1298
        %v1346 = vmul.f32 %v1190, %v1298
        %v1347 = vmul.f32 %v1191, %v1298
        %v1348 = vmul.f32 %v1192, %v1298
        %v1349 = vmul.f32 %v1193, %v1298
        %v1350 = vmul.f32 %v1194, %v1298
        %v1351 = vmul.f32 %v1195, %v1298
        %v1352 = vmul.f32 %v1196, %v1298
        %v1353 = vmul.f32 %v1197, %v1298
        %v1354 = vmul.f32 %v1198, %v1298
        %v1355 = vmul.f32 %v1199, %v1298
        %v1356 = vmul.f32 %v1200, %v1298
        %v1357 = vmul.f32 %v1201, %v1298
        %v1358 = vmul.f32 %v1202, %v1298
        %v1359 = vmul.f32 %v1203, %v1298
        %v1360 = vmul.f32 %v1204, %v1298
        %v1361 = vmul.f32 %v1205, %v1298
        %v1362 = vmul.f32 %v1206, %v1298
        %v1363 = vmul.f32 %v1207, %v1298
        %v1364 = vmul.f32 %v1208, %v1298
        %v1365 = vmul.f32 %v1209, %v1298
        %v1366 = vmul.f32 %v1210, %v1298
        %v1367 = vmul.f32 %v1211, %v1298
        %v1368 = vmul.f32 %v1212, %v1298
        %v1369 = vmul.f32 %v1213, %v1298
        %v1370 = vmul.f32 %v1214, %v1298
        %v1371 = vmul.f32 %v1215, %v1298
        %v1372 = vmul.f32 %v1216, %v1298
        %v1373 = vmul.f32 %v1217, %v1298
        %v1374 = vmul.f32 %v1218, %v1298
        %v1375 = vmul.f32 %v1219, %v1302
        %v1376 = vmul.f32 %v1220, %v1302
        %v1377 = vmul.f32 %v1221, %v1302
        %v1378 = vmul.f32 %v1222, %v1302
        %v1379 = vmul.f32 %v1223, %v1302
        %v1380 = vmul.f32 %v1224, %v1302
        %v1381 = vmul.f32 %v1225, %v1302
        %v1382 = vmul.f32 %v1226, %v1302
        %v1383 = vmul.f32 %v1227, %v1302
        %v1384 = vmul.f32 %v1228, %v1302
        %v1385 = vmul.f32 %v1229, %v1302
        %v1386 = vmul.f32 %v1230, %v1302
        %v1387 = vmul.f32 %v1231, %v1302
        %v1388 = vmul.f32 %v1232, %v1302
        %v1389 = vmul.f32 %v1233, %v1302
        %v1390 = vmul.f32 %v1234, %v1302
        %v1391 = vmul.f32 %v1235, %v1302
        %v1392 = vmul.f32 %v1236, %v1302
        %v1393 = vmul.f32 %v1237, %v1302
        %v1394 = vmul.f32 %v1238, %v1302
        %v1395 = vmul.f32 %v1239, %v1302
        %v1396 = vmul.f32 %v1240, %v1302
        %v1397 = vmul.f32 %v1241, %v1302
        %v1398 = vmul.f32 %v1242, %v1302
        %v1399 = vmul.f32 %v1243, %v1302
        %v1400 = vmul.f32 %v1244, %v1302
        %v1401 = vmul.f32 %v1245, %v1302
        %v1402 = vmul.f32 %v1246, %v1302
        %v1403 = vmul.f32 %v1247, %v1302
        %v1404 = vmul.f32 %v1248, %v1302
        %v1405 = vmul.f32 %v1249, %v1302
        %v1406 = vmul.f32 %v1250, %v1302
        %v1407 = vmul.f32 %v1251, %v1306
        %v1408 = vmul.f32 %v1252, %v1306
        %v1409 = vmul.f32 %v1253, %v1306
        %v1410 = vmul.f32 %v1254, %v1306
        %v1411 = vmul.f32 %v1255, %v1306
        %v1412 = vmul.f32 %v1256, %v1306
        %v1413 = vmul.f32 %v1257, %v1306
        %v1414 = vmul.f32 %v1258, %v1306
        %v1415 = vmul.f32 %v1259, %v1306
        %v1416 = vmul.f32 %v1260, %v1306
        %v1417 = vmul.f32 %v1261, %v1306
        %v1418 = vmul.f32 %v1262, %v1306
        %v1419 = vmul.f32 %v1263, %v1306
        %v1420 = vmul.f32 %v1264, %v1306
        %v1421 = vmul.f32 %v1265, %v1306
        %v1422 = vmul.f32 %v1266, %v1306
        %v1423 = vmul.f32 %v1267, %v1306
        %v1424 = vmul.f32 %v1268, %v1306
        %v1425 = vmul.f32 %v1269, %v1306
        %v1426 = vmul.f32 %v1270, %v1306
        %v1427 = vmul.f32 %v1271, %v1306
        %v1428 = vmul.f32 %v1272, %v1306
        %v1429 = vmul.f32 %v1273, %v1306
        %v1430 = vmul.f32 %v1274, %v1306
        %v1431 = vmul.f32 %v1275, %v1306
        %v1432 = vmul.f32 %v1276, %v1306
        %v1433 = vmul.f32 %v1277, %v1306
        %v1434 = vmul.f32 %v1278, %v1306
        %v1435 = vmul.f32 %v1279, %v1306
        %v1436 = vmul.f32 %v1280, %v1306
        %v1437 = vmul.f32 %v1281, %v1306
        %v1438 = vmul.f32 %v1282, %v1306
        %1439 = vadd.xlane.f32.xlu0 %v1311
        %v1440 = vpop.xlane.xlu0 %1439
        %1441 = vadd.xlane.f32.xlu0 %v1312
        %v1442 = vpop.xlane.xlu0 %1441
        %1443 = vadd.xlane.f32.xlu0 %v1313
        %v1444 = vpop.xlane.xlu0 %1443
        %1445 = vadd.xlane.f32.xlu0 %v1314
        %v1446 = vpop.xlane.xlu0 %1445
        %1447 = vadd.xlane.f32.xlu0 %v1315
        %v1448 = vpop.xlane.xlu0 %1447
        %1449 = vadd.xlane.f32.xlu0 %v1316
        %v1450 = vpop.xlane.xlu0 %1449
        %1451 = vadd.xlane.f32.xlu0 %v1317
        %v1452 = vpop.xlane.xlu0 %1451
        %1453 = vadd.xlane.f32.xlu0 %v1318
        %v1454 = vpop.xlane.xlu0 %1453
        %1455 = vadd.xlane.f32.xlu0 %v1319
        %v1456 = vpop.xlane.xlu0 %1455
        %1457 = vadd.xlane.f32.xlu0 %v1320
        %v1458 = vpop.xlane.xlu0 %1457
        %1459 = vadd.xlane.f32.xlu0 %v1321
        %v1460 = vpop.xlane.xlu0 %1459
        %1461 = vadd.xlane.f32.xlu0 %v1322
        %v1462 = vpop.xlane.xlu0 %1461
        %1463 = vadd.xlane.f32.xlu0 %v1323
        %v1464 = vpop.xlane.xlu0 %1463
        %1465 = vadd.xlane.f32.xlu0 %v1324
        %v1466 = vpop.xlane.xlu0 %1465
        %1467 = vadd.xlane.f32.xlu0 %v1325
        %v1468 = vpop.xlane.xlu0 %1467
        %1469 = vadd.xlane.f32.xlu0 %v1326
        %v1470 = vpop.xlane.xlu0 %1469
        %1471 = vadd.xlane.f32.xlu0 %v1327
        %v1472 = vpop.xlane.xlu0 %1471
        %1473 = vadd.xlane.f32.xlu0 %v1328
        %v1474 = vpop.xlane.xlu0 %1473
        %1475 = vadd.xlane.f32.xlu0 %v1329
        %v1476 = vpop.xlane.xlu0 %1475
        %1477 = vadd.xlane.f32.xlu0 %v1330
        %v1478 = vpop.xlane.xlu0 %1477
        %1479 = vadd.xlane.f32.xlu0 %v1331
        %v1480 = vpop.xlane.xlu0 %1479
        %1481 = vadd.xlane.f32.xlu0 %v1332
        %v1482 = vpop.xlane.xlu0 %1481
        %1483 = vadd.xlane.f32.xlu0 %v1333
        %v1484 = vpop.xlane.xlu0 %1483
        %1485 = vadd.xlane.f32.xlu0 %v1334
        %v1486 = vpop.xlane.xlu0 %1485
        %1487 = vadd.xlane.f32.xlu0 %v1335
        %v1488 = vpop.xlane.xlu0 %1487
        %1489 = vadd.xlane.f32.xlu0 %v1336
        %v1490 = vpop.xlane.xlu0 %1489
        %1491 = vadd.xlane.f32.xlu0 %v1337
        %v1492 = vpop.xlane.xlu0 %1491
        %1493 = vadd.xlane.f32.xlu0 %v1338
        %v1494 = vpop.xlane.xlu0 %1493
        %1495 = vadd.xlane.f32.xlu0 %v1339
        %v1496 = vpop.xlane.xlu0 %1495
        %1497 = vadd.xlane.f32.xlu0 %v1340
        %v1498 = vpop.xlane.xlu0 %1497
        %1499 = vadd.xlane.f32.xlu0 %v1341
        %v1500 = vpop.xlane.xlu0 %1499
        %1501 = vadd.xlane.f32.xlu0 %v1342
        %v1502 = vpop.xlane.xlu0 %1501
        %1503 = vadd.xlane.f32.xlu0 %v1343
        %v1504 = vpop.xlane.xlu0 %1503
        %1505 = vadd.xlane.f32.xlu0 %v1344
        %v1506 = vpop.xlane.xlu0 %1505
        %1507 = vadd.xlane.f32.xlu0 %v1345
        %v1508 = vpop.xlane.xlu0 %1507
        %1509 = vadd.xlane.f32.xlu0 %v1346
        %v1510 = vpop.xlane.xlu0 %1509
        %1511 = vadd.xlane.f32.xlu0 %v1347
        %v1512 = vpop.xlane.xlu0 %1511
        %1513 = vadd.xlane.f32.xlu0 %v1348
        %v1514 = vpop.xlane.xlu0 %1513
        %1515 = vadd.xlane.f32.xlu0 %v1349
        %v1516 = vpop.xlane.xlu0 %1515
        %1517 = vadd.xlane.f32.xlu0 %v1350
        %v1518 = vpop.xlane.xlu0 %1517
        %1519 = vadd.xlane.f32.xlu0 %v1351
        %v1520 = vpop.xlane.xlu0 %1519
        %1521 = vadd.xlane.f32.xlu0 %v1352
        %v1522 = vpop.xlane.xlu0 %1521
        %1523 = vadd.xlane.f32.xlu0 %v1353
        %v1524 = vpop.xlane.xlu0 %1523
        %1525 = vadd.xlane.f32.xlu0 %v1354
        %v1526 = vpop.xlane.xlu0 %1525
        %1527 = vadd.xlane.f32.xlu0 %v1355
        %v1528 = vpop.xlane.xlu0 %1527
        %1529 = vadd.xlane.f32.xlu0 %v1356
        %v1530 = vpop.xlane.xlu0 %1529
        %1531 = vadd.xlane.f32.xlu0 %v1357
        %v1532 = vpop.xlane.xlu0 %1531
        %1533 = vadd.xlane.f32.xlu0 %v1358
        %v1534 = vpop.xlane.xlu0 %1533
        %1535 = vadd.xlane.f32.xlu0 %v1359
        %v1536 = vpop.xlane.xlu0 %1535
        %1537 = vadd.xlane.f32.xlu0 %v1360
        %v1538 = vpop.xlane.xlu0 %1537
        %1539 = vadd.xlane.f32.xlu0 %v1361
        %v1540 = vpop.xlane.xlu0 %1539
        %1541 = vadd.xlane.f32.xlu0 %v1362
        %v1542 = vpop.xlane.xlu0 %1541
        %1543 = vadd.xlane.f32.xlu0 %v1363
        %v1544 = vpop.xlane.xlu0 %1543
        %1545 = vadd.xlane.f32.xlu0 %v1364
        %v1546 = vpop.xlane.xlu0 %1545
        %1547 = vadd.xlane.f32.xlu0 %v1365
        %v1548 = vpop.xlane.xlu0 %1547
        %1549 = vadd.xlane.f32.xlu0 %v1366
        %v1550 = vpop.xlane.xlu0 %1549
        %1551 = vadd.xlane.f32.xlu0 %v1367
        %v1552 = vpop.xlane.xlu0 %1551
        %1553 = vadd.xlane.f32.xlu0 %v1368
        %v1554 = vpop.xlane.xlu0 %1553
        %1555 = vadd.xlane.f32.xlu0 %v1369
        %v1556 = vpop.xlane.xlu0 %1555
        %1557 = vadd.xlane.f32.xlu0 %v1370
        %v1558 = vpop.xlane.xlu0 %1557
        %1559 = vadd.xlane.f32.xlu0 %v1371
        %v1560 = vpop.xlane.xlu0 %1559
        %1561 = vadd.xlane.f32.xlu0 %v1372
        %v1562 = vpop.xlane.xlu0 %1561
        %1563 = vadd.xlane.f32.xlu0 %v1373
        %v1564 = vpop.xlane.xlu0 %1563
        %1565 = vadd.xlane.f32.xlu0 %v1374
        %v1566 = vpop.xlane.xlu0 %1565
        %1567 = vadd.xlane.f32.xlu0 %v1375
        %v1568 = vpop.xlane.xlu0 %1567
        %1569 = vadd.xlane.f32.xlu0 %v1376
        %v1570 = vpop.xlane.xlu0 %1569
        %1571 = vadd.xlane.f32.xlu0 %v1377
        %v1572 = vpop.xlane.xlu0 %1571
        %1573 = vadd.xlane.f32.xlu0 %v1378
        %v1574 = vpop.xlane.xlu0 %1573
        %1575 = vadd.xlane.f32.xlu0 %v1379
        %v1576 = vpop.xlane.xlu0 %1575
        %1577 = vadd.xlane.f32.xlu0 %v1380
        %v1578 = vpop.xlane.xlu0 %1577
        %1579 = vadd.xlane.f32.xlu0 %v1381
        %v1580 = vpop.xlane.xlu0 %1579
        %1581 = vadd.xlane.f32.xlu0 %v1382
        %v1582 = vpop.xlane.xlu0 %1581
        %1583 = vadd.xlane.f32.xlu0 %v1383
        %v1584 = vpop.xlane.xlu0 %1583
        %1585 = vadd.xlane.f32.xlu0 %v1384
        %v1586 = vpop.xlane.xlu0 %1585
        %1587 = vadd.xlane.f32.xlu0 %v1385
        %v1588 = vpop.xlane.xlu0 %1587
        %1589 = vadd.xlane.f32.xlu0 %v1386
        %v1590 = vpop.xlane.xlu0 %1589
        %1591 = vadd.xlane.f32.xlu0 %v1387
        %v1592 = vpop.xlane.xlu0 %1591
        %1593 = vadd.xlane.f32.xlu0 %v1388
        %v1594 = vpop.xlane.xlu0 %1593
        %1595 = vadd.xlane.f32.xlu0 %v1389
        %v1596 = vpop.xlane.xlu0 %1595
        %1597 = vadd.xlane.f32.xlu0 %v1390
        %v1598 = vpop.xlane.xlu0 %1597
        %1599 = vadd.xlane.f32.xlu0 %v1391
        %v1600 = vpop.xlane.xlu0 %1599
        %1601 = vadd.xlane.f32.xlu0 %v1392
        %v1602 = vpop.xlane.xlu0 %1601
        %1603 = vadd.xlane.f32.xlu0 %v1393
        %v1604 = vpop.xlane.xlu0 %1603
        %1605 = vadd.xlane.f32.xlu0 %v1394
        %v1606 = vpop.xlane.xlu0 %1605
        %1607 = vadd.xlane.f32.xlu0 %v1395
        %v1608 = vpop.xlane.xlu0 %1607
        %1609 = vadd.xlane.f32.xlu0 %v1396
        %v1610 = vpop.xlane.xlu0 %1609
        %1611 = vadd.xlane.f32.xlu0 %v1397
        %v1612 = vpop.xlane.xlu0 %1611
        %1613 = vadd.xlane.f32.xlu0 %v1398
        %v1614 = vpop.xlane.xlu0 %1613
        %1615 = vadd.xlane.f32.xlu0 %v1399
        %v1616 = vpop.xlane.xlu0 %1615
        %1617 = vadd.xlane.f32.xlu0 %v1400
        %v1618 = vpop.xlane.xlu0 %1617
        %1619 = vadd.xlane.f32.xlu0 %v1401
        %v1620 = vpop.xlane.xlu0 %1619
        %1621 = vadd.xlane.f32.xlu0 %v1402
        %v1622 = vpop.xlane.xlu0 %1621
        %1623 = vadd.xlane.f32.xlu0 %v1403
        %v1624 = vpop.xlane.xlu0 %1623
        %1625 = vadd.xlane.f32.xlu0 %v1404
        %v1626 = vpop.xlane.xlu0 %1625
        %1627 = vadd.xlane.f32.xlu0 %v1405
        %v1628 = vpop.xlane.xlu0 %1627
        %1629 = vadd.xlane.f32.xlu0 %v1406
        %v1630 = vpop.xlane.xlu0 %1629
        %1631 = vadd.xlane.f32.xlu0 %v1407
        %v1632 = vpop.xlane.xlu0 %1631
        %1633 = vadd.xlane.f32.xlu0 %v1408
        %v1634 = vpop.xlane.xlu0 %1633
        %1635 = vadd.xlane.f32.xlu0 %v1409
        %v1636 = vpop.xlane.xlu0 %1635
        %1637 = vadd.xlane.f32.xlu0 %v1410
        %v1638 = vpop.xlane.xlu0 %1637
        %1639 = vadd.xlane.f32.xlu0 %v1411
        %v1640 = vpop.xlane.xlu0 %1639
        %1641 = vadd.xlane.f32.xlu0 %v1412
        %v1642 = vpop.xlane.xlu0 %1641
        %1643 = vadd.xlane.f32.xlu0 %v1413
        %v1644 = vpop.xlane.xlu0 %1643
        %1645 = vadd.xlane.f32.xlu0 %v1414
        %v1646 = vpop.xlane.xlu0 %1645
        %1647 = vadd.xlane.f32.xlu0 %v1415
        %v1648 = vpop.xlane.xlu0 %1647
        %1649 = vadd.xlane.f32.xlu0 %v1416
        %v1650 = vpop.xlane.xlu0 %1649
        %1651 = vadd.xlane.f32.xlu0 %v1417
        %v1652 = vpop.xlane.xlu0 %1651
        %1653 = vadd.xlane.f32.xlu0 %v1418
        %v1654 = vpop.xlane.xlu0 %1653
        %1655 = vadd.xlane.f32.xlu0 %v1419
        %v1656 = vpop.xlane.xlu0 %1655
        %1657 = vadd.xlane.f32.xlu0 %v1420
        %v1658 = vpop.xlane.xlu0 %1657
        %1659 = vadd.xlane.f32.xlu0 %v1421
        %v1660 = vpop.xlane.xlu0 %1659
        %1661 = vadd.xlane.f32.xlu0 %v1422
        %v1662 = vpop.xlane.xlu0 %1661
        %1663 = vadd.xlane.f32.xlu0 %v1423
        %v1664 = vpop.xlane.xlu0 %1663
        %1665 = vadd.xlane.f32.xlu0 %v1424
        %v1666 = vpop.xlane.xlu0 %1665
        %1667 = vadd.xlane.f32.xlu0 %v1425
        %v1668 = vpop.xlane.xlu0 %1667
        %1669 = vadd.xlane.f32.xlu0 %v1426
        %v1670 = vpop.xlane.xlu0 %1669
        %1671 = vadd.xlane.f32.xlu0 %v1427
        %v1672 = vpop.xlane.xlu0 %1671
        %1673 = vadd.xlane.f32.xlu0 %v1428
        %v1674 = vpop.xlane.xlu0 %1673
        %1675 = vadd.xlane.f32.xlu0 %v1429
        %v1676 = vpop.xlane.xlu0 %1675
        %1677 = vadd.xlane.f32.xlu0 %v1430
        %v1678 = vpop.xlane.xlu0 %1677
        %1679 = vadd.xlane.f32.xlu0 %v1431
        %v1680 = vpop.xlane.xlu0 %1679
        %1681 = vadd.xlane.f32.xlu0 %v1432
        %v1682 = vpop.xlane.xlu0 %1681
        %1683 = vadd.xlane.f32.xlu0 %v1433
        %v1684 = vpop.xlane.xlu0 %1683
        %1685 = vadd.xlane.f32.xlu0 %v1434
        %v1686 = vpop.xlane.xlu0 %1685
        %1687 = vadd.xlane.f32.xlu0 %v1435
        %v1688 = vpop.xlane.xlu0 %1687
        %1689 = vadd.xlane.f32.xlu0 %v1436
        %v1690 = vpop.xlane.xlu0 %1689
        %1691 = vadd.xlane.f32.xlu0 %v1437
        %v1692 = vpop.xlane.xlu0 %1691
        %1693 = vadd.xlane.f32.xlu0 %v1438
        %v1694 = vpop.xlane.xlu0 %1693
        %v1695 = vmul.f32 %v1440, 0.3
        %v1696 = vmul.f32 %v1442, 0.3
        %v1697 = vmul.f32 %v1444, 0.3
        %v1698 = vmul.f32 %v1446, 0.3
        %v1699 = vmul.f32 %v1448, 0.3
        %v1700 = vmul.f32 %v1450, 0.3
        %v1701 = vmul.f32 %v1452, 0.3
        %v1702 = vmul.f32 %v1454, 0.3
        %v1703 = vmul.f32 %v1456, 0.3
        %v1704 = vmul.f32 %v1458, 0.3
        %v1705 = vmul.f32 %v1460, 0.3
        %v1706 = vmul.f32 %v1462, 0.3
        %v1707 = vmul.f32 %v1464, 0.3
        %v1708 = vmul.f32 %v1466, 0.3
        %v1709 = vmul.f32 %v1468, 0.3
        %v1710 = vmul.f32 %v1470, 0.3
        %v1711 = vmul.f32 %v1472, 0.3
        %v1712 = vmul.f32 %v1474, 0.3
        %v1713 = vmul.f32 %v1476, 0.3
        %v1714 = vmul.f32 %v1478, 0.3
        %v1715 = vmul.f32 %v1480, 0.3
        %v1716 = vmul.f32 %v1482, 0.3
        %v1717 = vmul.f32 %v1484, 0.3
        %v1718 = vmul.f32 %v1486, 0.3
        %v1719 = vmul.f32 %v1488, 0.3
        %v1720 = vmul.f32 %v1490, 0.3
        %v1721 = vmul.f32 %v1492, 0.3
        %v1722 = vmul.f32 %v1494, 0.3
        %v1723 = vmul.f32 %v1496, 0.3
        %v1724 = vmul.f32 %v1498, 0.3
        %v1725 = vmul.f32 %v1500, 0.3
        %v1726 = vmul.f32 %v1502, 0.3
        %v1727 = vmul.f32 %v1504, 0.3
        %v1728 = vmul.f32 %v1506, 0.3
        %v1729 = vmul.f32 %v1508, 0.3
        %v1730 = vmul.f32 %v1510, 0.3
        %v1731 = vmul.f32 %v1512, 0.3
        %v1732 = vmul.f32 %v1514, 0.3
        %v1733 = vmul.f32 %v1516, 0.3
        %v1734 = vmul.f32 %v1518, 0.3
        %v1735 = vmul.f32 %v1520, 0.3
        %v1736 = vmul.f32 %v1522, 0.3
        %v1737 = vmul.f32 %v1524, 0.3
        %v1738 = vmul.f32 %v1526, 0.3
        %v1739 = vmul.f32 %v1528, 0.3
        %v1740 = vmul.f32 %v1530, 0.3
        %v1741 = vmul.f32 %v1532, 0.3
        %v1742 = vmul.f32 %v1534, 0.3
        %v1743 = vmul.f32 %v1536, 0.3
        %v1744 = vmul.f32 %v1538, 0.3
        %v1745 = vmul.f32 %v1540, 0.3
        %v1746 = vmul.f32 %v1542, 0.3
        %v1747 = vmul.f32 %v1544, 0.3
        %v1748 = vmul.f32 %v1546, 0.3
        %v1749 = vmul.f32 %v1548, 0.3
        %v1750 = vmul.f32 %v1550, 0.3
        %v1751 = vmul.f32 %v1552, 0.3
        %v1752 = vmul.f32 %v1554, 0.3
        %v1753 = vmul.f32 %v1556, 0.3
        %v1754 = vmul.f32 %v1558, 0.3
        %v1755 = vmul.f32 %v1560, 0.3
        %v1756 = vmul.f32 %v1562, 0.3
        %v1757 = vmul.f32 %v1564, 0.3
        %v1758 = vmul.f32 %v1566, 0.3
        %v1759 = vmul.f32 %v1568, 0.3
        %v1760 = vmul.f32 %v1570, 0.3
        %v1761 = vmul.f32 %v1572, 0.3
        %v1762 = vmul.f32 %v1574, 0.3
        %v1763 = vmul.f32 %v1576, 0.3
        %v1764 = vmul.f32 %v1578, 0.3
        %v1765 = vmul.f32 %v1580, 0.3
        %v1766 = vmul.f32 %v1582, 0.3
        %v1767 = vmul.f32 %v1584, 0.3
        %v1768 = vmul.f32 %v1586, 0.3
        %v1769 = vmul.f32 %v1588, 0.3
        %v1770 = vmul.f32 %v1590, 0.3
        %v1771 = vmul.f32 %v1592, 0.3
        %v1772 = vmul.f32 %v1594, 0.3
        %v1773 = vmul.f32 %v1596, 0.3
        %v1774 = vmul.f32 %v1598, 0.3
        %v1775 = vmul.f32 %v1600, 0.3
        %v1776 = vmul.f32 %v1602, 0.3
        %v1777 = vmul.f32 %v1604, 0.3
        %v1778 = vmul.f32 %v1606, 0.3
        %v1779 = vmul.f32 %v1608, 0.3
        %v1780 = vmul.f32 %v1610, 0.3
        %v1781 = vmul.f32 %v1612, 0.3
        %v1782 = vmul.f32 %v1614, 0.3
        %v1783 = vmul.f32 %v1616, 0.3
        %v1784 = vmul.f32 %v1618, 0.3
        %v1785 = vmul.f32 %v1620, 0.3
        %v1786 = vmul.f32 %v1622, 0.3
        %v1787 = vmul.f32 %v1624, 0.3
        %v1788 = vmul.f32 %v1626, 0.3
        %v1789 = vmul.f32 %v1628, 0.3
        %v1790 = vmul.f32 %v1630, 0.3
        %v1791 = vmul.f32 %v1632, 0.3
        %v1792 = vmul.f32 %v1634, 0.3
        %v1793 = vmul.f32 %v1636, 0.3
        %v1794 = vmul.f32 %v1638, 0.3
        %v1795 = vmul.f32 %v1640, 0.3
        %v1796 = vmul.f32 %v1642, 0.3
        %v1797 = vmul.f32 %v1644, 0.3
        %v1798 = vmul.f32 %v1646, 0.3
        %v1799 = vmul.f32 %v1648, 0.3
        %v1800 = vmul.f32 %v1650, 0.3
        %v1801 = vmul.f32 %v1652, 0.3
        %v1802 = vmul.f32 %v1654, 0.3
        %v1803 = vmul.f32 %v1656, 0.3
        %v1804 = vmul.f32 %v1658, 0.3
        %v1805 = vmul.f32 %v1660, 0.3
        %v1806 = vmul.f32 %v1662, 0.3
        %v1807 = vmul.f32 %v1664, 0.3
        %v1808 = vmul.f32 %v1666, 0.3
        %v1809 = vmul.f32 %v1668, 0.3
        %v1810 = vmul.f32 %v1670, 0.3
        %v1811 = vmul.f32 %v1672, 0.3
        %v1812 = vmul.f32 %v1674, 0.3
        %v1813 = vmul.f32 %v1676, 0.3
        %v1814 = vmul.f32 %v1678, 0.3
        %v1815 = vmul.f32 %v1680, 0.3
        %v1816 = vmul.f32 %v1682, 0.3
        %v1817 = vmul.f32 %v1684, 0.3
        %v1818 = vmul.f32 %v1686, 0.3
        %v1819 = vmul.f32 %v1688, 0.3
        %v1820 = vmul.f32 %v1690, 0.3
        %v1821 = vmul.f32 %v1692, 0.3
        %v1822 = vmul.f32 %v1694, 0.3
        %v1823 = vlaneseq
        %v1824 = vshrl.u32 %v1823, 7
        %v1825 = vadd.s32 %v1824, 8
        %v1826 = vadd.s32 %v1824, 16
        %v1827 = vadd.s32 %v1824, 24
        %v1828 = vadd.s32 %v1824, 32
        %v1829 = vadd.s32 %v1824, 40
        %v1830 = vadd.s32 %v1824, 48
        %v1831 = vadd.s32 %v1824, 56
        %v1832 = vadd.s32 %v1824, 64
        %v1833 = vadd.s32 %v1824, 72
        %v1834 = vadd.s32 %v1824, 80
        %v1835 = vadd.s32 %v1824, 88
        %v1836 = vadd.s32 %v1824, 96
        %v1837 = vadd.s32 %v1824, 104
        %v1838 = vadd.s32 %v1824, 112
        %v1839 = vadd.s32 %v1824, 120
        %v1840 = vadd.s32 %v1824, 128
        %v1841 = vadd.s32 %v1824, 136
        %v1842 = vadd.s32 %v1824, 144
        %v1843 = vadd.s32 %v1824, 152
        %v1844 = vadd.s32 %v1824, 160
        %v1845 = vadd.s32 %v1824, 168
        %v1846 = vadd.s32 %v1824, 176
        %v1847 = vadd.s32 %v1824, 184
        %v1848 = vadd.s32 %v1824, 192
        %v1849 = vadd.s32 %v1824, 200
        %v1850 = vadd.s32 %v1824, 208
        %v1851 = vadd.s32 %v1824, 216
        %v1852 = vadd.s32 %v1824, 224
        %v1853 = vadd.s32 %v1824, 232
        %v1854 = vadd.s32 %v1824, 240
        %v1855 = vadd.s32 %v1824, 248
        %s1856 = smul.u32 %s30, 256
        %v1857 = vstv %s1856
        %v1858 = vadd.s32 %v1824, %v1857
        %v1859 = vadd.s32 %v1825, %v1857
        %v1860 = vadd.s32 %v1826, %v1857
        %v1861 = vadd.s32 %v1827, %v1857
        %v1862 = vadd.s32 %v1828, %v1857
        %v1863 = vadd.s32 %v1829, %v1857
        %v1864 = vadd.s32 %v1830, %v1857
        %v1865 = vadd.s32 %v1831, %v1857
        %v1866 = vadd.s32 %v1832, %v1857
        %v1867 = vadd.s32 %v1833, %v1857
        %v1868 = vadd.s32 %v1834, %v1857
        %v1869 = vadd.s32 %v1835, %v1857
        %v1870 = vadd.s32 %v1836, %v1857
        %v1871 = vadd.s32 %v1837, %v1857
        %v1872 = vadd.s32 %v1838, %v1857
        %v1873 = vadd.s32 %v1839, %v1857
        %v1874 = vadd.s32 %v1840, %v1857
        %v1875 = vadd.s32 %v1841, %v1857
        %v1876 = vadd.s32 %v1842, %v1857
        %v1877 = vadd.s32 %v1843, %v1857
        %v1878 = vadd.s32 %v1844, %v1857
        %v1879 = vadd.s32 %v1845, %v1857
        %v1880 = vadd.s32 %v1846, %v1857
        %v1881 = vadd.s32 %v1847, %v1857
        %v1882 = vadd.s32 %v1848, %v1857
        %v1883 = vadd.s32 %v1849, %v1857
        %v1884 = vadd.s32 %v1850, %v1857
        %v1885 = vadd.s32 %v1851, %v1857
        %v1886 = vadd.s32 %v1852, %v1857
        %v1887 = vadd.s32 %v1853, %v1857
        %v1888 = vadd.s32 %v1854, %v1857
        %v1889 = vadd.s32 %v1855, %v1857
        %vm1890 = vcmp.lt.s32.totalorder %v1858, 600
        %vm1891 = vcmp.lt.s32.totalorder %v1859, 600
        %vm1892 = vcmp.lt.s32.totalorder %v1860, 600
        %vm1893 = vcmp.lt.s32.totalorder %v1861, 600
        %vm1894 = vcmp.lt.s32.totalorder %v1862, 600
        %vm1895 = vcmp.lt.s32.totalorder %v1863, 600
        %vm1896 = vcmp.lt.s32.totalorder %v1864, 600
        %vm1897 = vcmp.lt.s32.totalorder %v1865, 600
        %vm1898 = vcmp.lt.s32.totalorder %v1866, 600
        %vm1899 = vcmp.lt.s32.totalorder %v1867, 600
        %vm1900 = vcmp.lt.s32.totalorder %v1868, 600
        %vm1901 = vcmp.lt.s32.totalorder %v1869, 600
        %vm1902 = vcmp.lt.s32.totalorder %v1870, 600
        %vm1903 = vcmp.lt.s32.totalorder %v1871, 600
        %vm1904 = vcmp.lt.s32.totalorder %v1872, 600
        %vm1905 = vcmp.lt.s32.totalorder %v1873, 600
        %vm1906 = vcmp.lt.s32.totalorder %v1874, 600
        %vm1907 = vcmp.lt.s32.totalorder %v1875, 600
        %vm1908 = vcmp.lt.s32.totalorder %v1876, 600
        %vm1909 = vcmp.lt.s32.totalorder %v1877, 600
        %vm1910 = vcmp.lt.s32.totalorder %v1878, 600
        %vm1911 = vcmp.lt.s32.totalorder %v1879, 600
        %vm1912 = vcmp.lt.s32.totalorder %v1880, 600
        %vm1913 = vcmp.lt.s32.totalorder %v1881, 600
        %vm1914 = vcmp.lt.s32.totalorder %v1882, 600
        %vm1915 = vcmp.lt.s32.totalorder %v1883, 600
        %vm1916 = vcmp.lt.s32.totalorder %v1884, 600
        %vm1917 = vcmp.lt.s32.totalorder %v1885, 600
        %vm1918 = vcmp.lt.s32.totalorder %v1886, 600
        %vm1919 = vcmp.lt.s32.totalorder %v1887, 600
        %vm1920 = vcmp.lt.s32.totalorder %v1888, 600
        %vm1921 = vcmp.lt.s32.totalorder %v1889, 600
        %v1922 = vsel %vm1890, %v1695, -inf
        %v1923 = vsel %vm1891, %v1696, -inf
        %v1924 = vsel %vm1892, %v1697, -inf
        %v1925 = vsel %vm1893, %v1698, -inf
        %v1926 = vsel %vm1894, %v1699, -inf
        %v1927 = vsel %vm1895, %v1700, -inf
        %v1928 = vsel %vm1896, %v1701, -inf
        %v1929 = vsel %vm1897, %v1702, -inf
        %v1930 = vsel %vm1898, %v1703, -inf
        %v1931 = vsel %vm1899, %v1704, -inf
        %v1932 = vsel %vm1900, %v1705, -inf
        %v1933 = vsel %vm1901, %v1706, -inf
        %v1934 = vsel %vm1902, %v1707, -inf
        %v1935 = vsel %vm1903, %v1708, -inf
        %v1936 = vsel %vm1904, %v1709, -inf
        %v1937 = vsel %vm1905, %v1710, -inf
        %v1938 = vsel %vm1906, %v1711, -inf
        %v1939 = vsel %vm1907, %v1712, -inf
        %v1940 = vsel %vm1908, %v1713, -inf
        %v1941 = vsel %vm1909, %v1714, -inf
        %v1942 = vsel %vm1910, %v1715, -inf
        %v1943 = vsel %vm1911, %v1716, -inf
        %v1944 = vsel %vm1912, %v1717, -inf
        %v1945 = vsel %vm1913, %v1718, -inf
        %v1946 = vsel %vm1914, %v1719, -inf
        %v1947 = vsel %vm1915, %v1720, -inf
        %v1948 = vsel %vm1916, %v1721, -inf
        %v1949 = vsel %vm1917, %v1722, -inf
        %v1950 = vsel %vm1918, %v1723, -inf
        %v1951 = vsel %vm1919, %v1724, -inf
        %v1952 = vsel %vm1920, %v1725, -inf
        %v1953 = vsel %vm1921, %v1726, -inf
        %v1954 = vsel %vm1890, %v1727, -inf
        %v1955 = vsel %vm1891, %v1728, -inf
        %v1956 = vsel %vm1892, %v1729, -inf
        %v1957 = vsel %vm1893, %v1730, -inf
        %v1958 = vsel %vm1894, %v1731, -inf
        %v1959 = vsel %vm1895, %v1732, -inf
        %v1960 = vsel %vm1896, %v1733, -inf
        %v1961 = vsel %vm1897, %v1734, -inf
        %v1962 = vsel %vm1898, %v1735, -inf
        %v1963 = vsel %vm1899, %v1736, -inf
        %v1964 = vsel %vm1900, %v1737, -inf
        %v1965 = vsel %vm1901, %v1738, -inf
        %v1966 = vsel %vm1902, %v1739, -inf
        %v1967 = vsel %vm1903, %v1740, -inf
        %v1968 = vsel %vm1904, %v1741, -inf
        %v1969 = vsel %vm1905, %v1742, -inf
        %v1970 = vsel %vm1906, %v1743, -inf
        %v1971 = vsel %vm1907, %v1744, -inf
        %v1972 = vsel %vm1908, %v1745, -inf
        %v1973 = vsel %vm1909, %v1746, -inf
        %v1974 = vsel %vm1910, %v1747, -inf
        %v1975 = vsel %vm1911, %v1748, -inf
        %v1976 = vsel %vm1912, %v1749, -inf
        %v1977 = vsel %vm1913, %v1750, -inf
        %v1978 = vsel %vm1914, %v1751, -inf
        %v1979 = vsel %vm1915, %v1752, -inf
        %v1980 = vsel %vm1916, %v1753, -inf
        %v1981 = vsel %vm1917, %v1754, -inf
        %v1982 = vsel %vm1918, %v1755, -inf
        %v1983 = vsel %vm1919, %v1756, -inf
        %v1984 = vsel %vm1920, %v1757, -inf
        %v1985 = vsel %vm1921, %v1758, -inf
        %v1986 = vsel %vm1890, %v1759, -inf
        %v1987 = vsel %vm1891, %v1760, -inf
        %v1988 = vsel %vm1892, %v1761, -inf
        %v1989 = vsel %vm1893, %v1762, -inf
        %v1990 = vsel %vm1894, %v1763, -inf
        %v1991 = vsel %vm1895, %v1764, -inf
        %v1992 = vsel %vm1896, %v1765, -inf
        %v1993 = vsel %vm1897, %v1766, -inf
        %v1994 = vsel %vm1898, %v1767, -inf
        %v1995 = vsel %vm1899, %v1768, -inf
        %v1996 = vsel %vm1900, %v1769, -inf
        %v1997 = vsel %vm1901, %v1770, -inf
        %v1998 = vsel %vm1902, %v1771, -inf
        %v1999 = vsel %vm1903, %v1772, -inf
        %v2000 = vsel %vm1904, %v1773, -inf
        %v2001 = vsel %vm1905, %v1774, -inf
        %v2002 = vsel %vm1906, %v1775, -inf
        %v2003 = vsel %vm1907, %v1776, -inf
        %v2004 = vsel %vm1908, %v1777, -inf
        %v2005 = vsel %vm1909, %v1778, -inf
        %v2006 = vsel %vm1910, %v1779, -inf
        %v2007 = vsel %vm1911, %v1780, -inf
        %v2008 = vsel %vm1912, %v1781, -inf
        %v2009 = vsel %vm1913, %v1782, -inf
        %v2010 = vsel %vm1914, %v1783, -inf
        %v2011 = vsel %vm1915, %v1784, -inf
        %v2012 = vsel %vm1916, %v1785, -inf
        %v2013 = vsel %vm1917, %v1786, -inf
        %v2014 = vsel %vm1918, %v1787, -inf
        %v2015 = vsel %vm1919, %v1788, -inf
        %v2016 = vsel %vm1920, %v1789, -inf
        %v2017 = vsel %vm1921, %v1790, -inf
        %v2018 = vsel %vm1890, %v1791, -inf
        %v2019 = vsel %vm1891, %v1792, -inf
        %v2020 = vsel %vm1892, %v1793, -inf
        %v2021 = vsel %vm1893, %v1794, -inf
        %v2022 = vsel %vm1894, %v1795, -inf
        %v2023 = vsel %vm1895, %v1796, -inf
        %v2024 = vsel %vm1896, %v1797, -inf
        %v2025 = vsel %vm1897, %v1798, -inf
        %v2026 = vsel %vm1898, %v1799, -inf
        %v2027 = vsel %vm1899, %v1800, -inf
        %v2028 = vsel %vm1900, %v1801, -inf
        %v2029 = vsel %vm1901, %v1802, -inf
        %v2030 = vsel %vm1902, %v1803, -inf
        %v2031 = vsel %vm1903, %v1804, -inf
        %v2032 = vsel %vm1904, %v1805, -inf
        %v2033 = vsel %vm1905, %v1806, -inf
        %v2034 = vsel %vm1906, %v1807, -inf
        %v2035 = vsel %vm1907, %v1808, -inf
        %v2036 = vsel %vm1908, %v1809, -inf
        %v2037 = vsel %vm1909, %v1810, -inf
        %v2038 = vsel %vm1910, %v1811, -inf
        %v2039 = vsel %vm1911, %v1812, -inf
        %v2040 = vsel %vm1912, %v1813, -inf
        %v2041 = vsel %vm1913, %v1814, -inf
        %v2042 = vsel %vm1914, %v1815, -inf
        %v2043 = vsel %vm1915, %v1816, -inf
        %v2044 = vsel %vm1916, %v1817, -inf
        %v2045 = vsel %vm1917, %v1818, -inf
        %v2046 = vsel %vm1918, %v1819, -inf
        %v2047 = vsel %vm1919, %v1820, -inf
        %v2048 = vsel %vm1920, %v1821, -inf
        %v2049 = vsel %vm1921, %v1822, -inf
        %v2050 = vld [vmem:[#allocation2] sm:$0x1]
        %v2051 = vld [vmem:[#allocation2 + $0x1] sm:$0x1]
        %v2052 = vld [vmem:[#allocation2 + $0x2] sm:$0x1]
        %v2053 = vld [vmem:[#allocation2 + $0x3] sm:$0x1]
        %v2054 = vmax.f32 %v1922, %v1923
        %v2055 = vmax.f32 %v2054, %v1924
        %v2056 = vmax.f32 %v2055, %v1925
        %v2057 = vmax.f32 %v2056, %v1926
        %v2058 = vmax.f32 %v2057, %v1927
        %v2059 = vmax.f32 %v2058, %v1928
        %v2060 = vmax.f32 %v2059, %v1929
        %v2061 = vmax.f32 %v2060, %v1930
        %v2062 = vmax.f32 %v2061, %v1931
        %v2063 = vmax.f32 %v2062, %v1932
        %v2064 = vmax.f32 %v2063, %v1933
        %v2065 = vmax.f32 %v2064, %v1934
        %v2066 = vmax.f32 %v2065, %v1935
        %v2067 = vmax.f32 %v2066, %v1936
        %v2068 = vmax.f32 %v2067, %v1937
        %v2069 = vmax.f32 %v2068, %v1938
        %v2070 = vmax.f32 %v2069, %v1939
        %v2071 = vmax.f32 %v2070, %v1940
        %v2072 = vmax.f32 %v2071, %v1941
        %v2073 = vmax.f32 %v2072, %v1942
        %v2074 = vmax.f32 %v2073, %v1943
        %v2075 = vmax.f32 %v2074, %v1944
        %v2076 = vmax.f32 %v2075, %v1945
        %v2077 = vmax.f32 %v2076, %v1946
        %v2078 = vmax.f32 %v2077, %v1947
        %v2079 = vmax.f32 %v2078, %v1948
        %v2080 = vmax.f32 %v2079, %v1949
        %v2081 = vmax.f32 %v2080, %v1950
        %v2082 = vmax.f32 %v2081, %v1951
        %v2083 = vmax.f32 %v2082, %v1952
        %v2084 = vmax.f32 %v2083, %v1953
        %v2085 = vrot.slane %v2084, 4
        %v2086 = vmax.f32 %v2084, %v2085
        %v2087 = vrot.slane %v2086, 2
        %v2088 = vmax.f32 %v2086, %v2087
        %v2089 = vrot.slane %v2088, 1
        %v2090 = vmax.f32 %v2088, %v2089
        %v2091 = vmax.f32 %v1954, %v1955
        %v2092 = vmax.f32 %v2091, %v1956
        %v2093 = vmax.f32 %v2092, %v1957
        %v2094 = vmax.f32 %v2093, %v1958
        %v2095 = vmax.f32 %v2094, %v1959
        %v2096 = vmax.f32 %v2095, %v1960
        %v2097 = vmax.f32 %v2096, %v1961
        %v2098 = vmax.f32 %v2097, %v1962
        %v2099 = vmax.f32 %v2098, %v1963
        %v2100 = vmax.f32 %v2099, %v1964
        %v2101 = vmax.f32 %v2100, %v1965
        %v2102 = vmax.f32 %v2101, %v1966
        %v2103 = vmax.f32 %v2102, %v1967
        %v2104 = vmax.f32 %v2103, %v1968
        %v2105 = vmax.f32 %v2104, %v1969
        %v2106 = vmax.f32 %v2105, %v1970
        %v2107 = vmax.f32 %v2106, %v1971
        %v2108 = vmax.f32 %v2107, %v1972
        %v2109 = vmax.f32 %v2108, %v1973
        %v2110 = vmax.f32 %v2109, %v1974
        %v2111 = vmax.f32 %v2110, %v1975
        %v2112 = vmax.f32 %v2111, %v1976
        %v2113 = vmax.f32 %v2112, %v1977
        %v2114 = vmax.f32 %v2113, %v1978
        %v2115 = vmax.f32 %v2114, %v1979
        %v2116 = vmax.f32 %v2115, %v1980
        %v2117 = vmax.f32 %v2116, %v1981
        %v2118 = vmax.f32 %v2117, %v1982
        %v2119 = vmax.f32 %v2118, %v1983
        %v2120 = vmax.f32 %v2119, %v1984
        %v2121 = vmax.f32 %v2120, %v1985
        %v2122 = vrot.slane %v2121, 4
        %v2123 = vmax.f32 %v2121, %v2122
        %v2124 = vrot.slane %v2123, 2
        %v2125 = vmax.f32 %v2123, %v2124
        %v2126 = vrot.slane %v2125, 1
        %v2127 = vmax.f32 %v2125, %v2126
        %v2128 = vmax.f32 %v1986, %v1987
        %v2129 = vmax.f32 %v2128, %v1988
        %v2130 = vmax.f32 %v2129, %v1989
        %v2131 = vmax.f32 %v2130, %v1990
        %v2132 = vmax.f32 %v2131, %v1991
        %v2133 = vmax.f32 %v2132, %v1992
        %v2134 = vmax.f32 %v2133, %v1993
        %v2135 = vmax.f32 %v2134, %v1994
        %v2136 = vmax.f32 %v2135, %v1995
        %v2137 = vmax.f32 %v2136, %v1996
        %v2138 = vmax.f32 %v2137, %v1997
        %v2139 = vmax.f32 %v2138, %v1998
        %v2140 = vmax.f32 %v2139, %v1999
        %v2141 = vmax.f32 %v2140, %v2000
        %v2142 = vmax.f32 %v2141, %v2001
        %v2143 = vmax.f32 %v2142, %v2002
        %v2144 = vmax.f32 %v2143, %v2003
        %v2145 = vmax.f32 %v2144, %v2004
        %v2146 = vmax.f32 %v2145, %v2005
        %v2147 = vmax.f32 %v2146, %v2006
        %v2148 = vmax.f32 %v2147, %v2007
        %v2149 = vmax.f32 %v2148, %v2008
        %v2150 = vmax.f32 %v2149, %v2009
        %v2151 = vmax.f32 %v2150, %v2010
        %v2152 = vmax.f32 %v2151, %v2011
        %v2153 = vmax.f32 %v2152, %v2012
        %v2154 = vmax.f32 %v2153, %v2013
        %v2155 = vmax.f32 %v2154, %v2014
        %v2156 = vmax.f32 %v2155, %v2015
        %v2157 = vmax.f32 %v2156, %v2016
        %v2158 = vmax.f32 %v2157, %v2017
        %v2159 = vrot.slane %v2158, 4
        %v2160 = vmax.f32 %v2158, %v2159
        %v2161 = vrot.slane %v2160, 2
        %v2162 = vmax.f32 %v2160, %v2161
        %v2163 = vrot.slane %v2162, 1
        %v2164 = vmax.f32 %v2162, %v2163
        %v2165 = vmax.f32 %v2018, %v2019
        %v2166 = vmax.f32 %v2165, %v2020
        %v2167 = vmax.f32 %v2166, %v2021
        %v2168 = vmax.f32 %v2167, %v2022
        %v2169 = vmax.f32 %v2168, %v2023
        %v2170 = vmax.f32 %v2169, %v2024
        %v2171 = vmax.f32 %v2170, %v2025
        %v2172 = vmax.f32 %v2171, %v2026
        %v2173 = vmax.f32 %v2172, %v2027
        %v2174 = vmax.f32 %v2173, %v2028
        %v2175 = vmax.f32 %v2174, %v2029
        %v2176 = vmax.f32 %v2175, %v2030
        %v2177 = vmax.f32 %v2176, %v2031
        %v2178 = vmax.f32 %v2177, %v2032
        %v2179 = vmax.f32 %v2178, %v2033
        %v2180 = vmax.f32 %v2179, %v2034
        %v2181 = vmax.f32 %v2180, %v2035
        %v2182 = vmax.f32 %v2181, %v2036
        %v2183 = vmax.f32 %v2182, %v2037
        %v2184 = vmax.f32 %v2183, %v2038
        %v2185 = vmax.f32 %v2184, %v2039
        %v2186 = vmax.f32 %v2185, %v2040
        %v2187 = vmax.f32 %v2186, %v2041
        %v2188 = vmax.f32 %v2187, %v2042
        %v2189 = vmax.f32 %v2188, %v2043
        %v2190 = vmax.f32 %v2189, %v2044
        %v2191 = vmax.f32 %v2190, %v2045
        %v2192 = vmax.f32 %v2191, %v2046
        %v2193 = vmax.f32 %v2192, %v2047
        %v2194 = vmax.f32 %v2193, %v2048
        %v2195 = vmax.f32 %v2194, %v2049
        %v2196 = vrot.slane %v2195, 4
        %v2197 = vmax.f32 %v2195, %v2196
        %v2198 = vrot.slane %v2197, 2
        %v2199 = vmax.f32 %v2197, %v2198
        %v2200 = vrot.slane %v2199, 1
        %v2201 = vmax.f32 %v2199, %v2200
        %v2202 = vmax.f32 %v2050, %v2090
        %v2203 = vmax.f32 %v2051, %v2127
        %v2204 = vmax.f32 %v2052, %v2164
        %v2205 = vmax.f32 %v2053, %v2201
        %v2206 = vsub.f32 %v2050, %v2202
        %v2207 = vsub.f32 %v2051, %v2203
        %v2208 = vsub.f32 %v2052, %v2204
        %v2209 = vsub.f32 %v2053, %v2205
        %v2210 = vmul.f32 %v2206, 1.442695
        %v2211 = vpow.pop %v2210
        %v2212 = vmul.f32 %v2207, 1.442695
        %v2213 = vpow.pop %v2212
        %v2214 = vmul.f32 %v2208, 1.442695
        %v2215 = vpow.pop %v2214
        %v2216 = vmul.f32 %v2209, 1.442695
        %v2217 = vpow.pop %v2216
        %v2222 = vlaneseq
        %v2223 = vshrl.u32 %v2222, 7
        %v2224 = vsub.s32 0, %v2223
        %v2225 = vrot.slane %v2202, %v2224
        %v2226 = vlaneseq
        %v2227 = vshrl.u32 %v2226, 7
        %v2228 = vsub.s32 0, %v2227
        %v2229 = vrot.slane %v2203, %v2228
        %v2230 = vlaneseq
        %v2231 = vshrl.u32 %v2230, 7
        %v2232 = vsub.s32 0, %v2231
        %v2233 = vrot.slane %v2204, %v2232
        %v2234 = vlaneseq
        %v2235 = vshrl.u32 %v2234, 7
        %v2236 = vsub.s32 0, %v2235
        %v2237 = vrot.slane %v2205, %v2236
        %v2242 = vsub.f32 %v1922, %v2225
        %v2243 = vsub.f32 %v1923, %v2225
        %v2244 = vsub.f32 %v1924, %v2225
        %v2245 = vsub.f32 %v1925, %v2225
        %v2246 = vsub.f32 %v1926, %v2225
        %v2247 = vsub.f32 %v1927, %v2225
        %v2248 = vsub.f32 %v1928, %v2225
        %v2249 = vsub.f32 %v1929, %v2225
        %v2250 = vsub.f32 %v1930, %v2225
        %v2251 = vsub.f32 %v1931, %v2225
        %v2252 = vsub.f32 %v1932, %v2225
        %v2253 = vsub.f32 %v1933, %v2225
        %v2254 = vsub.f32 %v1934, %v2225
        %v2255 = vsub.f32 %v1935, %v2225
        %v2256 = vsub.f32 %v1936, %v2225
        %v2257 = vsub.f32 %v1937, %v2225
        %v2258 = vsub.f32 %v1938, %v2225
        %v2259 = vsub.f32 %v1939, %v2225
        %v2260 = vsub.f32 %v1940, %v2225
        %v2261 = vsub.f32 %v1941, %v2225
        %v2262 = vsub.f32 %v1942, %v2225
        %v2263 = vsub.f32 %v1943, %v2225
        %v2264 = vsub.f32 %v1944, %v2225
        %v2265 = vsub.f32 %v1945, %v2225
        %v2266 = vsub.f32 %v1946, %v2225
        %v2267 = vsub.f32 %v1947, %v2225
        %v2268 = vsub.f32 %v1948, %v2225
        %v2269 = vsub.f32 %v1949, %v2225
        %v2270 = vsub.f32 %v1950, %v2225
        %v2271 = vsub.f32 %v1951, %v2225
        %v2272 = vsub.f32 %v1952, %v2225
        %v2273 = vsub.f32 %v1953, %v2225
        %v2274 = vsub.f32 %v1954, %v2229
        %v2275 = vsub.f32 %v1955, %v2229
        %v2276 = vsub.f32 %v1956, %v2229
        %v2277 = vsub.f32 %v1957, %v2229
        %v2278 = vsub.f32 %v1958, %v2229
        %v2279 = vsub.f32 %v1959, %v2229
        %v2280 = vsub.f32 %v1960, %v2229
        %v2281 = vsub.f32 %v1961, %v2229
        %v2282 = vsub.f32 %v1962, %v2229
        %v2283 = vsub.f32 %v1963, %v2229
        %v2284 = vsub.f32 %v1964, %v2229
        %v2285 = vsub.f32 %v1965, %v2229
        %v2286 = vsub.f32 %v1966, %v2229
        %v2287 = vsub.f32 %v1967, %v2229
        %v2288 = vsub.f32 %v1968, %v2229
        %v2289 = vsub.f32 %v1969, %v2229
        %v2290 = vsub.f32 %v1970, %v2229
        %v2291 = vsub.f32 %v1971, %v2229
        %v2292 = vsub.f32 %v1972, %v2229
        %v2293 = vsub.f32 %v1973, %v2229
        %v2294 = vsub.f32 %v1974, %v2229
        %v2295 = vsub.f32 %v1975, %v2229
        %v2296 = vsub.f32 %v1976, %v2229
        %v2297 = vsub.f32 %v1977, %v2229
        %v2298 = vsub.f32 %v1978, %v2229
        %v2299 = vsub.f32 %v1979, %v2229
        %v2300 = vsub.f32 %v1980, %v2229
        %v2301 = vsub.f32 %v1981, %v2229
        %v2302 = vsub.f32 %v1982, %v2229
        %v2303 = vsub.f32 %v1983, %v2229
        %v2304 = vsub.f32 %v1984, %v2229
        %v2305 = vsub.f32 %v1985, %v2229
        %v2306 = vsub.f32 %v1986, %v2233
        %v2307 = vsub.f32 %v1987, %v2233
        %v2308 = vsub.f32 %v1988, %v2233
        %v2309 = vsub.f32 %v1989, %v2233
        %v2310 = vsub.f32 %v1990, %v2233
        %v2311 = vsub.f32 %v1991, %v2233
        %v2312 = vsub.f32 %v1992, %v2233
        %v2313 = vsub.f32 %v1993, %v2233
        %v2314 = vsub.f32 %v1994, %v2233
        %v2315 = vsub.f32 %v1995, %v2233
        %v2316 = vsub.f32 %v1996, %v2233
        %v2317 = vsub.f32 %v1997, %v2233
        %v2318 = vsub.f32 %v1998, %v2233
        %v2319 = vsub.f32 %v1999, %v2233
        %v2320 = vsub.f32 %v2000, %v2233
        %v2321 = vsub.f32 %v2001, %v2233
        %v2322 = vsub.f32 %v2002, %v2233
        %v2323 = vsub.f32 %v2003, %v2233
        %v2324 = vsub.f32 %v2004, %v2233
        %v2325 = vsub.f32 %v2005, %v2233
        %v2326 = vsub.f32 %v2006, %v2233
        %v2327 = vsub.f32 %v2007, %v2233
        %v2328 = vsub.f32 %v2008, %v2233
        %v2329 = vsub.f32 %v2009, %v2233
        %v2330 = vsub.f32 %v2010, %v2233
        %v2331 = vsub.f32 %v2011, %v2233
        %v2332 = vsub.f32 %v2012, %v2233
        %v2333 = vsub.f32 %v2013, %v2233
        %v2334 = vsub.f32 %v2014, %v2233
        %v2335 = vsub.f32 %v2015, %v2233
        %v2336 = vsub.f32 %v2016, %v2233
        %v2337 = vsub.f32 %v2017, %v2233
        %v2338 = vsub.f32 %v2018, %v2237
        %v2339 = vsub.f32 %v2019, %v2237
        %v2340 = vsub.f32 %v2020, %v2237
        %v2341 = vsub.f32 %v2021, %v2237
        %v2342 = vsub.f32 %v2022, %v2237
        %v2343 = vsub.f32 %v2023, %v2237
        %v2344 = vsub.f32 %v2024, %v2237
        %v2345 = vsub.f32 %v2025, %v2237
        %v2346 = vsub.f32 %v2026, %v2237
        %v2347 = vsub.f32 %v2027, %v2237
        %v2348 = vsub.f32 %v2028, %v2237
        %v2349 = vsub.f32 %v2029, %v2237
        %v2350 = vsub.f32 %v2030, %v2237
        %v2351 = vsub.f32 %v2031, %v2237
        %v2352 = vsub.f32 %v2032, %v2237
        %v2353 = vsub.f32 %v2033, %v2237
        %v2354 = vsub.f32 %v2034, %v2237
        %v2355 = vsub.f32 %v2035, %v2237
        %v2356 = vsub.f32 %v2036, %v2237
        %v2357 = vsub.f32 %v2037, %v2237
        %v2358 = vsub.f32 %v2038, %v2237
        %v2359 = vsub.f32 %v2039, %v2237
        %v2360 = vsub.f32 %v2040, %v2237
        %v2361 = vsub.f32 %v2041, %v2237
        %v2362 = vsub.f32 %v2042, %v2237
        %v2363 = vsub.f32 %v2043, %v2237
        %v2364 = vsub.f32 %v2044, %v2237
        %v2365 = vsub.f32 %v2045, %v2237
        %v2366 = vsub.f32 %v2046, %v2237
        %v2367 = vsub.f32 %v2047, %v2237
        %v2368 = vsub.f32 %v2048, %v2237
        %v2369 = vsub.f32 %v2049, %v2237
        %v2370 = vmul.f32 %v2242, 1.442695
        %v2371 = vpow.pop %v2370
        %v2372 = vmul.f32 %v2243, 1.442695
        %v2373 = vpow.pop %v2372
        %v2374 = vmul.f32 %v2244, 1.442695
        %v2375 = vpow.pop %v2374
        %v2376 = vmul.f32 %v2245, 1.442695
        %v2377 = vpow.pop %v2376
        %v2378 = vmul.f32 %v2246, 1.442695
        %v2379 = vpow.pop %v2378
        %v2380 = vmul.f32 %v2247, 1.442695
        %v2381 = vpow.pop %v2380
        %v2382 = vmul.f32 %v2248, 1.442695
        %v2383 = vpow.pop %v2382
        %v2384 = vmul.f32 %v2249, 1.442695
        %v2385 = vpow.pop %v2384
        %v2386 = vmul.f32 %v2250, 1.442695
        %v2387 = vpow.pop %v2386
        %v2388 = vmul.f32 %v2251, 1.442695
        %v2389 = vpow.pop %v2388
        %v2390 = vmul.f32 %v2252, 1.442695
        %v2391 = vpow.pop %v2390
        %v2392 = vmul.f32 %v2253, 1.442695
        %v2393 = vpow.pop %v2392
        %v2394 = vmul.f32 %v2254, 1.442695
        %v2395 = vpow.pop %v2394
        %v2396 = vmul.f32 %v2255, 1.442695
        %v2397 = vpow.pop %v2396
        %v2398 = vmul.f32 %v2256, 1.442695
        %v2399 = vpow.pop %v2398
        %v2400 = vmul.f32 %v2257, 1.442695
        %v2401 = vpow.pop %v2400
        %v2402 = vmul.f32 %v2258, 1.442695
        %v2403 = vpow.pop %v2402
        %v2404 = vmul.f32 %v2259, 1.442695
        %v2405 = vpow.pop %v2404
        %v2406 = vmul.f32 %v2260, 1.442695
        %v2407 = vpow.pop %v2406
        %v2408 = vmul.f32 %v2261, 1.442695
        %v2409 = vpow.pop %v2408
        %v2410 = vmul.f32 %v2262, 1.442695
        %v2411 = vpow.pop %v2410
        %v2412 = vmul.f32 %v2263, 1.442695
        %v2413 = vpow.pop %v2412
        %v2414 = vmul.f32 %v2264, 1.442695
        %v2415 = vpow.pop %v2414
        %v2416 = vmul.f32 %v2265, 1.442695
        %v2417 = vpow.pop %v2416
        %v2418 = vmul.f32 %v2266, 1.442695
        %v2419 = vpow.pop %v2418
        %v2420 = vmul.f32 %v2267, 1.442695
        %v2421 = vpow.pop %v2420
        %v2422 = vmul.f32 %v2268, 1.442695
        %v2423 = vpow.pop %v2422
        %v2424 = vmul.f32 %v2269, 1.442695
        %v2425 = vpow.pop %v2424
        %v2426 = vmul.f32 %v2270, 1.442695
        %v2427 = vpow.pop %v2426
        %v2428 = vmul.f32 %v2271, 1.442695
        %v2429 = vpow.pop %v2428
        %v2430 = vmul.f32 %v2272, 1.442695
        %v2431 = vpow.pop %v2430
        %v2432 = vmul.f32 %v2273, 1.442695
        %v2433 = vpow.pop %v2432
        %v2434 = vmul.f32 %v2274, 1.442695
        %v2435 = vpow.pop %v2434
        %v2436 = vmul.f32 %v2275, 1.442695
        %v2437 = vpow.pop %v2436
        %v2438 = vmul.f32 %v2276, 1.442695
        %v2439 = vpow.pop %v2438
        %v2440 = vmul.f32 %v2277, 1.442695
        %v2441 = vpow.pop %v2440
        %v2442 = vmul.f32 %v2278, 1.442695
        %v2443 = vpow.pop %v2442
        %v2444 = vmul.f32 %v2279, 1.442695
        %v2445 = vpow.pop %v2444
        %v2446 = vmul.f32 %v2280, 1.442695
        %v2447 = vpow.pop %v2446
        %v2448 = vmul.f32 %v2281, 1.442695
        %v2449 = vpow.pop %v2448
        %v2450 = vmul.f32 %v2282, 1.442695
        %v2451 = vpow.pop %v2450
        %v2452 = vmul.f32 %v2283, 1.442695
        %v2453 = vpow.pop %v2452
        %v2454 = vmul.f32 %v2284, 1.442695
        %v2455 = vpow.pop %v2454
        %v2456 = vmul.f32 %v2285, 1.442695
        %v2457 = vpow.pop %v2456
        %v2458 = vmul.f32 %v2286, 1.442695
        %v2459 = vpow.pop %v2458
        %v2460 = vmul.f32 %v2287, 1.442695
        %v2461 = vpow.pop %v2460
        %v2462 = vmul.f32 %v2288, 1.442695
        %v2463 = vpow.pop %v2462
        %v2464 = vmul.f32 %v2289, 1.442695
        %v2465 = vpow.pop %v2464
        %v2466 = vmul.f32 %v2290, 1.442695
        %v2467 = vpow.pop %v2466
        %v2468 = vmul.f32 %v2291, 1.442695
        %v2469 = vpow.pop %v2468
        %v2470 = vmul.f32 %v2292, 1.442695
        %v2471 = vpow.pop %v2470
        %v2472 = vmul.f32 %v2293, 1.442695
        %v2473 = vpow.pop %v2472
        %v2474 = vmul.f32 %v2294, 1.442695
        %v2475 = vpow.pop %v2474
        %v2476 = vmul.f32 %v2295, 1.442695
        %v2477 = vpow.pop %v2476
        %v2478 = vmul.f32 %v2296, 1.442695
        %v2479 = vpow.pop %v2478
        %v2480 = vmul.f32 %v2297, 1.442695
        %v2481 = vpow.pop %v2480
        %v2482 = vmul.f32 %v2298, 1.442695
        %v2483 = vpow.pop %v2482
        %v2484 = vmul.f32 %v2299, 1.442695
        %v2485 = vpow.pop %v2484
        %v2486 = vmul.f32 %v2300, 1.442695
        %v2487 = vpow.pop %v2486
        %v2488 = vmul.f32 %v2301, 1.442695
        %v2489 = vpow.pop %v2488
        %v2490 = vmul.f32 %v2302, 1.442695
        %v2491 = vpow.pop %v2490
        %v2492 = vmul.f32 %v2303, 1.442695
        %v2493 = vpow.pop %v2492
        %v2494 = vmul.f32 %v2304, 1.442695
        %v2495 = vpow.pop %v2494
        %v2496 = vmul.f32 %v2305, 1.442695
        %v2497 = vpow.pop %v2496
        %v2498 = vmul.f32 %v2306, 1.442695
        %v2499 = vpow.pop %v2498
        %v2500 = vmul.f32 %v2307, 1.442695
        %v2501 = vpow.pop %v2500
        %v2502 = vmul.f32 %v2308, 1.442695
        %v2503 = vpow.pop %v2502
        %v2504 = vmul.f32 %v2309, 1.442695
        %v2505 = vpow.pop %v2504
        %v2506 = vmul.f32 %v2310, 1.442695
        %v2507 = vpow.pop %v2506
        %v2508 = vmul.f32 %v2311, 1.442695
        %v2509 = vpow.pop %v2508
        %v2510 = vmul.f32 %v2312, 1.442695
        %v2511 = vpow.pop %v2510
        %v2512 = vmul.f32 %v2313, 1.442695
        %v2513 = vpow.pop %v2512
        %v2514 = vmul.f32 %v2314, 1.442695
        %v2515 = vpow.pop %v2514
        %v2516 = vmul.f32 %v2315, 1.442695
        %v2517 = vpow.pop %v2516
        %v2518 = vmul.f32 %v2316, 1.442695
        %v2519 = vpow.pop %v2518
        %v2520 = vmul.f32 %v2317, 1.442695
        %v2521 = vpow.pop %v2520
        %v2522 = vmul.f32 %v2318, 1.442695
        %v2523 = vpow.pop %v2522
        %v2524 = vmul.f32 %v2319, 1.442695
        %v2525 = vpow.pop %v2524
        %v2526 = vmul.f32 %v2320, 1.442695
        %v2527 = vpow.pop %v2526
        %v2528 = vmul.f32 %v2321, 1.442695
        %v2529 = vpow.pop %v2528
        %v2530 = vmul.f32 %v2322, 1.442695
        %v2531 = vpow.pop %v2530
        %v2532 = vmul.f32 %v2323, 1.442695
        %v2533 = vpow.pop %v2532
        %v2534 = vmul.f32 %v2324, 1.442695
        %v2535 = vpow.pop %v2534
        %v2536 = vmul.f32 %v2325, 1.442695
        %v2537 = vpow.pop %v2536
        %v2538 = vmul.f32 %v2326, 1.442695
        %v2539 = vpow.pop %v2538
        %v2540 = vmul.f32 %v2327, 1.442695
        %v2541 = vpow.pop %v2540
        %v2542 = vmul.f32 %v2328, 1.442695
        %v2543 = vpow.pop %v2542
        %v2544 = vmul.f32 %v2329, 1.442695
        %v2545 = vpow.pop %v2544
        %v2546 = vmul.f32 %v2330, 1.442695
        %v2547 = vpow.pop %v2546
        %v2548 = vmul.f32 %v2331, 1.442695
        %v2549 = vpow.pop %v2548
        %v2550 = vmul.f32 %v2332, 1.442695
        %v2551 = vpow.pop %v2550
        %v2552 = vmul.f32 %v2333, 1.442695
        %v2553 = vpow.pop %v2552
        %v2554 = vmul.f32 %v2334, 1.442695
        %v2555 = vpow.pop %v2554
        %v2556 = vmul.f32 %v2335, 1.442695
        %v2557 = vpow.pop %v2556
        %v2558 = vmul.f32 %v2336, 1.442695
        %v2559 = vpow.pop %v2558
        %v2560 = vmul.f32 %v2337, 1.442695
        %v2561 = vpow.pop %v2560
        %v2562 = vmul.f32 %v2338, 1.442695
        %v2563 = vpow.pop %v2562
        %v2564 = vmul.f32 %v2339, 1.442695
        %v2565 = vpow.pop %v2564
        %v2566 = vmul.f32 %v2340, 1.442695
        %v2567 = vpow.pop %v2566
        %v2568 = vmul.f32 %v2341, 1.442695
        %v2569 = vpow.pop %v2568
        %v2570 = vmul.f32 %v2342, 1.442695
        %v2571 = vpow.pop %v2570
        %v2572 = vmul.f32 %v2343, 1.442695
        %v2573 = vpow.pop %v2572
        %v2574 = vmul.f32 %v2344, 1.442695
        %v2575 = vpow.pop %v2574
        %v2576 = vmul.f32 %v2345, 1.442695
        %v2577 = vpow.pop %v2576
        %v2578 = vmul.f32 %v2346, 1.442695
        %v2579 = vpow.pop %v2578
        %v2580 = vmul.f32 %v2347, 1.442695
        %v2581 = vpow.pop %v2580
        %v2582 = vmul.f32 %v2348, 1.442695
        %v2583 = vpow.pop %v2582
        %v2584 = vmul.f32 %v2349, 1.442695
        %v2585 = vpow.pop %v2584
        %v2586 = vmul.f32 %v2350, 1.442695
        %v2587 = vpow.pop %v2586
        %v2588 = vmul.f32 %v2351, 1.442695
        %v2589 = vpow.pop %v2588
        %v2590 = vmul.f32 %v2352, 1.442695
        %v2591 = vpow.pop %v2590
        %v2592 = vmul.f32 %v2353, 1.442695
        %v2593 = vpow.pop %v2592
        %v2594 = vmul.f32 %v2354, 1.442695
        %v2595 = vpow.pop %v2594
        %v2596 = vmul.f32 %v2355, 1.442695
        %v2597 = vpow.pop %v2596
        %v2598 = vmul.f32 %v2356, 1.442695
        %v2599 = vpow.pop %v2598
        %v2600 = vmul.f32 %v2357, 1.442695
        %v2601 = vpow.pop %v2600
        %v2602 = vmul.f32 %v2358, 1.442695
        %v2603 = vpow.pop %v2602
        %v2604 = vmul.f32 %v2359, 1.442695
        %v2605 = vpow.pop %v2604
        %v2606 = vmul.f32 %v2360, 1.442695
        %v2607 = vpow.pop %v2606
        %v2608 = vmul.f32 %v2361, 1.442695
        %v2609 = vpow.pop %v2608
        %v2610 = vmul.f32 %v2362, 1.442695
        %v2611 = vpow.pop %v2610
        %v2612 = vmul.f32 %v2363, 1.442695
        %v2613 = vpow.pop %v2612
        %v2614 = vmul.f32 %v2364, 1.442695
        %v2615 = vpow.pop %v2614
        %v2616 = vmul.f32 %v2365, 1.442695
        %v2617 = vpow.pop %v2616
        %v2618 = vmul.f32 %v2366, 1.442695
        %v2619 = vpow.pop %v2618
        %v2620 = vmul.f32 %v2367, 1.442695
        %v2621 = vpow.pop %v2620
        %v2622 = vmul.f32 %v2368, 1.442695
        %v2623 = vpow.pop %v2622
        %v2624 = vmul.f32 %v2369, 1.442695
        %v2625 = vpow.pop %v2624
        %v2626 = vld [vmem:[#allocation3] sm:$0x1]
        %v2627 = vld [vmem:[#allocation3 + $0x1] sm:$0x1]
        %v2628 = vld [vmem:[#allocation3 + $0x2] sm:$0x1]
        %v2629 = vld [vmem:[#allocation3 + $0x3] sm:$0x1]
        %v2630 = vmul.f32 %v2211, %v2626
        %v2631 = vmul.f32 %v2213, %v2627
        %v2632 = vmul.f32 %v2215, %v2628
        %v2633 = vmul.f32 %v2217, %v2629
        %vm2634 = vcmask 7168
        %v2635 = vsel %vm2634, %v2371, 0.0
        %v2636 = vsel %vm2634, %v2373, 0.0
        %v2637 = vadd.f32 %v2635, %v2636
        %v2638 = vsel %vm2634, %v2375, 0.0
        %v2639 = vadd.f32 %v2637, %v2638
        %v2640 = vsel %vm2634, %v2377, 0.0
        %v2641 = vadd.f32 %v2639, %v2640
        %v2642 = vsel %vm2634, %v2379, 0.0
        %v2643 = vadd.f32 %v2641, %v2642
        %v2644 = vsel %vm2634, %v2381, 0.0
        %v2645 = vadd.f32 %v2643, %v2644
        %v2646 = vsel %vm2634, %v2383, 0.0
        %v2647 = vadd.f32 %v2645, %v2646
        %v2648 = vsel %vm2634, %v2385, 0.0
        %v2649 = vadd.f32 %v2647, %v2648
        %v2650 = vsel %vm2634, %v2387, 0.0
        %v2651 = vadd.f32 %v2649, %v2650
        %v2652 = vsel %vm2634, %v2389, 0.0
        %v2653 = vadd.f32 %v2651, %v2652
        %v2654 = vsel %vm2634, %v2391, 0.0
        %v2655 = vadd.f32 %v2653, %v2654
        %v2656 = vsel %vm2634, %v2393, 0.0
        %v2657 = vadd.f32 %v2655, %v2656
        %v2658 = vsel %vm2634, %v2395, 0.0
        %v2659 = vadd.f32 %v2657, %v2658
        %v2660 = vsel %vm2634, %v2397, 0.0
        %v2661 = vadd.f32 %v2659, %v2660
        %v2662 = vsel %vm2634, %v2399, 0.0
        %v2663 = vadd.f32 %v2661, %v2662
        %v2664 = vsel %vm2634, %v2401, 0.0
        %v2665 = vadd.f32 %v2663, %v2664
        %v2666 = vsel %vm2634, %v2403, 0.0
        %v2667 = vadd.f32 %v2665, %v2666
        %v2668 = vsel %vm2634, %v2405, 0.0
        %v2669 = vadd.f32 %v2667, %v2668
        %v2670 = vsel %vm2634, %v2407, 0.0
        %v2671 = vadd.f32 %v2669, %v2670
        %v2672 = vsel %vm2634, %v2409, 0.0
        %v2673 = vadd.f32 %v2671, %v2672
        %v2674 = vsel %vm2634, %v2411, 0.0
        %v2675 = vadd.f32 %v2673, %v2674
        %v2676 = vsel %vm2634, %v2413, 0.0
        %v2677 = vadd.f32 %v2675, %v2676
        %v2678 = vsel %vm2634, %v2415, 0.0
        %v2679 = vadd.f32 %v2677, %v2678
        %v2680 = vsel %vm2634, %v2417, 0.0
        %v2681 = vadd.f32 %v2679, %v2680
        %v2682 = vsel %vm2634, %v2419, 0.0
        %v2683 = vadd.f32 %v2681, %v2682
        %v2684 = vsel %vm2634, %v2421, 0.0
        %v2685 = vadd.f32 %v2683, %v2684
        %v2686 = vsel %vm2634, %v2423, 0.0
        %v2687 = vadd.f32 %v2685, %v2686
        %v2688 = vsel %vm2634, %v2425, 0.0
        %v2689 = vadd.f32 %v2687, %v2688
        %v2690 = vsel %vm2634, %v2427, 0.0
        %v2691 = vadd.f32 %v2689, %v2690
        %v2692 = vsel %vm2634, %v2429, 0.0
        %v2693 = vadd.f32 %v2691, %v2692
        %v2694 = vsel %vm2634, %v2431, 0.0
        %v2695 = vadd.f32 %v2693, %v2694
        %v2696 = vsel %vm2634, %v2433, 0.0
        %v2697 = vadd.f32 %v2695, %v2696
        %v2698 = vrot.slane %v2697, 4
        %v2699 = vadd.f32 %v2697, %v2698
        %v2700 = vrot.slane %v2699, 2
        %v2701 = vadd.f32 %v2699, %v2700
        %v2702 = vrot.slane %v2701, 1
        %v2703 = vadd.f32 %v2701, %v2702
        %v2704 = vsel %vm2634, %v2435, 0.0
        %v2705 = vsel %vm2634, %v2437, 0.0
        %v2706 = vadd.f32 %v2704, %v2705
        %v2707 = vsel %vm2634, %v2439, 0.0
        %v2708 = vadd.f32 %v2706, %v2707
        %v2709 = vsel %vm2634, %v2441, 0.0
        %v2710 = vadd.f32 %v2708, %v2709
        %v2711 = vsel %vm2634, %v2443, 0.0
        %v2712 = vadd.f32 %v2710, %v2711
        %v2713 = vsel %vm2634, %v2445, 0.0
        %v2714 = vadd.f32 %v2712, %v2713
        %v2715 = vsel %vm2634, %v2447, 0.0
        %v2716 = vadd.f32 %v2714, %v2715
        %v2717 = vsel %vm2634, %v2449, 0.0
        %v2718 = vadd.f32 %v2716, %v2717
        %v2719 = vsel %vm2634, %v2451, 0.0
        %v2720 = vadd.f32 %v2718, %v2719
        %v2721 = vsel %vm2634, %v2453, 0.0
        %v2722 = vadd.f32 %v2720, %v2721
        %v2723 = vsel %vm2634, %v2455, 0.0
        %v2724 = vadd.f32 %v2722, %v2723
        %v2725 = vsel %vm2634, %v2457, 0.0
        %v2726 = vadd.f32 %v2724, %v2725
        %v2727 = vsel %vm2634, %v2459, 0.0
        %v2728 = vadd.f32 %v2726, %v2727
        %v2729 = vsel %vm2634, %v2461, 0.0
        %v2730 = vadd.f32 %v2728, %v2729
        %v2731 = vsel %vm2634, %v2463, 0.0
        %v2732 = vadd.f32 %v2730, %v2731
        %v2733 = vsel %vm2634, %v2465, 0.0
        %v2734 = vadd.f32 %v2732, %v2733
        %v2735 = vsel %vm2634, %v2467, 0.0
        %v2736 = vadd.f32 %v2734, %v2735
        %v2737 = vsel %vm2634, %v2469, 0.0
        %v2738 = vadd.f32 %v2736, %v2737
        %v2739 = vsel %vm2634, %v2471, 0.0
        %v2740 = vadd.f32 %v2738, %v2739
        %v2741 = vsel %vm2634, %v2473, 0.0
        %v2742 = vadd.f32 %v2740, %v2741
        %v2743 = vsel %vm2634, %v2475, 0.0
        %v2744 = vadd.f32 %v2742, %v2743
        %v2745 = vsel %vm2634, %v2477, 0.0
        %v2746 = vadd.f32 %v2744, %v2745
        %v2747 = vsel %vm2634, %v2479, 0.0
        %v2748 = vadd.f32 %v2746, %v2747
        %v2749 = vsel %vm2634, %v2481, 0.0
        %v2750 = vadd.f32 %v2748, %v2749
        %v2751 = vsel %vm2634, %v2483, 0.0
        %v2752 = vadd.f32 %v2750, %v2751
        %v2753 = vsel %vm2634, %v2485, 0.0
        %v2754 = vadd.f32 %v2752, %v2753
        %v2755 = vsel %vm2634, %v2487, 0.0
        %v2756 = vadd.f32 %v2754, %v2755
        %v2757 = vsel %vm2634, %v2489, 0.0
        %v2758 = vadd.f32 %v2756, %v2757
        %v2759 = vsel %vm2634, %v2491, 0.0
        %v2760 = vadd.f32 %v2758, %v2759
        %v2761 = vsel %vm2634, %v2493, 0.0
        %v2762 = vadd.f32 %v2760, %v2761
        %v2763 = vsel %vm2634, %v2495, 0.0
        %v2764 = vadd.f32 %v2762, %v2763
        %v2765 = vsel %vm2634, %v2497, 0.0
        %v2766 = vadd.f32 %v2764, %v2765
        %v2767 = vrot.slane %v2766, 4
        %v2768 = vadd.f32 %v2766, %v2767
        %v2769 = vrot.slane %v2768, 2
        %v2770 = vadd.f32 %v2768, %v2769
        %v2771 = vrot.slane %v2770, 1
        %v2772 = vadd.f32 %v2770, %v2771
        %v2773 = vsel %vm2634, %v2499, 0.0
        %v2774 = vsel %vm2634, %v2501, 0.0
        %v2775 = vadd.f32 %v2773, %v2774
        %v2776 = vsel %vm2634, %v2503, 0.0
        %v2777 = vadd.f32 %v2775, %v2776
        %v2778 = vsel %vm2634, %v2505, 0.0
        %v2779 = vadd.f32 %v2777, %v2778
        %v2780 = vsel %vm2634, %v2507, 0.0
        %v2781 = vadd.f32 %v2779, %v2780
        %v2782 = vsel %vm2634, %v2509, 0.0
        %v2783 = vadd.f32 %v2781, %v2782
        %v2784 = vsel %vm2634, %v2511, 0.0
        %v2785 = vadd.f32 %v2783, %v2784
        %v2786 = vsel %vm2634, %v2513, 0.0
        %v2787 = vadd.f32 %v2785, %v2786
        %v2788 = vsel %vm2634, %v2515, 0.0
        %v2789 = vadd.f32 %v2787, %v2788
        %v2790 = vsel %vm2634, %v2517, 0.0
        %v2791 = vadd.f32 %v2789, %v2790
        %v2792 = vsel %vm2634, %v2519, 0.0
        %v2793 = vadd.f32 %v2791, %v2792
        %v2794 = vsel %vm2634, %v2521, 0.0
        %v2795 = vadd.f32 %v2793, %v2794
        %v2796 = vsel %vm2634, %v2523, 0.0
        %v2797 = vadd.f32 %v2795, %v2796
        %v2798 = vsel %vm2634, %v2525, 0.0
        %v2799 = vadd.f32 %v2797, %v2798
        %v2800 = vsel %vm2634, %v2527, 0.0
        %v2801 = vadd.f32 %v2799, %v2800
        %v2802 = vsel %vm2634, %v2529, 0.0
        %v2803 = vadd.f32 %v2801, %v2802
        %v2804 = vsel %vm2634, %v2531, 0.0
        %v2805 = vadd.f32 %v2803, %v2804
        %v2806 = vsel %vm2634, %v2533, 0.0
        %v2807 = vadd.f32 %v2805, %v2806
        %v2808 = vsel %vm2634, %v2535, 0.0
        %v2809 = vadd.f32 %v2807, %v2808
        %v2810 = vsel %vm2634, %v2537, 0.0
        %v2811 = vadd.f32 %v2809, %v2810
        %v2812 = vsel %vm2634, %v2539, 0.0
        %v2813 = vadd.f32 %v2811, %v2812
        %v2814 = vsel %vm2634, %v2541, 0.0
        %v2815 = vadd.f32 %v2813, %v2814
        %v2816 = vsel %vm2634, %v2543, 0.0
        %v2817 = vadd.f32 %v2815, %v2816
        %v2818 = vsel %vm2634, %v2545, 0.0
        %v2819 = vadd.f32 %v2817, %v2818
        %v2820 = vsel %vm2634, %v2547, 0.0
        %v2821 = vadd.f32 %v2819, %v2820
        %v2822 = vsel %vm2634, %v2549, 0.0
        %v2823 = vadd.f32 %v2821, %v2822
        %v2824 = vsel %vm2634, %v2551, 0.0
        %v2825 = vadd.f32 %v2823, %v2824
        %v2826 = vsel %vm2634, %v2553, 0.0
        %v2827 = vadd.f32 %v2825, %v2826
        %v2828 = vsel %vm2634, %v2555, 0.0
        %v2829 = vadd.f32 %v2827, %v2828
        %v2830 = vsel %vm2634, %v2557, 0.0
        %v2831 = vadd.f32 %v2829, %v2830
        %v2832 = vsel %vm2634, %v2559, 0.0
        %v2833 = vadd.f32 %v2831, %v2832
        %v2834 = vsel %vm2634, %v2561, 0.0
        %v2835 = vadd.f32 %v2833, %v2834
        %v2836 = vrot.slane %v2835, 4
        %v2837 = vadd.f32 %v2835, %v2836
        %v2838 = vrot.slane %v2837, 2
        %v2839 = vadd.f32 %v2837, %v2838
        %v2840 = vrot.slane %v2839, 1
        %v2841 = vadd.f32 %v2839, %v2840
        %v2842 = vsel %vm2634, %v2563, 0.0
        %v2843 = vsel %vm2634, %v2565, 0.0
        %v2844 = vadd.f32 %v2842, %v2843
        %v2845 = vsel %vm2634, %v2567, 0.0
        %v2846 = vadd.f32 %v2844, %v2845
        %v2847 = vsel %vm2634, %v2569, 0.0
        %v2848 = vadd.f32 %v2846, %v2847
        %v2849 = vsel %vm2634, %v2571, 0.0
        %v2850 = vadd.f32 %v2848, %v2849
        %v2851 = vsel %vm2634, %v2573, 0.0
        %v2852 = vadd.f32 %v2850, %v2851
        %v2853 = vsel %vm2634, %v2575, 0.0
        %v2854 = vadd.f32 %v2852, %v2853
        %v2855 = vsel %vm2634, %v2577, 0.0
        %v2856 = vadd.f32 %v2854, %v2855
        %v2857 = vsel %vm2634, %v2579, 0.0
        %v2858 = vadd.f32 %v2856, %v2857
        %v2859 = vsel %vm2634, %v2581, 0.0
        %v2860 = vadd.f32 %v2858, %v2859
        %v2861 = vsel %vm2634, %v2583, 0.0
        %v2862 = vadd.f32 %v2860, %v2861
        %v2863 = vsel %vm2634, %v2585, 0.0
        %v2864 = vadd.f32 %v2862, %v2863
        %v2865 = vsel %vm2634, %v2587, 0.0
        %v2866 = vadd.f32 %v2864, %v2865
        %v2867 = vsel %vm2634, %v2589, 0.0
        %v2868 = vadd.f32 %v2866, %v2867
        %v2869 = vsel %vm2634, %v2591, 0.0
        %v2870 = vadd.f32 %v2868, %v2869
        %v2871 = vsel %vm2634, %v2593, 0.0
        %v2872 = vadd.f32 %v2870, %v2871
        %v2873 = vsel %vm2634, %v2595, 0.0
        %v2874 = vadd.f32 %v2872, %v2873
        %v2875 = vsel %vm2634, %v2597, 0.0
        %v2876 = vadd.f32 %v2874, %v2875
        %v2877 = vsel %vm2634, %v2599, 0.0
        %v2878 = vadd.f32 %v2876, %v2877
        %v2879 = vsel %vm2634, %v2601, 0.0
        %v2880 = vadd.f32 %v2878, %v2879
        %v2881 = vsel %vm2634, %v2603, 0.0
        %v2882 = vadd.f32 %v2880, %v2881
        %v2883 = vsel %vm2634, %v2605, 0.0
        %v2884 = vadd.f32 %v2882, %v2883
        %v2885 = vsel %vm2634, %v2607, 0.0
        %v2886 = vadd.f32 %v2884, %v2885
        %v2887 = vsel %vm2634, %v2609, 0.0
        %v2888 = vadd.f32 %v2886, %v2887
        %v2889 = vsel %vm2634, %v2611, 0.0
        %v2890 = vadd.f32 %v2888, %v2889
        %v2891 = vsel %vm2634, %v2613, 0.0
        %v2892 = vadd.f32 %v2890, %v2891
        %v2893 = vsel %vm2634, %v2615, 0.0
        %v2894 = vadd.f32 %v2892, %v2893
        %v2895 = vsel %vm2634, %v2617, 0.0
        %v2896 = vadd.f32 %v2894, %v2895
        %v2897 = vsel %vm2634, %v2619, 0.0
        %v2898 = vadd.f32 %v2896, %v2897
        %v2899 = vsel %vm2634, %v2621, 0.0
        %v2900 = vadd.f32 %v2898, %v2899
        %v2901 = vsel %vm2634, %v2623, 0.0
        %v2902 = vadd.f32 %v2900, %v2901
        %v2903 = vsel %vm2634, %v2625, 0.0
        %v2904 = vadd.f32 %v2902, %v2903
        %v2905 = vrot.slane %v2904, 4
        %v2906 = vadd.f32 %v2904, %v2905
        %v2907 = vrot.slane %v2906, 2
        %v2908 = vadd.f32 %v2906, %v2907
        %v2909 = vrot.slane %v2908, 1
        %v2910 = vadd.f32 %v2908, %v2909
        %v2911 = vadd.f32 %v2630, %v2703
        %v2912 = vadd.f32 %v2631, %v2772
        %v2913 = vadd.f32 %v2632, %v2841
        %v2914 = vadd.f32 %v2633, %v2910
        %vm2915 = vcmask 0
        %2916 = vst.msk [vmem:[#allocation3] sm:$0x1] %vm2915, %v2911
        %2917 = vst.msk [vmem:[#allocation3 + $0x1] sm:$0x1] %vm2915, %v2912
        %2918 = vst.msk [vmem:[#allocation3 + $0x2] sm:$0x1] %vm2915, %v2913
        %2919 = vst.msk [vmem:[#allocation3 + $0x3] sm:$0x1] %vm2915, %v2914
        %v2920 = vld [vmem:[#allocation4] sm:$0x1]
        %v2921 = vld [vmem:[#allocation4 + $0x1] sm:$0x1]
        %v2922 = vld [vmem:[#allocation4 + $0x2] sm:$0x1]
        %v2923 = vld [vmem:[#allocation4 + $0x3] sm:$0x1]
        %2925 = vset.pattern.permute.xlu0 0
        %2926 = vperm.xlu0 %2925, %v2211
        %v2927 = vpop.permute.xlu0 %2926
        %v2929 = vlaneseq
        %v2930 = vshrl.u32 %v2929, 7
        %v2931 = vsub.s32 0, %v2930
        %v2932 = vrot.slane %v2927, %v2931
        %2934 = vset.pattern.permute.xlu0 0
        %2935 = vperm.xlu0 %2934, %v2213
        %v2936 = vpop.permute.xlu0 %2935
        %v2938 = vlaneseq
        %v2939 = vshrl.u32 %v2938, 7
        %v2940 = vsub.s32 0, %v2939
        %v2941 = vrot.slane %v2936, %v2940
        %2943 = vset.pattern.permute.xlu0 0
        %2944 = vperm.xlu0 %2943, %v2215
        %v2945 = vpop.permute.xlu0 %2944
        %v2947 = vlaneseq
        %v2948 = vshrl.u32 %v2947, 7
        %v2949 = vsub.s32 0, %v2948
        %v2950 = vrot.slane %v2945, %v2949
        %2952 = vset.pattern.permute.xlu0 0
        %2953 = vperm.xlu0 %2952, %v2217
        %v2954 = vpop.permute.xlu0 %2953
        %v2956 = vlaneseq
        %v2957 = vshrl.u32 %v2956, 7
        %v2958 = vsub.s32 0, %v2957
        %v2959 = vrot.slane %v2954, %v2958
        %v2960 = vmul.f32 %v2932, %v2920
        %v2961 = vmul.f32 %v2941, %v2921
        %v2962 = vmul.f32 %v2950, %v2922
        %v2963 = vmul.f32 %v2959, %v2923
        %2965 = vset.pattern.permute.xlu0 0
        %2966 = vperm.xlu0 %2965, %v2371
        %v2967 = vpop.permute.xlu0 %2966
        %2970 = vset.pattern.permute.xlu0 0
        %2971 = vperm.xlu0 %2970, %v2373
        %v2972 = vpop.permute.xlu0 %2971
        %2975 = vset.pattern.permute.xlu0 0
        %2976 = vperm.xlu0 %2975, %v2375
        %v2977 = vpop.permute.xlu0 %2976
        %2980 = vset.pattern.permute.xlu0 0
        %2981 = vperm.xlu0 %2980, %v2377
        %v2982 = vpop.permute.xlu0 %2981
        %2985 = vset.pattern.permute.xlu0 0
        %2986 = vperm.xlu0 %2985, %v2379
        %v2987 = vpop.permute.xlu0 %2986
        %2990 = vset.pattern.permute.xlu0 0
        %2991 = vperm.xlu0 %2990, %v2381
        %v2992 = vpop.permute.xlu0 %2991
        %2995 = vset.pattern.permute.xlu0 0
        %2996 = vperm.xlu0 %2995, %v2383
        %v2997 = vpop.permute.xlu0 %2996
        %3000 = vset.pattern.permute.xlu0 0
        %3001 = vperm.xlu0 %3000, %v2385
        %v3002 = vpop.permute.xlu0 %3001
        %3005 = vset.pattern.permute.xlu0 0
        %3006 = vperm.xlu0 %3005, %v2387
        %v3007 = vpop.permute.xlu0 %3006
        %3010 = vset.pattern.permute.xlu0 0
        %3011 = vperm.xlu0 %3010, %v2389
        %v3012 = vpop.permute.xlu0 %3011
        %3015 = vset.pattern.permute.xlu0 0
        %3016 = vperm.xlu0 %3015, %v2391
        %v3017 = vpop.permute.xlu0 %3016
        %3020 = vset.pattern.permute.xlu0 0
        %3021 = vperm.xlu0 %3020, %v2393
        %v3022 = vpop.permute.xlu0 %3021
        %3025 = vset.pattern.permute.xlu0 0
        %3026 = vperm.xlu0 %3025, %v2395
        %v3027 = vpop.permute.xlu0 %3026
        %3030 = vset.pattern.permute.xlu0 0
        %3031 = vperm.xlu0 %3030, %v2397
        %v3032 = vpop.permute.xlu0 %3031
        %3035 = vset.pattern.permute.xlu0 0
        %3036 = vperm.xlu0 %3035, %v2399
        %v3037 = vpop.permute.xlu0 %3036
        %3040 = vset.pattern.permute.xlu0 0
        %3041 = vperm.xlu0 %3040, %v2401
        %v3042 = vpop.permute.xlu0 %3041
        %3045 = vset.pattern.permute.xlu0 0
        %3046 = vperm.xlu0 %3045, %v2403
        %v3047 = vpop.permute.xlu0 %3046
        %3050 = vset.pattern.permute.xlu0 0
        %3051 = vperm.xlu0 %3050, %v2405
        %v3052 = vpop.permute.xlu0 %3051
        %3055 = vset.pattern.permute.xlu0 0
        %3056 = vperm.xlu0 %3055, %v2407
        %v3057 = vpop.permute.xlu0 %3056
        %3060 = vset.pattern.permute.xlu0 0
        %3061 = vperm.xlu0 %3060, %v2409
        %v3062 = vpop.permute.xlu0 %3061
        %3065 = vset.pattern.permute.xlu0 0
        %3066 = vperm.xlu0 %3065, %v2411
        %v3067 = vpop.permute.xlu0 %3066
        %3070 = vset.pattern.permute.xlu0 0
        %3071 = vperm.xlu0 %3070, %v2413
        %v3072 = vpop.permute.xlu0 %3071
        %3075 = vset.pattern.permute.xlu0 0
        %3076 = vperm.xlu0 %3075, %v2415
        %v3077 = vpop.permute.xlu0 %3076
        %3080 = vset.pattern.permute.xlu0 0
        %3081 = vperm.xlu0 %3080, %v2417
        %v3082 = vpop.permute.xlu0 %3081
        %3085 = vset.pattern.permute.xlu0 0
        %3086 = vperm.xlu0 %3085, %v2419
        %v3087 = vpop.permute.xlu0 %3086
        %3090 = vset.pattern.permute.xlu0 0
        %3091 = vperm.xlu0 %3090, %v2421
        %v3092 = vpop.permute.xlu0 %3091
        %3095 = vset.pattern.permute.xlu0 0
        %3096 = vperm.xlu0 %3095, %v2423
        %v3097 = vpop.permute.xlu0 %3096
        %3100 = vset.pattern.permute.xlu0 0
        %3101 = vperm.xlu0 %3100, %v2425
        %v3102 = vpop.permute.xlu0 %3101
        %3105 = vset.pattern.permute.xlu0 0
        %3106 = vperm.xlu0 %3105, %v2427
        %v3107 = vpop.permute.xlu0 %3106
        %3110 = vset.pattern.permute.xlu0 0
        %3111 = vperm.xlu0 %3110, %v2429
        %v3112 = vpop.permute.xlu0 %3111
        %3115 = vset.pattern.permute.xlu0 0
        %3116 = vperm.xlu0 %3115, %v2431
        %v3117 = vpop.permute.xlu0 %3116
        %3120 = vset.pattern.permute.xlu0 0
        %3121 = vperm.xlu0 %3120, %v2433
        %v3122 = vpop.permute.xlu0 %3121
        %3125 = vset.pattern.permute.xlu0 0
        %3126 = vperm.xlu0 %3125, %v2435
        %v3127 = vpop.permute.xlu0 %3126
        %3130 = vset.pattern.permute.xlu0 0
        %3131 = vperm.xlu0 %3130, %v2437
        %v3132 = vpop.permute.xlu0 %3131
        %3135 = vset.pattern.permute.xlu0 0
        %3136 = vperm.xlu0 %3135, %v2439
        %v3137 = vpop.permute.xlu0 %3136
        %3140 = vset.pattern.permute.xlu0 0
        %3141 = vperm.xlu0 %3140, %v2441
        %v3142 = vpop.permute.xlu0 %3141
        %3145 = vset.pattern.permute.xlu0 0
        %3146 = vperm.xlu0 %3145, %v2443
        %v3147 = vpop.permute.xlu0 %3146
        %3150 = vset.pattern.permute.xlu0 0
        %3151 = vperm.xlu0 %3150, %v2445
        %v3152 = vpop.permute.xlu0 %3151
        %3155 = vset.pattern.permute.xlu0 0
        %3156 = vperm.xlu0 %3155, %v2447
        %v3157 = vpop.permute.xlu0 %3156
        %3160 = vset.pattern.permute.xlu0 0
        %3161 = vperm.xlu0 %3160, %v2449
        %v3162 = vpop.permute.xlu0 %3161
        %3165 = vset.pattern.permute.xlu0 0
        %3166 = vperm.xlu0 %3165, %v2451
        %v3167 = vpop.permute.xlu0 %3166
        %3170 = vset.pattern.permute.xlu0 0
        %3171 = vperm.xlu0 %3170, %v2453
        %v3172 = vpop.permute.xlu0 %3171
        %3175 = vset.pattern.permute.xlu0 0
        %3176 = vperm.xlu0 %3175, %v2455
        %v3177 = vpop.permute.xlu0 %3176
        %3180 = vset.pattern.permute.xlu0 0
        %3181 = vperm.xlu0 %3180, %v2457
        %v3182 = vpop.permute.xlu0 %3181
        %3185 = vset.pattern.permute.xlu0 0
        %3186 = vperm.xlu0 %3185, %v2459
        %v3187 = vpop.permute.xlu0 %3186
        %3190 = vset.pattern.permute.xlu0 0
        %3191 = vperm.xlu0 %3190, %v2461
        %v3192 = vpop.permute.xlu0 %3191
        %3195 = vset.pattern.permute.xlu0 0
        %3196 = vperm.xlu0 %3195, %v2463
        %v3197 = vpop.permute.xlu0 %3196
        %3200 = vset.pattern.permute.xlu0 0
        %3201 = vperm.xlu0 %3200, %v2465
        %v3202 = vpop.permute.xlu0 %3201
        %3205 = vset.pattern.permute.xlu0 0
        %3206 = vperm.xlu0 %3205, %v2467
        %v3207 = vpop.permute.xlu0 %3206
        %3210 = vset.pattern.permute.xlu0 0
        %3211 = vperm.xlu0 %3210, %v2469
        %v3212 = vpop.permute.xlu0 %3211
        %3215 = vset.pattern.permute.xlu0 0
        %3216 = vperm.xlu0 %3215, %v2471
        %v3217 = vpop.permute.xlu0 %3216
        %3220 = vset.pattern.permute.xlu0 0
        %3221 = vperm.xlu0 %3220, %v2473
        %v3222 = vpop.permute.xlu0 %3221
        %3225 = vset.pattern.permute.xlu0 0
        %3226 = vperm.xlu0 %3225, %v2475
        %v3227 = vpop.permute.xlu0 %3226
        %3230 = vset.pattern.permute.xlu0 0
        %3231 = vperm.xlu0 %3230, %v2477
        %v3232 = vpop.permute.xlu0 %3231
        %3235 = vset.pattern.permute.xlu0 0
        %3236 = vperm.xlu0 %3235, %v2479
        %v3237 = vpop.permute.xlu0 %3236
        %3240 = vset.pattern.permute.xlu0 0
        %3241 = vperm.xlu0 %3240, %v2481
        %v3242 = vpop.permute.xlu0 %3241
        %3245 = vset.pattern.permute.xlu0 0
        %3246 = vperm.xlu0 %3245, %v2483
        %v3247 = vpop.permute.xlu0 %3246
        %3250 = vset.pattern.permute.xlu0 0
        %3251 = vperm.xlu0 %3250, %v2485
        %v3252 = vpop.permute.xlu0 %3251
        %3255 = vset.pattern.permute.xlu0 0
        %3256 = vperm.xlu0 %3255, %v2487
        %v3257 = vpop.permute.xlu0 %3256
        %3260 = vset.pattern.permute.xlu0 0
        %3261 = vperm.xlu0 %3260, %v2489
        %v3262 = vpop.permute.xlu0 %3261
        %3265 = vset.pattern.permute.xlu0 0
        %3266 = vperm.xlu0 %3265, %v2491
        %v3267 = vpop.permute.xlu0 %3266
        %3270 = vset.pattern.permute.xlu0 0
        %3271 = vperm.xlu0 %3270, %v2493
        %v3272 = vpop.permute.xlu0 %3271
        %3275 = vset.pattern.permute.xlu0 0
        %3276 = vperm.xlu0 %3275, %v2495
        %v3277 = vpop.permute.xlu0 %3276
        %3280 = vset.pattern.permute.xlu0 0
        %3281 = vperm.xlu0 %3280, %v2497
        %v3282 = vpop.permute.xlu0 %3281
        %3285 = vset.pattern.permute.xlu0 0
        %3286 = vperm.xlu0 %3285, %v2499
        %v3287 = vpop.permute.xlu0 %3286
        %3290 = vset.pattern.permute.xlu0 0
        %3291 = vperm.xlu0 %3290, %v2501
        %v3292 = vpop.permute.xlu0 %3291
        %3295 = vset.pattern.permute.xlu0 0
        %3296 = vperm.xlu0 %3295, %v2503
        %v3297 = vpop.permute.xlu0 %3296
        %3300 = vset.pattern.permute.xlu0 0
        %3301 = vperm.xlu0 %3300, %v2505
        %v3302 = vpop.permute.xlu0 %3301
        %3305 = vset.pattern.permute.xlu0 0
        %3306 = vperm.xlu0 %3305, %v2507
        %v3307 = vpop.permute.xlu0 %3306
        %3310 = vset.pattern.permute.xlu0 0
        %3311 = vperm.xlu0 %3310, %v2509
        %v3312 = vpop.permute.xlu0 %3311
        %3315 = vset.pattern.permute.xlu0 0
        %3316 = vperm.xlu0 %3315, %v2511
        %v3317 = vpop.permute.xlu0 %3316
        %3320 = vset.pattern.permute.xlu0 0
        %3321 = vperm.xlu0 %3320, %v2513
        %v3322 = vpop.permute.xlu0 %3321
        %3325 = vset.pattern.permute.xlu0 0
        %3326 = vperm.xlu0 %3325, %v2515
        %v3327 = vpop.permute.xlu0 %3326
        %3330 = vset.pattern.permute.xlu0 0
        %3331 = vperm.xlu0 %3330, %v2517
        %v3332 = vpop.permute.xlu0 %3331
        %3335 = vset.pattern.permute.xlu0 0
        %3336 = vperm.xlu0 %3335, %v2519
        %v3337 = vpop.permute.xlu0 %3336
        %3340 = vset.pattern.permute.xlu0 0
        %3341 = vperm.xlu0 %3340, %v2521
        %v3342 = vpop.permute.xlu0 %3341
        %3345 = vset.pattern.permute.xlu0 0
        %3346 = vperm.xlu0 %3345, %v2523
        %v3347 = vpop.permute.xlu0 %3346
        %3350 = vset.pattern.permute.xlu0 0
        %3351 = vperm.xlu0 %3350, %v2525
        %v3352 = vpop.permute.xlu0 %3351
        %3355 = vset.pattern.permute.xlu0 0
        %3356 = vperm.xlu0 %3355, %v2527
        %v3357 = vpop.permute.xlu0 %3356
        %3360 = vset.pattern.permute.xlu0 0
        %3361 = vperm.xlu0 %3360, %v2529
        %v3362 = vpop.permute.xlu0 %3361
        %3365 = vset.pattern.permute.xlu0 0
        %3366 = vperm.xlu0 %3365, %v2531
        %v3367 = vpop.permute.xlu0 %3366
        %3370 = vset.pattern.permute.xlu0 0
        %3371 = vperm.xlu0 %3370, %v2533
        %v3372 = vpop.permute.xlu0 %3371
        %3375 = vset.pattern.permute.xlu0 0
        %3376 = vperm.xlu0 %3375, %v2535
        %v3377 = vpop.permute.xlu0 %3376
        %3380 = vset.pattern.permute.xlu0 0
        %3381 = vperm.xlu0 %3380, %v2537
        %v3382 = vpop.permute.xlu0 %3381
        %3385 = vset.pattern.permute.xlu0 0
        %3386 = vperm.xlu0 %3385, %v2539
        %v3387 = vpop.permute.xlu0 %3386
        %3390 = vset.pattern.permute.xlu0 0
        %3391 = vperm.xlu0 %3390, %v2541
        %v3392 = vpop.permute.xlu0 %3391
        %3395 = vset.pattern.permute.xlu0 0
        %3396 = vperm.xlu0 %3395, %v2543
        %v3397 = vpop.permute.xlu0 %3396
        %3400 = vset.pattern.permute.xlu0 0
        %3401 = vperm.xlu0 %3400, %v2545
        %v3402 = vpop.permute.xlu0 %3401
        %3405 = vset.pattern.permute.xlu0 0
        %3406 = vperm.xlu0 %3405, %v2547
        %v3407 = vpop.permute.xlu0 %3406
        %3410 = vset.pattern.permute.xlu0 0
        %3411 = vperm.xlu0 %3410, %v2549
        %v3412 = vpop.permute.xlu0 %3411
        %3415 = vset.pattern.permute.xlu0 0
        %3416 = vperm.xlu0 %3415, %v2551
        %v3417 = vpop.permute.xlu0 %3416
        %3420 = vset.pattern.permute.xlu0 0
        %3421 = vperm.xlu0 %3420, %v2553
        %v3422 = vpop.permute.xlu0 %3421
        %3425 = vset.pattern.permute.xlu0 0
        %3426 = vperm.xlu0 %3425, %v2555
        %v3427 = vpop.permute.xlu0 %3426
        %3430 = vset.pattern.permute.xlu0 0
        %3431 = vperm.xlu0 %3430, %v2557
        %v3432 = vpop.permute.xlu0 %3431
        %3435 = vset.pattern.permute.xlu0 0
        %3436 = vperm.xlu0 %3435, %v2559
        %v3437 = vpop.permute.xlu0 %3436
        %3440 = vset.pattern.permute.xlu0 0
        %3441 = vperm.xlu0 %3440, %v2561
        %v3442 = vpop.permute.xlu0 %3441
        %3445 = vset.pattern.permute.xlu0 0
        %3446 = vperm.xlu0 %3445, %v2563
        %v3447 = vpop.permute.xlu0 %3446
        %3450 = vset.pattern.permute.xlu0 0
        %3451 = vperm.xlu0 %3450, %v2565
        %v3452 = vpop.permute.xlu0 %3451
        %3455 = vset.pattern.permute.xlu0 0
        %3456 = vperm.xlu0 %3455, %v2567
        %v3457 = vpop.permute.xlu0 %3456
        %3460 = vset.pattern.permute.xlu0 0
        %3461 = vperm.xlu0 %3460, %v2569
        %v3462 = vpop.permute.xlu0 %3461
        %3465 = vset.pattern.permute.xlu0 0
        %3466 = vperm.xlu0 %3465, %v2571
        %v3467 = vpop.permute.xlu0 %3466
        %3470 = vset.pattern.permute.xlu0 0
        %3471 = vperm.xlu0 %3470, %v2573
        %v3472 = vpop.permute.xlu0 %3471
        %3475 = vset.pattern.permute.xlu0 0
        %3476 = vperm.xlu0 %3475, %v2575
        %v3477 = vpop.permute.xlu0 %3476
        %3480 = vset.pattern.permute.xlu0 0
        %3481 = vperm.xlu0 %3480, %v2577
        %v3482 = vpop.permute.xlu0 %3481
        %3485 = vset.pattern.permute.xlu0 0
        %3486 = vperm.xlu0 %3485, %v2579
        %v3487 = vpop.permute.xlu0 %3486
        %3490 = vset.pattern.permute.xlu0 0
        %3491 = vperm.xlu0 %3490, %v2581
        %v3492 = vpop.permute.xlu0 %3491
        %3495 = vset.pattern.permute.xlu0 0
        %3496 = vperm.xlu0 %3495, %v2583
        %v3497 = vpop.permute.xlu0 %3496
        %3500 = vset.pattern.permute.xlu0 0
        %3501 = vperm.xlu0 %3500, %v2585
        %v3502 = vpop.permute.xlu0 %3501
        %3505 = vset.pattern.permute.xlu0 0
        %3506 = vperm.xlu0 %3505, %v2587
        %v3507 = vpop.permute.xlu0 %3506
        %3510 = vset.pattern.permute.xlu0 0
        %3511 = vperm.xlu0 %3510, %v2589
        %v3512 = vpop.permute.xlu0 %3511
        %3515 = vset.pattern.permute.xlu0 0
        %3516 = vperm.xlu0 %3515, %v2591
        %v3517 = vpop.permute.xlu0 %3516
        %3520 = vset.pattern.permute.xlu0 0
        %3521 = vperm.xlu0 %3520, %v2593
        %v3522 = vpop.permute.xlu0 %3521
        %3525 = vset.pattern.permute.xlu0 0
        %3526 = vperm.xlu0 %3525, %v2595
        %v3527 = vpop.permute.xlu0 %3526
        %3530 = vset.pattern.permute.xlu0 0
        %3531 = vperm.xlu0 %3530, %v2597
        %v3532 = vpop.permute.xlu0 %3531
        %3535 = vset.pattern.permute.xlu0 0
        %3536 = vperm.xlu0 %3535, %v2599
        %v3537 = vpop.permute.xlu0 %3536
        %3540 = vset.pattern.permute.xlu0 0
        %3541 = vperm.xlu0 %3540, %v2601
        %v3542 = vpop.permute.xlu0 %3541
        %3545 = vset.pattern.permute.xlu0 0
        %3546 = vperm.xlu0 %3545, %v2603
        %v3547 = vpop.permute.xlu0 %3546
        %3550 = vset.pattern.permute.xlu0 0
        %3551 = vperm.xlu0 %3550, %v2605
        %v3552 = vpop.permute.xlu0 %3551
        %3555 = vset.pattern.permute.xlu0 0
        %3556 = vperm.xlu0 %3555, %v2607
        %v3557 = vpop.permute.xlu0 %3556
        %3560 = vset.pattern.permute.xlu0 0
        %3561 = vperm.xlu0 %3560, %v2609
        %v3562 = vpop.permute.xlu0 %3561
        %3565 = vset.pattern.permute.xlu0 0
        %3566 = vperm.xlu0 %3565, %v2611
        %v3567 = vpop.permute.xlu0 %3566
        %3570 = vset.pattern.permute.xlu0 0
        %3571 = vperm.xlu0 %3570, %v2613
        %v3572 = vpop.permute.xlu0 %3571
        %3575 = vset.pattern.permute.xlu0 0
        %3576 = vperm.xlu0 %3575, %v2615
        %v3577 = vpop.permute.xlu0 %3576
        %3580 = vset.pattern.permute.xlu0 0
        %3581 = vperm.xlu0 %3580, %v2617
        %v3582 = vpop.permute.xlu0 %3581
        %3585 = vset.pattern.permute.xlu0 0
        %3586 = vperm.xlu0 %3585, %v2619
        %v3587 = vpop.permute.xlu0 %3586
        %3590 = vset.pattern.permute.xlu0 0
        %3591 = vperm.xlu0 %3590, %v2621
        %v3592 = vpop.permute.xlu0 %3591
        %3595 = vset.pattern.permute.xlu0 0
        %3596 = vperm.xlu0 %3595, %v2623
        %v3597 = vpop.permute.xlu0 %3596
        %3600 = vset.pattern.permute.xlu0 0
        %3601 = vperm.xlu0 %3600, %v2625
        %v3602 = vpop.permute.xlu0 %3601
        %v3604 = vmul.f32 %v2967, %v347
        %v3605 = vmul.f32 %v2972, %v348
        %v3606 = vmul.f32 %v2977, %v349
        %v3607 = vmul.f32 %v2982, %v350
        %v3608 = vmul.f32 %v2987, %v351
        %v3609 = vmul.f32 %v2992, %v352
        %v3610 = vmul.f32 %v2997, %v353
        %v3611 = vmul.f32 %v3002, %v354
        %v3612 = vmul.f32 %v3007, %v355
        %v3613 = vmul.f32 %v3012, %v356
        %v3614 = vmul.f32 %v3017, %v357
        %v3615 = vmul.f32 %v3022, %v358
        %v3616 = vmul.f32 %v3027, %v359
        %v3617 = vmul.f32 %v3032, %v360
        %v3618 = vmul.f32 %v3037, %v361
        %v3619 = vmul.f32 %v3042, %v362
        %v3620 = vmul.f32 %v3047, %v363
        %v3621 = vmul.f32 %v3052, %v364
        %v3622 = vmul.f32 %v3057, %v365
        %v3623 = vmul.f32 %v3062, %v366
        %v3624 = vmul.f32 %v3067, %v367
        %v3625 = vmul.f32 %v3072, %v368
        %v3626 = vmul.f32 %v3077, %v369
        %v3627 = vmul.f32 %v3082, %v370
        %v3628 = vmul.f32 %v3087, %v371
        %v3629 = vmul.f32 %v3092, %v372
        %v3630 = vmul.f32 %v3097, %v373
        %v3631 = vmul.f32 %v3102, %v374
        %v3632 = vmul.f32 %v3107, %v375
        %v3633 = vmul.f32 %v3112, %v376
        %v3634 = vmul.f32 %v3117, %v377
        %v3635 = vmul.f32 %v3122, %v378
        %v3636 = vmul.f32 %v3127, %v379
        %v3637 = vmul.f32 %v3132, %v380
        %v3638 = vmul.f32 %v3137, %v381
        %v3639 = vmul.f32 %v3142, %v382
        %v3640 = vmul.f32 %v3147, %v383
        %v3641 = vmul.f32 %v3152, %v384
        %v3642 = vmul.f32 %v3157, %v385
        %v3643 = vmul.f32 %v3162, %v386
        %v3644 = vmul.f32 %v3167, %v387
        %v3645 = vmul.f32 %v3172, %v388
        %v3646 = vmul.f32 %v3177, %v389
        %v3647 = vmul.f32 %v3182, %v390
        %v3648 = vmul.f32 %v3187, %v391
        %v3649 = vmul.f32 %v3192, %v392
        %v3650 = vmul.f32 %v3197, %v393
        %v3651 = vmul.f32 %v3202, %v394
        %v3652 = vmul.f32 %v3207, %v395
        %v3653 = vmul.f32 %v3212, %v396
        %v3654 = vmul.f32 %v3217, %v397
        %v3655 = vmul.f32 %v3222, %v398
        %v3656 = vmul.f32 %v3227, %v399
        %v3657 = vmul.f32 %v3232, %v400
        %v3658 = vmul.f32 %v3237, %v401
        %v3659 = vmul.f32 %v3242, %v402
        %v3660 = vmul.f32 %v3247, %v403
        %v3661 = vmul.f32 %v3252, %v404
        %v3662 = vmul.f32 %v3257, %v405
        %v3663 = vmul.f32 %v3262, %v406
        %v3664 = vmul.f32 %v3267, %v407
        %v3665 = vmul.f32 %v3272, %v408
        %v3666 = vmul.f32 %v3277, %v409
        %v3667 = vmul.f32 %v3282, %v410
        %v3668 = vmul.f32 %v3287, %v411
        %v3669 = vmul.f32 %v3292, %v412
        %v3670 = vmul.f32 %v3297, %v413
        %v3671 = vmul.f32 %v3302, %v414
        %v3672 = vmul.f32 %v3307, %v415
        %v3673 = vmul.f32 %v3312, %v416
        %v3674 = vmul.f32 %v3317, %v417
        %v3675 = vmul.f32 %v3322, %v418
        %v3676 = vmul.f32 %v3327, %v419
        %v3677 = vmul.f32 %v3332, %v420
        %v3678 = vmul.f32 %v3337, %v421
        %v3679 = vmul.f32 %v3342, %v422
        %v3680 = vmul.f32 %v3347, %v423
        %v3681 = vmul.f32 %v3352, %v424
        %v3682 = vmul.f32 %v3357, %v425
        %v3683 = vmul.f32 %v3362, %v426
        %v3684 = vmul.f32 %v3367, %v427
        %v3685 = vmul.f32 %v3372, %v428
        %v3686 = vmul.f32 %v3377, %v429
        %v3687 = vmul.f32 %v3382, %v430
        %v3688 = vmul.f32 %v3387, %v431
        %v3689 = vmul.f32 %v3392, %v432
        %v3690 = vmul.f32 %v3397, %v433
        %v3691 = vmul.f32 %v3402, %v434
        %v3692 = vmul.f32 %v3407, %v435
        %v3693 = vmul.f32 %v3412, %v436
        %v3694 = vmul.f32 %v3417, %v437
        %v3695 = vmul.f32 %v3422, %v438
        %v3696 = vmul.f32 %v3427, %v439
        %v3697 = vmul.f32 %v3432, %v440
        %v3698 = vmul.f32 %v3437, %v441
        %v3699 = vmul.f32 %v3442, %v442
        %v3700 = vmul.f32 %v3447, %v443
        %v3701 = vmul.f32 %v3452, %v444
        %v3702 = vmul.f32 %v3457, %v445
        %v3703 = vmul.f32 %v3462, %v446
        %v3704 = vmul.f32 %v3467, %v447
        %v3705 = vmul.f32 %v3472, %v448
        %v3706 = vmul.f32 %v3477, %v449
        %v3707 = vmul.f32 %v3482, %v450
        %v3708 = vmul.f32 %v3487, %v451
        %v3709 = vmul.f32 %v3492, %v452
        %v3710 = vmul.f32 %v3497, %v453
        %v3711 = vmul.f32 %v3502, %v454
        %v3712 = vmul.f32 %v3507, %v455
        %v3713 = vmul.f32 %v3512, %v456
        %v3714 = vmul.f32 %v3517, %v457
        %v3715 = vmul.f32 %v3522, %v458
        %v3716 = vmul.f32 %v3527, %v459
        %v3717 = vmul.f32 %v3532, %v460
        %v3718 = vmul.f32 %v3537, %v461
        %v3719 = vmul.f32 %v3542, %v462
        %v3720 = vmul.f32 %v3547, %v463
        %v3721 = vmul.f32 %v3552, %v464
        %v3722 = vmul.f32 %v3557, %v465
        %v3723 = vmul.f32 %v3562, %v466
        %v3724 = vmul.f32 %v3567, %v467
        %v3725 = vmul.f32 %v3572, %v468
        %v3726 = vmul.f32 %v3577, %v469
        %v3727 = vmul.f32 %v3582, %v470
        %v3728 = vmul.f32 %v3587, %v471
        %v3729 = vmul.f32 %v3592, %v472
        %v3730 = vmul.f32 %v3597, %v473
        %v3731 = vmul.f32 %v3602, %v474
        %v3732 = vadd.f32 %v3604, %v3605
        %v3733 = vadd.f32 %v3732, %v3606
        %v3734 = vadd.f32 %v3733, %v3607
        %v3735 = vadd.f32 %v3734, %v3608
        %v3736 = vadd.f32 %v3735, %v3609
        %v3737 = vadd.f32 %v3736, %v3610
        %v3738 = vadd.f32 %v3737, %v3611
        %v3739 = vadd.f32 %v3738, %v3612
        %v3740 = vadd.f32 %v3739, %v3613
        %v3741 = vadd.f32 %v3740, %v3614
        %v3742 = vadd.f32 %v3741, %v3615
        %v3743 = vadd.f32 %v3742, %v3616
        %v3744 = vadd.f32 %v3743, %v3617
        %v3745 = vadd.f32 %v3744, %v3618
        %v3746 = vadd.f32 %v3745, %v3619
        %v3747 = vadd.f32 %v3746, %v3620
        %v3748 = vadd.f32 %v3747, %v3621
        %v3749 = vadd.f32 %v3748, %v3622
        %v3750 = vadd.f32 %v3749, %v3623
        %v3751 = vadd.f32 %v3750, %v3624
        %v3752 = vadd.f32 %v3751, %v3625
        %v3753 = vadd.f32 %v3752, %v3626
        %v3754 = vadd.f32 %v3753, %v3627
        %v3755 = vadd.f32 %v3754, %v3628
        %v3756 = vadd.f32 %v3755, %v3629
        %v3757 = vadd.f32 %v3756, %v3630
        %v3758 = vadd.f32 %v3757, %v3631
        %v3759 = vadd.f32 %v3758, %v3632
        %v3760 = vadd.f32 %v3759, %v3633
        %v3761 = vadd.f32 %v3760, %v3634
        %v3762 = vadd.f32 %v3761, %v3635
        %v3763 = vrot.slane %v3762, 4
        %v3764 = vadd.f32 %v3762, %v3763
        %v3765 = vrot.slane %v3764, 2
        %v3766 = vadd.f32 %v3764, %v3765
        %v3767 = vrot.slane %v3766, 1
        %v3768 = vadd.f32 %v3766, %v3767
        %v3769 = vadd.f32 %v3636, %v3637
        %v3770 = vadd.f32 %v3769, %v3638
        %v3771 = vadd.f32 %v3770, %v3639
        %v3772 = vadd.f32 %v3771, %v3640
        %v3773 = vadd.f32 %v3772, %v3641
        %v3774 = vadd.f32 %v3773, %v3642
        %v3775 = vadd.f32 %v3774, %v3643
        %v3776 = vadd.f32 %v3775, %v3644
        %v3777 = vadd.f32 %v3776, %v3645
        %v3778 = vadd.f32 %v3777, %v3646
        %v3779 = vadd.f32 %v3778, %v3647
        %v3780 = vadd.f32 %v3779, %v3648
        %v3781 = vadd.f32 %v3780, %v3649
        %v3782 = vadd.f32 %v3781, %v3650
        %v3783 = vadd.f32 %v3782, %v3651
        %v3784 = vadd.f32 %v3783, %v3652
        %v3785 = vadd.f32 %v3784, %v3653
        %v3786 = vadd.f32 %v3785, %v3654
        %v3787 = vadd.f32 %v3786, %v3655
        %v3788 = vadd.f32 %v3787, %v3656
        %v3789 = vadd.f32 %v3788, %v3657
        %v3790 = vadd.f32 %v3789, %v3658
        %v3791 = vadd.f32 %v3790, %v3659
        %v3792 = vadd.f32 %v3791, %v3660
        %v3793 = vadd.f32 %v3792, %v3661
        %v3794 = vadd.f32 %v3793, %v3662
        %v3795 = vadd.f32 %v3794, %v3663
        %v3796 = vadd.f32 %v3795, %v3664
        %v3797 = vadd.f32 %v3796, %v3665
        %v3798 = vadd.f32 %v3797, %v3666
        %v3799 = vadd.f32 %v3798, %v3667
        %v3800 = vrot.slane %v3799, 4
        %v3801 = vadd.f32 %v3799, %v3800
        %v3802 = vrot.slane %v3801, 2
        %v3803 = vadd.f32 %v3801, %v3802
        %v3804 = vrot.slane %v3803, 1
        %v3805 = vadd.f32 %v3803, %v3804
        %v3806 = vadd.f32 %v3668, %v3669
        %v3807 = vadd.f32 %v3806, %v3670
        %v3808 = vadd.f32 %v3807, %v3671
        %v3809 = vadd.f32 %v3808, %v3672
        %v3810 = vadd.f32 %v3809, %v3673
        %v3811 = vadd.f32 %v3810, %v3674
        %v3812 = vadd.f32 %v3811, %v3675
        %v3813 = vadd.f32 %v3812, %v3676
        %v3814 = vadd.f32 %v3813, %v3677
        %v3815 = vadd.f32 %v3814, %v3678
        %v3816 = vadd.f32 %v3815, %v3679
        %v3817 = vadd.f32 %v3816, %v3680
        %v3818 = vadd.f32 %v3817, %v3681
        %v3819 = vadd.f32 %v3818, %v3682
        %v3820 = vadd.f32 %v3819, %v3683
        %v3821 = vadd.f32 %v3820, %v3684
        %v3822 = vadd.f32 %v3821, %v3685
        %v3823 = vadd.f32 %v3822, %v3686
        %v3824 = vadd.f32 %v3823, %v3687
        %v3825 = vadd.f32 %v3824, %v3688
        %v3826 = vadd.f32 %v3825, %v3689
        %v3827 = vadd.f32 %v3826, %v3690
        %v3828 = vadd.f32 %v3827, %v3691
        %v3829 = vadd.f32 %v3828, %v3692
        %v3830 = vadd.f32 %v3829, %v3693
        %v3831 = vadd.f32 %v3830, %v3694
        %v3832 = vadd.f32 %v3831, %v3695
        %v3833 = vadd.f32 %v3832, %v3696
        %v3834 = vadd.f32 %v3833, %v3697
        %v3835 = vadd.f32 %v3834, %v3698
        %v3836 = vadd.f32 %v3835, %v3699
        %v3837 = vrot.slane %v3836, 4
        %v3838 = vadd.f32 %v3836, %v3837
        %v3839 = vrot.slane %v3838, 2
        %v3840 = vadd.f32 %v3838, %v3839
        %v3841 = vrot.slane %v3840, 1
        %v3842 = vadd.f32 %v3840, %v3841
        %v3843 = vadd.f32 %v3700, %v3701
        %v3844 = vadd.f32 %v3843, %v3702
        %v3845 = vadd.f32 %v3844, %v3703
        %v3846 = vadd.f32 %v3845, %v3704
        %v3847 = vadd.f32 %v3846, %v3705
        %v3848 = vadd.f32 %v3847, %v3706
        %v3849 = vadd.f32 %v3848, %v3707
        %v3850 = vadd.f32 %v3849, %v3708
        %v3851 = vadd.f32 %v3850, %v3709
        %v3852 = vadd.f32 %v3851, %v3710
        %v3853 = vadd.f32 %v3852, %v3711
        %v3854 = vadd.f32 %v3853, %v3712
        %v3855 = vadd.f32 %v3854, %v3713
        %v3856 = vadd.f32 %v3855, %v3714
        %v3857 = vadd.f32 %v3856, %v3715
        %v3858 = vadd.f32 %v3857, %v3716
        %v3859 = vadd.f32 %v3858, %v3717
        %v3860 = vadd.f32 %v3859, %v3718
        %v3861 = vadd.f32 %v3860, %v3719
        %v3862 = vadd.f32 %v3861, %v3720
        %v3863 = vadd.f32 %v3862, %v3721
        %v3864 = vadd.f32 %v3863, %v3722
        %v3865 = vadd.f32 %v3864, %v3723
        %v3866 = vadd.f32 %v3865, %v3724
        %v3867 = vadd.f32 %v3866, %v3725
        %v3868 = vadd.f32 %v3867, %v3726
        %v3869 = vadd.f32 %v3868, %v3727
        %v3870 = vadd.f32 %v3869, %v3728
        %v3871 = vadd.f32 %v3870, %v3729
        %v3872 = vadd.f32 %v3871, %v3730
        %v3873 = vadd.f32 %v3872, %v3731
        %v3874 = vrot.slane %v3873, 4
        %v3875 = vadd.f32 %v3873, %v3874
        %v3876 = vrot.slane %v3875, 2
        %v3877 = vadd.f32 %v3875, %v3876
        %v3878 = vrot.slane %v3877, 1
        %v3879 = vadd.f32 %v3877, %v3878
        %v3880 = vadd.f32 %v2960, %v3768
        %v3881 = vadd.f32 %v2961, %v3805
        %v3882 = vadd.f32 %v2962, %v3842
        %v3883 = vadd.f32 %v2963, %v3879
        %3884 = vst [vmem:[#allocation4] sm:$0x1] %v3880
        %3885 = vst [vmem:[#allocation4 + $0x1] sm:$0x1] %v3881
        %3886 = vst [vmem:[#allocation4 + $0x2] sm:$0x1] %v3882
        %3887 = vst [vmem:[#allocation4 + $0x3] sm:$0x1] %v3883
        %3888 = vst.msk [vmem:[#allocation2] sm:$0x1] %vm2915, %v2202
        %3889 = vst.msk [vmem:[#allocation2 + $0x1] sm:$0x1] %vm2915, %v2203
        %3890 = vst.msk [vmem:[#allocation2 + $0x2] sm:$0x1] %vm2915, %v2204
        %3891 = vst.msk [vmem:[#allocation2 + $0x3] sm:$0x1] %vm2915, %v2205
        %p3892 = scmp.eq.s32.totalorder %s30, 2
        // Predicated region
        $region57: #{tpu_custom_call.1} parent=35 // pred_check
          %p3893 = pneg %p3892
        $region58: #{tpu_custom_call.1} parent=35 // pred_check_branch
          %3895 = sbr.rel (%p3893) target = $region60
        $region59: #{tpu_custom_call.1} parent=35 // pred_region
          %v3896 = vld [vmem:[#allocation4] sm:$0x1]
          %v3897 = vld [vmem:[#allocation4 + $0x1] sm:$0x1]
          %v3898 = vld [vmem:[#allocation4 + $0x2] sm:$0x1]
          %v3899 = vld [vmem:[#allocation4 + $0x3] sm:$0x1]
          %v3900 = vld [vmem:[#allocation3] sm:$0x1]
          %v3901 = vld [vmem:[#allocation3 + $0x1] sm:$0x1]
          %v3902 = vld [vmem:[#allocation3 + $0x2] sm:$0x1]
          %v3903 = vld [vmem:[#allocation3 + $0x3] sm:$0x1]
          %3905 = vset.pattern.permute.xlu0 0
          %3906 = vperm.xlu0 %3905, %v3900
          %v3907 = vpop.permute.xlu0 %3906
          %v3909 = vlaneseq
          %v3910 = vshrl.u32 %v3909, 7
          %v3911 = vsub.s32 0, %v3910
          %v3912 = vrot.slane %v3907, %v3911
          %3914 = vset.pattern.permute.xlu0 0
          %3915 = vperm.xlu0 %3914, %v3901
          %v3916 = vpop.permute.xlu0 %3915
          %v3918 = vlaneseq
          %v3919 = vshrl.u32 %v3918, 7
          %v3920 = vsub.s32 0, %v3919
          %v3921 = vrot.slane %v3916, %v3920
          %3923 = vset.pattern.permute.xlu0 0
          %3924 = vperm.xlu0 %3923, %v3902
          %v3925 = vpop.permute.xlu0 %3924
          %v3927 = vlaneseq
          %v3928 = vshrl.u32 %v3927, 7
          %v3929 = vsub.s32 0, %v3928
          %v3930 = vrot.slane %v3925, %v3929
          %3932 = vset.pattern.permute.xlu0 0
          %3933 = vperm.xlu0 %3932, %v3903
          %v3934 = vpop.permute.xlu0 %3933
          %v3936 = vlaneseq
          %v3937 = vshrl.u32 %v3936, 7
          %v3938 = vsub.s32 0, %v3937
          %v3939 = vrot.slane %v3934, %v3938
          %v3940 = vrcp.pop %v3912
          %v3941 = vmul.f32 %v3896, %v3940
          %v3942 = vrcp.pop %v3921
          %v3943 = vmul.f32 %v3897, %v3942
          %v3944 = vrcp.pop %v3930
          %v3945 = vmul.f32 %v3898, %v3944
          %v3946 = vrcp.pop %v3939
          %v3947 = vmul.f32 %v3899, %v3946
          %3948 = vst [vmem:[%s324] sm:$0x1] %v3941
          %3949 = vst [vmem:[%s324 + $0x1] sm:$0x1] %v3943
          %3950 = vst [vmem:[%s324 + $0x2] sm:$0x1] %v3945
          %3951 = vst [vmem:[%s324 + $0x3] sm:$0x1] %v3947
        $region60: #{tpu_custom_call.1} parent=35 // pred_fallthru
          _
        %s3952 = sand.u32 %s141, 1
        %s3953 = scalar_lea.sflag [#allocation7], %s3952
        %s3954 = sand.u32 %s141, 1
        %s3955 = smul.addr %s3954, 4
        %s3956 = scalar_lea.vmem [#allocation13], %s3955
        // Predicated region
        $region61: #{tpu_custom_call.1} parent=35 // pred_check
          %p3957 = pneg %p151
        $region62: #{tpu_custom_call.1} parent=35 // pred_check_branch
          %3959 = sbr.rel (%p3957) target = $region64
        $region63: #{tpu_custom_call.1} parent=35 // pred_region
          %s3960 = smul.u32 4, %s29
          %s3962 = ssub.s32 64, 64
          %3963 = vsyncadd %s3953, %s3962
          %s3964 = smul.addr %s3960, 16
          %s3965 = scalar_lea.hbm %s4, %s3964
          %s3966 = sshll.u32 %s3956, 4
          %s3967 = int_to_ptr.vmem [resolvable:$true] %s3966
          %3972 = dma.vmem_to_hbm [thread:$0]  %s3967, 64, %s3965, %s3953, 16, 16, 1
        $region64: #{tpu_custom_call.1} parent=35 // pred_fallthru
          _
      $region36: #{tpu_custom_call.1} parent=5 // pred_fallthru
        _
      %p3973 = scmp.le.s32.totalorder 2, %s20
      // Predicated region
      $region65: #{tpu_custom_call.1} parent=5 // pred_check
        %p3974 = pneg %p3973
      $region66: #{tpu_custom_call.1} parent=5 // pred_check_branch
        %3976 = sbr.rel (%p3974) target = $region68
      $region67: #{tpu_custom_call.1} parent=5 // pred_region
        %s3977 = ssub.s32 %s20, 2
        // Predicated region
        $region69: #{tpu_custom_call.1} parent=67 // pred_check
          %p3978 = pneg %p157
        $region70: #{tpu_custom_call.1} parent=67 // pred_check_branch
          %3980 = sbr.rel (%p3978) target = $region72
        $region71: #{tpu_custom_call.1} parent=67 // pred_region
          %s3981 = sand.u32 %s142, 1
          %s3982 = scalar_lea.sflag [#allocation7], %s3981
          %s3983 = sand.u32 %s142, 1
          %s3984 = smul.addr %s3983, 4
          %s3985 = scalar_lea.vmem [#allocation13], %s3984
          %3986 = dma.done %s3982, 64
        $region72: #{tpu_custom_call.1} parent=67 // pred_fallthru
          _
      $region68: #{tpu_custom_call.1} parent=5 // pred_fallthru
        _
    $region6: #{tpu_custom_call.1} parent=1 // loop_footer
      %s24 = sadd.s32 1, %s20
    $region7: #{tpu_custom_call.1} parent=1 // loop_footer_branch
      %19 = sbr.rel target = $region3
    $region8: #{tpu_custom_call.1} parent=1 // loop_exit
      _
    %3987 = vsyncpa [#allocation6], 1
    %s3988 = scalar_lea.sflag [#allocation6], 1
    %3989 = vsyncpa %s3988, 1
    %3990 = vsyncpa [#allocation9], 1
    %3991 = vsyncpa [#allocation12], 1
    %s3992 = scalar_lea.sflag [#allocation12], 1
    %3993 = vsyncpa %s3992, 1
    %3994 = vsyncpa [#allocation7], 1
    %s3995 = scalar_lea.sflag [#allocation7], 1
    %3996 = vsyncpa %s3995, 1

</llo_original>
